<compile_context>
chip_gen: v5e
topology: v5e:2x2
jax: 0.10.0
libtpu: 0.0.40
codegen_flags: <defaults>
</compile_context>

<pallas_src>
import jax
import jax.numpy as jnp
from jax import lax
from jax.experimental import pallas as pl
from jax.experimental.pallas import tpu as pltpu


def _ceil_to(n, m):
    return ((n + m - 1) // m) * m


# ----------------------------- fused Pallas kernel -----------------------------

def _make_fused_kernel(N, C, T, V, S, inter_c, icp, c_rows, cr_pad, ks):
    """Builds the fused TCN_GCN_unit forward kernel (closes over static config)."""
    eps = 1e-5
    f32 = jnp.float32
    bf16 = jnp.bfloat16
    TV = T * V
    pad = (ks - 1) // 2
    # fused projection row offsets: [theta | phi | conv_c | conv_d]
    TH0 = 0
    PH0 = S * icp
    C0 = 2 * S * icp
    D0 = C0 + c_rows
    # misc blob row offsets: [A + 0.5*PA | gcn SE w1 | gcn SE w2 | tcn SE w1 | tcn SE w2]
    A0 = 0
    GW1 = S * V
    GW2 = GW1 + cr_pad
    TW1 = GW2 + C
    TW2 = TW1 + cr_pad
    inv_tv = 1.0 / float(TV)
    inv_ntv = 1.0 / float(N * TV)
    inv_k = 1.0 / float(inter_c * T)          # == 1 / A1.size(-1) in PyTorch

    def kernel(x_ref, wproj_ref, wtcn_ref, vec_ref, misc_ref, out_ref,
               y_scr, t_scr, gpad_scr, col_scr, blk_scr):
        # ---- unpack packed parameter blobs (static slices) ----
        b_all = vec_ref[:, 0:1]                      # (M_all, 1) fused 1x1-conv biases
        bd_sum = vec_ref[0:C, 1:2]                   # summed conv_d biases
        gbn_g = vec_ref[0:C, 2:3]
        gbn_b = vec_ref[0:C, 3:4]
        tbn_g = vec_ref[0:C, 4:5]
        tbn_b = vec_ref[0:C, 5:6]
        b_tcn = vec_ref[0:2 * C, 6:7]                # conv | gate biases
        gse_w1 = misc_ref[GW1:GW1 + cr_pad, 0:C]     # (cr, C)
        gse_w2 = misc_ref[GW2:GW2 + C, 0:cr_pad]     # (C, cr)
        tse_w1 = misc_ref[TW1:TW1 + cr_pad, 0:C]
        tse_w2 = misc_ref[TW2:TW2 + C, 0:cr_pad]
        wproj = wproj_ref[...]                       # (M_all, C) bf16
        wtcn = wtcn_ref[...]                         # (2C, ks*C) bf16

        # zero-filled halos written once; only centre / diagonal blocks are rewritten
        gpad_scr[...] = jnp.zeros((C, (T + 2 * pad) * V), bf16)
        blk_scr[...] = jnp.zeros((TV, TV), bf16)

        def se_gate(y, w1, w2):
            # TODO(synk): SELayer is not defined in the provided source; standard bias-free
            #             squeeze-excitation (GAP -> FC -> ReLU -> FC -> sigmoid) assumed.
            pooled = jnp.sum(y, axis=1, keepdims=True) * inv_tv                   # (C, 1)
            h = jnp.maximum(jnp.dot(w1, pooled, preferred_element_type=f32), 0.0)  # (cr, 1)
            return jax.nn.sigmoid(jnp.dot(w2, h, preferred_element_type=f32))      # (C, 1)

        # ---------- pass 1: unit_gcn attention branch (pre-BN) + BN statistics ----------
        gsum = jnp.zeros((C, 1), f32)
        gsq = jnp.zeros((C, 1), f32)
        for n in range(N):
            xm = x_ref[n]                                              # (C, TV) f32
            # conv_a / conv_b / conv_c / conv_d fused into one lane-dense matmul
            proj = jnp.dot(wproj, xm.astype(bf16),
                           preferred_element_type=f32) + b_all         # (M_all, TV)
            th_all_t = proj[TH0:TH0 + S * icp, :].T                    # (TV, S*icp)
            z = jnp.zeros((C, TV), f32)
            for i in range(S):
                th_t = th_all_t[:, i * icp:(i + 1) * icp]              # (TV, icp)
                ph = proj[PH0 + i * icp:PH0 + (i + 1) * icp, :]        # (icp, TV)
                # full (TV,TV) product; only its T diagonal (V,V) blocks are needed
                big = jnp.dot(th_t.astype(bf16), ph.astype(bf16),
                              preferred_element_type=f32)              # (TV, TV)
                s = big[0:V, 0:V]
                for t in range(1, T):
                    s = s + big[t * V:(t + 1) * V, t * V:(t + 1) * V]
                s = s * inv_k
                # softmax over dim -2 (rows), exact
                s = s - jnp.max(s, axis=0, keepdims=True)
                e = jnp.exp(s)
                attn = e / jnp.sum(e, axis=0, keepdims=True)
                # beta = GAP(conv_c_i(x))  (scalar per batch / subset)
                beta = jnp.sum(proj[C0 + i:C0 + i + 1, :], axis=1,
                               keepdims=True) * inv_tv                 # (1, 1)
                a1 = (beta * attn
                      + misc_ref[A0 + i * V:A0 + (i + 1) * V, 0:V]).astype(bf16)
                # kron(I_T, A1): write the T diagonal blocks, off-diagonals stay zero
                for t in range(T):
                    blk_scr[t * V:(t + 1) * V, t * V:(t + 1) * V] = a1
                # conv_d folded *before* the graph matmul (1x1 conv commutes with A1)
                xd = proj[D0 + i * C:D0 + (i + 1) * C, :]              # (C, TV)
                z = z + jnp.dot(xd.astype(bf16), blk_scr[...],
                                preferred_element_type=f32)
            y = z + bd_sum                                             # pre-BN gcn branch sum
            y_scr[n] = y
            gsum = gsum + jnp.sum(y, axis=1, keepdims=True)
            gsq = gsq + jnp.sum(y * y, axis=1, keepdims=True)

        # unit_gcn BatchNorm (training mode: batch statistics over N, T, V)
        g_mean = gsum * inv_ntv
        g_var = jnp.maximum(gsq * inv_ntv - g_mean * g_mean, 0.0)
        g_scale = gbn_g * lax.rsqrt(g_var + eps)
        g_shift = gbn_b - g_mean * g_scale

        # ---------- pass 2: gcn BN -> SE -> +x -> ReLU, GatedCNN temporal conv ----------
        tsum = jnp.zeros((C, 1), f32)
        tsq = jnp.zeros((C, 1), f32)
        for n in range(N):
            y = y_scr[n] * g_scale + g_shift
            y = y * se_gate(y, gse_w1, gse_w2)
            g = jnp.maximum(y + x_ref[n], 0.0)        # unit_gcn output (down == identity)
            # GatedCNN (ks,1) conv + gate as ONE im2col matmul (K = ks*C)
            gpad_scr[:, pad * V:pad * V + TV] = g.astype(bf16)
            for k in range(ks):
                col_scr[k * C:(k + 1) * C, :] = gpad_scr[:, k * V:k * V + TV]
            acc = jnp.dot(wtcn, col_scr[...], preferred_element_type=f32) + b_tcn
            gated = acc[0:C, :] * jax.nn.sigmoid(acc[C:2 * C, :])      # GLU epilogue
            t_scr[n] = gated
            tsum = tsum + jnp.sum(gated, axis=1, keepdims=True)
            tsq = tsq + jnp.sum(gated * gated, axis=1, keepdims=True)

        # unit_tcn BatchNorm (training mode)
        t_mean = tsum * inv_ntv
        t_var = jnp.maximum(tsq * inv_ntv - t_mean * t_mean, 0.0)
        t_scale = tbn_g * lax.rsqrt(t_var + eps)
        t_shift = tbn_b - t_mean * t_scale

        # ---------- pass 3: tcn BN -> SE, block residual (+x), final ReLU ----------
        for n in range(N):
            zz = t_scr[n] * t_scale + t_shift
            zz = zz * se_gate(zz, tse_w1, tse_w2)
            # TODO(synk): non-identity residual (unit_tcn kernel_size=1 / strided) branch
            #             not needed for in_channels == out_channels, stride == 1.
            out_ref[n] = jnp.maximum(zz + x_ref[n], 0.0)

    return kernel


# ----------------------------- wrapper -----------------------------

def tcn_gcn_unit_forward(x, p):
    N, C, T, V = x.shape
    TV = T * V
    S = p['A'].shape[0]
    inter_c = p['Wa'][0].shape[1]
    icp = max(8, _ceil_to(inter_c, 8))                 # pad inter channels to sublane tile
    c_rows = max(8, _ceil_to(S, 8))                    # padded conv_c row block
    cr = p['gcn_se_w1'].shape[1]
    cr_pad = max(8, _ceil_to(cr, 8))                   # padded SE bottleneck
    ks = p['tcn_Wconv'].shape[0]
    pad = (ks - 1) // 2
    f32 = jnp.float32
    bf16 = jnp.bfloat16

    # ---- fused 1x1-conv weight [theta | phi | conv_c | conv_d] (rows = out channels) ----
    def rows_pad(w_t, rows):
        return jnp.pad(w_t, ((0, rows - w_t.shape[0]), (0, 0)))

    th_rows = jnp.concatenate([rows_pad(w.T, icp) for w in p['Wa']], axis=0)     # (S*icp, C)
    ph_rows = jnp.concatenate([rows_pad(w.T, icp) for w in p['Wb']], axis=0)     # (S*icp, C)
    cc_rows = rows_pad(jnp.concatenate([w.T for w in p['Wc']], axis=0), c_rows)  # (c_rows, C)
    d_rows = jnp.concatenate([w.T for w in p['Wd']], axis=0)                     # (S*C, C)
    w_proj = jnp.concatenate([th_rows, ph_rows, cc_rows, d_rows], axis=0)        # (M_all, C)
    m_all = w_proj.shape[0]

    def vec_pad(b, rows):
        return jnp.pad(b, (0, rows - b.shape[0]))

    b_all = jnp.concatenate(
        [jnp.concatenate([vec_pad(b, icp) for b in p['ba']]),
         jnp.concatenate([vec_pad(b, icp) for b in p['bb']]),
         vec_pad(jnp.concatenate(p['bc']), c_rows),
         jnp.zeros((S * C,), f32)])                    # conv_d bias applied via bd_sum

    # ---- packed bias / BN blob (M_all, 8) f32 ----
    def col(v):
        return vec_pad(v, m_all)[:, None]

    bd_sum = sum(p['bd'])
    b_tcn = jnp.concatenate([p['tcn_bconv'], p['tcn_bgate']])
    vec_blob = jnp.concatenate(
        [b_all[:, None], col(bd_sum), col(p['gcn_bn_gamma']), col(p['gcn_bn_beta']),
         col(p['tcn_bn_gamma']), col(p['tcn_bn_beta']), col(b_tcn),
         jnp.zeros((m_all, 1), f32)], axis=1)

    # ---- packed misc blob: A + 0.5*PA and the two SE layers ----
    width = max(V, C, cr_pad)

    def block(w, rows):
        return jnp.pad(w, ((0, rows - w.shape[0]), (0, width - w.shape[1])))

    a_plus = (p['A'] + 0.5 * p['PA']).reshape(S * V, V)
    misc_blob = jnp.concatenate(
        [block(a_plus, S * V),
         block(p['gcn_se_w1'].T, cr_pad), block(p['gcn_se_w2'].T, C),
         block(p['tcn_se_w1'].T, cr_pad), block(p['tcn_se_w2'].T, C)], axis=0)

    # ---- fused GatedCNN conv + gate im2col weight (2C, ks*C), row order (k, ci) ----
    def tcn_rows(w):                                   # (ks, Cin, Cout) -> (Cout, ks*Cin)
        return jnp.transpose(w, (2, 0, 1)).reshape(w.shape[2], ks * w.shape[1])

    w_tcn = jnp.concatenate([tcn_rows(p['tcn_Wconv']), tcn_rows(p['tcn_Wgate'])], axis=0)

    x_cm = x.reshape(N, C, TV).astype(f32)             # channel-major, lane-dense (T*V = 128)

    kernel = _make_fused_kernel(N, C, T, V, S, inter_c, icp, c_rows, cr_pad, ks)
    out = pl.pallas_call(
        kernel,
        out_shape=jax.ShapeDtypeStruct((N, C, TV), f32),
        in_specs=[pl.BlockSpec(memory_space=pltpu.MemorySpace.VMEM)] * 5,
        out_specs=pl.BlockSpec(memory_space=pltpu.MemorySpace.VMEM),
        scratch_shapes=[
            pltpu.VMEM((N, C, TV), f32),               # gcn pre-BN activations
            pltpu.VMEM((N, C, TV), f32),               # tcn pre-BN activations
            pltpu.VMEM((C, (T + 2 * pad) * V), bf16),  # zero-padded temporal buffer
            pltpu.VMEM((ks * C, TV), bf16),            # im2col stack
            pltpu.VMEM((TV, TV), bf16),                # kron(I_T, A1) block-diagonal
        ],
    )(x_cm, w_proj.astype(bf16), w_tcn.astype(bf16), vec_blob, misc_blob)
    return out.reshape(N, C, T, V)


# ----------------------------- parameter init -----------------------------

def init_params(key, in_channels, out_channels, V, num_subset=3, coff=4,
                se_reduction=4, ksize=9):
    assert in_channels == out_channels, "test config uses identity residual / down branch"
    inter_c = out_channels // coff
    keys = iter(jax.random.split(key, 64))

    def normal(shape, std):
        return std * jax.random.normal(next(keys), shape, dtype=jnp.float32)

    A = jax.random.uniform(next(keys), (num_subset, V, V), dtype=jnp.float32)
    A = A / A.sum(axis=-1, keepdims=True)                    # deterministic "adjacency"

    p = {'A': A, 'PA': jnp.full((num_subset, V, V), 1e-6, jnp.float32)}

    std_ab = (2.0 / (inter_c * 1 * 1)) ** 0.5                # kaiming fan_out
    std_c = (2.0 / (1 * 1 * 1)) ** 0.5
    std_d = (2.0 / (out_channels * in_channels * 1 * num_subset)) ** 0.5  # conv_branch_init

    p['Wa'] = [normal((in_channels, inter_c), std_ab) for _ in range(num_subset)]
    p['ba'] = [jnp.zeros((inter_c,), jnp.float32) for _ in range(num_subset)]
    p['Wb'] = [normal((in_channels, inter_c), std_ab) for _ in range(num_subset)]
    p['bb'] = [jnp.zeros((inter_c,), jnp.float32) for _ in range(num_subset)]
    p['Wc'] = [normal((in_channels, 1), std_c) for _ in range(num_subset)]
    p['bc'] = [jnp.zeros((1,), jnp.float32) for _ in range(num_subset)]
    p['Wd'] = [normal((in_channels, out_channels), std_d) for _ in range(num_subset)]
    p['bd'] = [jnp.zeros((out_channels,), jnp.float32) for _ in range(num_subset)]

    p['gcn_bn_gamma'] = jnp.full((out_channels,), 1e-6, jnp.float32)  # bn_init(self.bn, 1e-6)
    p['gcn_bn_beta'] = jnp.zeros((out_channels,), jnp.float32)
    p['gcn_se_w1'] = normal((out_channels, out_channels // se_reduction), 0.05)
    p['gcn_se_w2'] = normal((out_channels // se_reduction, out_channels), 0.05)

    std_t = (2.0 / (out_channels * ksize * 1)) ** 0.5
    p['tcn_Wconv'] = normal((ksize, out_channels, out_channels), std_t)   # (ks, Cin, Cout)
    p['tcn_bconv'] = jnp.zeros((out_channels,), jnp.float32)
    p['tcn_Wgate'] = normal((ksize, out_channels, out_channels), std_t)
    p['tcn_bgate'] = jnp.zeros((out_channels,), jnp.float32)
    p['tcn_bn_gamma'] = jnp.ones((out_channels,), jnp.float32)
    p['tcn_bn_beta'] = jnp.zeros((out_channels,), jnp.float32)
    p['tcn_se_w1'] = normal((out_channels, out_channels // se_reduction), 0.05)
    p['tcn_se_w2'] = normal((out_channels // se_reduction, out_channels), 0.05)
    return p


# ----------------------------- main -----------------------------

if __name__ == "__main__":
    N, C, T, V = 2, 16, 8, 16          # x: (batch, channels, frames, joints); T*V = 128 lanes
    key = jax.random.PRNGKey(0)
    kx, kp = jax.random.split(key)
    x = jax.random.normal(kx, (N, C, T, V), dtype=jnp.float32)
    params = init_params(kp, C, C, V)

    fwd = jax.jit(lambda inp: tcn_gcn_unit_forward(inp, params))
    out = jax.block_until_ready(fwd(x))

    assert out.shape == (N, C, T, V)
    assert bool(jnp.all(jnp.isfinite(out)))
    assert bool(jnp.all(out >= 0.0))   # final ReLU
    print("KERNEL_OK")
</pallas_src>

<mosaic_0001>
module attributes {stable_mosaic.version = 11 : i64} {
  func.func @kernel(%arg0: memref<2x16x128xf32, #tpu.memory_space<vmem>>, %arg1: memref<104x16xbf16, #tpu.memory_space<vmem>>, %arg2: memref<32x144xbf16, #tpu.memory_space<vmem>>, %arg3: memref<104x8xf32, #tpu.memory_space<vmem>>, %arg4: memref<96x16xf32, #tpu.memory_space<vmem>>, %arg5: memref<2x16x128xf32, #tpu.memory_space<vmem>>, %arg6: memref<2x16x128xf32, #tpu.memory_space<vmem>>, %arg7: memref<2x16x128xf32, #tpu.memory_space<vmem>>, %arg8: memref<16x256xbf16, #tpu.memory_space<vmem>>, %arg9: memref<144x128xbf16, #tpu.memory_space<vmem>>, %arg10: memref<128x128xbf16, #tpu.memory_space<vmem>>) attributes {dimension_semantics = [], scalar_prefetch = 0 : i64, scratch_operands = 5 : i64, tpu.core_type = #tpu.core_type<tc>} {
    %c0 = arith.constant 0 : index
    %c0_0 = arith.constant 0 : index
    %0 = vector.load %arg3[%c0, %c0_0] : memref<104x8xf32, #tpu.memory_space<vmem>>, vector<104x1xf32>
    %c0_1 = arith.constant 0 : index
    %c1 = arith.constant 1 : index
    %1 = vector.load %arg3[%c0_1, %c1] : memref<104x8xf32, #tpu.memory_space<vmem>>, vector<16x1xf32>
    %c0_2 = arith.constant 0 : index
    %c2 = arith.constant 2 : index
    %2 = vector.load %arg3[%c0_2, %c2] : memref<104x8xf32, #tpu.memory_space<vmem>>, vector<16x1xf32>
    %c0_3 = arith.constant 0 : index
    %c3 = arith.constant 3 : index
    %3 = vector.load %arg3[%c0_3, %c3] : memref<104x8xf32, #tpu.memory_space<vmem>>, vector<16x1xf32>
    %c0_4 = arith.constant 0 : index
    %c4 = arith.constant 4 : index
    %4 = vector.load %arg3[%c0_4, %c4] : memref<104x8xf32, #tpu.memory_space<vmem>>, vector<16x1xf32>
    %c0_5 = arith.constant 0 : index
    %c5 = arith.constant 5 : index
    %5 = vector.load %arg3[%c0_5, %c5] : memref<104x8xf32, #tpu.memory_space<vmem>>, vector<16x1xf32>
    %c0_6 = arith.constant 0 : index
    %c6 = arith.constant 6 : index
    %6 = vector.load %arg3[%c0_6, %c6] : memref<104x8xf32, #tpu.memory_space<vmem>>, vector<32x1xf32>
    %c48 = arith.constant 48 : index
    %c0_7 = arith.constant 0 : index
    %7 = vector.load %arg4[%c48, %c0_7] : memref<96x16xf32, #tpu.memory_space<vmem>>, vector<8x16xf32>
    %c56 = arith.constant 56 : index
    %c0_8 = arith.constant 0 : index
    %8 = vector.load %arg4[%c56, %c0_8] : memref<96x16xf32, #tpu.memory_space<vmem>>, vector<16x8xf32>
    %c72 = arith.constant 72 : index
    %c0_9 = arith.constant 0 : index
    %9 = vector.load %arg4[%c72, %c0_9] : memref<96x16xf32, #tpu.memory_space<vmem>>, vector<8x16xf32>
    %c80 = arith.constant 80 : index
    %c0_10 = arith.constant 0 : index
    %10 = vector.load %arg4[%c80, %c0_10] : memref<96x16xf32, #tpu.memory_space<vmem>>, vector<16x8xf32>
    %c0_11 = arith.constant 0 : index
    %c0_12 = arith.constant 0 : index
    %11 = vector.load %arg1[%c0_11, %c0_12] : memref<104x16xbf16, #tpu.memory_space<vmem>>, vector<104x16xbf16>
    %c0_13 = arith.constant 0 : index
    %c0_14 = arith.constant 0 : index
    %12 = vector.load %arg2[%c0_13, %c0_14] : memref<32x144xbf16, #tpu.memory_space<vmem>>, vector<32x144xbf16>
    %cst = arith.constant 0.000000e+00 : bf16
    %13 = vector.broadcast %cst : bf16 to vector<16x256xbf16>
    %c0_15 = arith.constant 0 : index
    %c0_16 = arith.constant 0 : index
    %14 = vector.load %arg8[%c0_15, %c0_16] : memref<16x256xbf16, #tpu.memory_space<vmem>>, vector<16x256xbf16>
    tpu.vector_store %arg8[%c0_15, %c0_16], %13 {strides = array<i32>} : memref<16x256xbf16, #tpu.memory_space<vmem>>, vector<16x256xbf16>,
    %cst_17 = arith.constant 0.000000e+00 : bf16
    %15 = vector.broadcast %cst_17 : bf16 to vector<128x128xbf16>
    %c0_18 = arith.constant 0 : index
    %c0_19 = arith.constant 0 : index
    %16 = vector.load %arg10[%c0_18, %c0_19] : memref<128x128xbf16, #tpu.memory_space<vmem>>, vector<128x128xbf16>
    tpu.vector_store %arg10[%c0_18, %c0_19], %15 {strides = array<i32>} : memref<128x128xbf16, #tpu.memory_space<vmem>>, vector<128x128xbf16>,
    %cst_20 = arith.constant 0.000000e+00 : f32
    %17 = vector.broadcast %cst_20 : f32 to vector<16x1xf32>
    %cst_21 = arith.constant 0.000000e+00 : f32
    %18 = vector.broadcast %cst_21 : f32 to vector<16x1xf32>
    %c0_22 = arith.constant 0 : index
    %c0_23 = arith.constant 0 : index
    %c0_24 = arith.constant 0 : index
    %19 = vector.load %arg0[%c0_22, %c0_23, %c0_24] : memref<2x16x128xf32, #tpu.memory_space<vmem>>, vector<1x16x128xf32>
    %20 = vector.shape_cast %19 : vector<1x16x128xf32> to vector<16x128xf32>
    %21 = arith.truncf %20 : vector<16x128xf32> to vector<16x128xbf16>
    %cst_25 = arith.constant dense<0.000000e+00> : vector<104x128xf32>
    %22 = tpu.matmul %11, %21, %cst_25 {dimension_numbers = #tpu.dot_dimension_numbers<[1], [0], [0], [1], [0, 0, 1, 1], [], []>} : vector<104x16xbf16>, vector<16x128xbf16>, vector<104x128xf32> -> vector<104x128xf32>
    %23 = vector.broadcast %0 : vector<104x1xf32> to vector<104x128xf32>
    %24 = arith.addf %22, %23 : vector<104x128xf32>
    %25 = vector.extract_strided_slice %24 {offsets = [0, 0], sizes = [24, 128], strides = [1, 1]} : vector<104x128xf32> to vector<24x128xf32>
    %26 = tpu.transpose %25, [1, 0] : vector<24x128xf32> -> vector<128x24xf32>
    %cst_26 = arith.constant 0.000000e+00 : f32
    %27 = vector.broadcast %cst_26 : f32 to vector<16x128xf32>
    %28 = vector.extract_strided_slice %26 {offsets = [0, 0], sizes = [128, 8], strides = [1, 1]} : vector<128x24xf32> to vector<128x8xf32>
    %29 = vector.extract_strided_slice %24 {offsets = [24, 0], sizes = [8, 128], strides = [1, 1]} : vector<104x128xf32> to vector<8x128xf32>
    %30 = arith.truncf %28 : vector<128x8xf32> to vector<128x8xbf16>
    %31 = arith.truncf %29 : vector<8x128xf32> to vector<8x128xbf16>
    %cst_27 = arith.constant dense<0.000000e+00> : vector<128x128xf32>
    %32 = tpu.matmul %30, %31, %cst_27 {dimension_numbers = #tpu.dot_dimension_numbers<[1], [0], [0], [1], [0, 0, 1, 1], [], []>} : vector<128x8xbf16>, vector<8x128xbf16>, vector<128x128xf32> -> vector<128x128xf32>
    %33 = vector.extract_strided_slice %32 {offsets = [0, 0], sizes = [16, 16], strides = [1, 1]} : vector<128x128xf32> to vector<16x16xf32>
    %34 = vector.extract_strided_slice %32 {offsets = [16, 16], sizes = [16, 16], strides = [1, 1]} : vector<128x128xf32> to vector<16x16xf32>
    %35 = arith.addf %33, %34 : vector<16x16xf32>
    %36 = vector.extract_strided_slice %32 {offsets = [32, 32], sizes = [16, 16], strides = [1, 1]} : vector<128x128xf32> to vector<16x16xf32>
    %37 = arith.addf %35, %36 : vector<16x16xf32>
    %38 = vector.extract_strided_slice %32 {offsets = [48, 48], sizes = [16, 16], strides = [1, 1]} : vector<128x128xf32> to vector<16x16xf32>
    %39 = arith.addf %37, %38 : vector<16x16xf32>
    %40 = vector.extract_strided_slice %32 {offsets = [64, 64], sizes = [16, 16], strides = [1, 1]} : vector<128x128xf32> to vector<16x16xf32>
    %41 = arith.addf %39, %40 : vector<16x16xf32>
    %42 = vector.extract_strided_slice %32 {offsets = [80, 80], sizes = [16, 16], strides = [1, 1]} : vector<128x128xf32> to vector<16x16xf32>
    %43 = arith.addf %41, %42 : vector<16x16xf32>
    %44 = vector.extract_strided_slice %32 {offsets = [96, 96], sizes = [16, 16], strides = [1, 1]} : vector<128x128xf32> to vector<16x16xf32>
    %45 = arith.addf %43, %44 : vector<16x16xf32>
    %46 = vector.extract_strided_slice %32 {offsets = [112, 112], sizes = [16, 16], strides = [1, 1]} : vector<128x128xf32> to vector<16x16xf32>
    %47 = arith.addf %45, %46 : vector<16x16xf32>
    %cst_28 = arith.constant 3.125000e-02 : f32
    %48 = vector.broadcast %cst_28 : f32 to vector<16x16xf32>
    %49 = arith.mulf %47, %48 : vector<16x16xf32>
    %cst_29 = arith.constant dense<0xFF800000> : vector<16xf32>
    %50 = vector.multi_reduction <maximumf>, %49, %cst_29 [0] : vector<16x16xf32> to vector<16xf32>
    %51 = vector.shape_cast %50 : vector<16xf32> to vector<1x16xf32>
    %52 = vector.broadcast %51 : vector<1x16xf32> to vector<16x16xf32>
    %53 = arith.subf %49, %52 : vector<16x16xf32>
    %54 = math.exp %53 : vector<16x16xf32>
    %cst_30 = arith.constant dense<0.000000e+00> : vector<16xf32>
    %55 = vector.multi_reduction <add>, %54, %cst_30 [0] : vector<16x16xf32> to vector<16xf32>
    %56 = vector.shape_cast %55 : vector<16xf32> to vector<1x16xf32>
    %57 = vector.broadcast %56 : vector<1x16xf32> to vector<16x16xf32>
    %58 = arith.divf %54, %57 : vector<16x16xf32>
    %59 = vector.extract_strided_slice %24 {offsets = [48, 0], sizes = [1, 128], strides = [1, 1]} : vector<104x128xf32> to vector<1x128xf32>
    %cst_31 = arith.constant dense<0.000000e+00> : vector<1xf32>
    %60 = vector.multi_reduction <add>, %59, %cst_31 [1] : vector<1x128xf32> to vector<1xf32>
    %61 = vector.shape_cast %60 : vector<1xf32> to vector<1x1xf32>
    %cst_32 = arith.constant 7.812500e-03 : f32
    %62 = vector.broadcast %cst_32 : f32 to vector<1x1xf32>
    %63 = arith.mulf %61, %62 : vector<1x1xf32>
    %64 = vector.broadcast %63 : vector<1x1xf32> to vector<16x16xf32>
    %65 = arith.mulf %64, %58 : vector<16x16xf32>
    %c0_33 = arith.constant 0 : index
    %c0_34 = arith.constant 0 : index
    %66 = vector.load %arg4[%c0_33, %c0_34] : memref<96x16xf32, #tpu.memory_space<vmem>>, vector<16x16xf32>
    %67 = arith.addf %65, %66 : vector<16x16xf32>
    %68 = arith.truncf %67 : vector<16x16xf32> to vector<16x16xbf16>
    %c0_35 = arith.constant 0 : index
    %c0_36 = arith.constant 0 : index
    %69 = vector.load %arg10[%c0_35, %c0_36] : memref<128x128xbf16, #tpu.memory_space<vmem>>, vector<16x16xbf16>
    tpu.vector_store %arg10[%c0_35, %c0_36], %68 {strides = array<i32>} : memref<128x128xbf16, #tpu.memory_space<vmem>>, vector<16x16xbf16>,
    %c16 = arith.constant 16 : index
    %c16_37 = arith.constant 16 : index
    %70 = vector.load %arg10[%c16, %c16_37] : memref<128x128xbf16, #tpu.memory_space<vmem>>, vector<16x16xbf16>
    tpu.vector_store %arg10[%c16, %c16_37], %68 {strides = array<i32>} : memref<128x128xbf16, #tpu.memory_space<vmem>>, vector<16x16xbf16>,
    %c32 = arith.constant 32 : index
    %c32_38 = arith.constant 32 : index
    %71 = vector.load %arg10[%c32, %c32_38] : memref<128x128xbf16, #tpu.memory_space<vmem>>, vector<16x16xbf16>
    tpu.vector_store %arg10[%c32, %c32_38], %68 {strides = array<i32>} : memref<128x128xbf16, #tpu.memory_space<vmem>>, vector<16x16xbf16>,
    %c48_39 = arith.constant 48 : index
    %c48_40 = arith.constant 48 : index
    %72 = vector.load %arg10[%c48_39, %c48_40] : memref<128x128xbf16, #tpu.memory_space<vmem>>, vector<16x16xbf16>
    tpu.vector_store %arg10[%c48_39, %c48_40], %68 {strides = array<i32>} : memref<128x128xbf16, #tpu.memory_space<vmem>>, vector<16x16xbf16>,
    %c64 = arith.constant 64 : index
    %c64_41 = arith.constant 64 : index
    %73 = vector.load %arg10[%c64, %c64_41] : memref<128x128xbf16, #tpu.memory_space<vmem>>, vector<16x16xbf16>
    tpu.vector_store %arg10[%c64, %c64_41], %68 {strides = array<i32>} : memref<128x128xbf16, #tpu.memory_space<vmem>>, vector<16x16xbf16>,
    %c80_42 = arith.constant 80 : index
    %c80_43 = arith.constant 80 : index
    %74 = vector.load %arg10[%c80_42, %c80_43] : memref<128x128xbf16, #tpu.memory_space<vmem>>, vector<16x16xbf16>
    tpu.vector_store %arg10[%c80_42, %c80_43], %68 {strides = array<i32>} : memref<128x128xbf16, #tpu.memory_space<vmem>>, vector<16x16xbf16>,
    %c96 = arith.constant 96 : index
    %c96_44 = arith.constant 96 : index
    %75 = vector.load %arg10[%c96, %c96_44] : memref<128x128xbf16, #tpu.memory_space<vmem>>, vector<16x16xbf16>
    tpu.vector_store %arg10[%c96, %c96_44], %68 {strides = array<i32>} : memref<128x128xbf16, #tpu.memory_space<vmem>>, vector<16x16xbf16>,
    %c112 = arith.constant 112 : index
    %c112_45 = arith.constant 112 : index
    %76 = vector.load %arg10[%c112, %c112_45] : memref<128x128xbf16, #tpu.memory_space<vmem>>, vector<16x16xbf16>
    tpu.vector_store %arg10[%c112, %c112_45], %68 {strides = array<i32>} : memref<128x128xbf16, #tpu.memory_space<vmem>>, vector<16x16xbf16>,
    %77 = vector.extract_strided_slice %24 {offsets = [56, 0], sizes = [16, 128], strides = [1, 1]} : vector<104x128xf32> to vector<16x128xf32>
    %78 = arith.truncf %77 : vector<16x128xf32> to vector<16x128xbf16>
    %c0_46 = arith.constant 0 : index
    %c0_47 = arith.constant 0 : index
    %79 = vector.load %arg10[%c0_46, %c0_47] : memref<128x128xbf16, #tpu.memory_space<vmem>>, vector<128x128xbf16>
    %cst_48 = arith.constant dense<0.000000e+00> : vector<16x128xf32>
    %80 = tpu.matmul %78, %79, %cst_48 {dimension_numbers = #tpu.dot_dimension_numbers<[1], [0], [0], [1], [0, 0, 1, 1], [], []>} : vector<16x128xbf16>, vector<128x128xbf16>, vector<16x128xf32> -> vector<16x128xf32>
    %81 = arith.addf %27, %80 : vector<16x128xf32>
    %82 = vector.extract_strided_slice %26 {offsets = [0, 8], sizes = [128, 8], strides = [1, 1]} : vector<128x24xf32> to vector<128x8xf32>
    %83 = vector.extract_strided_slice %24 {offsets = [32, 0], sizes = [8, 128], strides = [1, 1]} : vector<104x128xf32> to vector<8x128xf32>
    %84 = arith.truncf %82 : vector<128x8xf32> to vector<128x8xbf16>
    %85 = arith.truncf %83 : vector<8x128xf32> to vector<8x128xbf16>
    %cst_49 = arith.constant dense<0.000000e+00> : vector<128x128xf32>
    %86 = tpu.matmul %84, %85, %cst_49 {dimension_numbers = #tpu.dot_dimension_numbers<[1], [0], [0], [1], [0, 0, 1, 1], [], []>} : vector<128x8xbf16>, vector<8x128xbf16>, vector<128x128xf32> -> vector<128x128xf32>
    %87 = vector.extract_strided_slice %86 {offsets = [0, 0], sizes = [16, 16], strides = [1, 1]} : vector<128x128xf32> to vector<16x16xf32>
    %88 = vector.extract_strided_slice %86 {offsets = [16, 16], sizes = [16, 16], strides = [1, 1]} : vector<128x128xf32> to vector<16x16xf32>
    %89 = arith.addf %87, %88 : vector<16x16xf32>
    %90 = vector.extract_strided_slice %86 {offsets = [32, 32], sizes = [16, 16], strides = [1, 1]} : vector<128x128xf32> to vector<16x16xf32>
    %91 = arith.addf %89, %90 : vector<16x16xf32>
    %92 = vector.extract_strided_slice %86 {offsets = [48, 48], sizes = [16, 16], strides = [1, 1]} : vector<128x128xf32> to vector<16x16xf32>
    %93 = arith.addf %91, %92 : vector<16x16xf32>
    %94 = vector.extract_strided_slice %86 {offsets = [64, 64], sizes = [16, 16], strides = [1, 1]} : vector<128x128xf32> to vector<16x16xf32>
    %95 = arith.addf %93, %94 : vector<16x16xf32>
    %96 = vector.extract_strided_slice %86 {offsets = [80, 80], sizes = [16, 16], strides = [1, 1]} : vector<128x128xf32> to vector<16x16xf32>
    %97 = arith.addf %95, %96 : vector<16x16xf32>
    %98 = vector.extract_strided_slice %86 {offsets = [96, 96], sizes = [16, 16], strides = [1, 1]} : vector<128x128xf32> to vector<16x16xf32>
    %99 = arith.addf %97, %98 : vector<16x16xf32>
    %100 = vector.extract_strided_slice %86 {offsets = [112, 112], sizes = [16, 16], strides = [1, 1]} : vector<128x128xf32> to vector<16x16xf32>
    %101 = arith.addf %99, %100 : vector<16x16xf32>
    %cst_50 = arith.constant 3.125000e-02 : f32
    %102 = vector.broadcast %cst_50 : f32 to vector<16x16xf32>
    %103 = arith.mulf %101, %102 : vector<16x16xf32>
    %cst_51 = arith.constant dense<0xFF800000> : vector<16xf32>
    %104 = vector.multi_reduction <maximumf>, %103, %cst_51 [0] : vector<16x16xf32> to vector<16xf32>
    %105 = vector.shape_cast %104 : vector<16xf32> to vector<1x16xf32>
    %106 = vector.broadcast %105 : vector<1x16xf32> to vector<16x16xf32>
    %107 = arith.subf %103, %106 : vector<16x16xf32>
    %108 = math.exp %107 : vector<16x16xf32>
    %cst_52 = arith.constant dense<0.000000e+00> : vector<16xf32>
    %109 = vector.multi_reduction <add>, %108, %cst_52 [0] : vector<16x16xf32> to vector<16xf32>
    %110 = vector.shape_cast %109 : vector<16xf32> to vector<1x16xf32>
    %111 = vector.broadcast %110 : vector<1x16xf32> to vector<16x16xf32>
    %112 = arith.divf %108, %111 : vector<16x16xf32>
    %113 = vector.extract_strided_slice %24 {offsets = [49, 0], sizes = [1, 128], strides = [1, 1]} : vector<104x128xf32> to vector<1x128xf32>
    %cst_53 = arith.constant dense<0.000000e+00> : vector<1xf32>
    %114 = vector.multi_reduction <add>, %113, %cst_53 [1] : vector<1x128xf32> to vector<1xf32>
    %115 = vector.shape_cast %114 : vector<1xf32> to vector<1x1xf32>
    %cst_54 = arith.constant 7.812500e-03 : f32
    %116 = vector.broadcast %cst_54 : f32 to vector<1x1xf32>
    %117 = arith.mulf %115, %116 : vector<1x1xf32>
    %118 = vector.broadcast %117 : vector<1x1xf32> to vector<16x16xf32>
    %119 = arith.mulf %118, %112 : vector<16x16xf32>
    %c16_55 = arith.constant 16 : index
    %c0_56 = arith.constant 0 : index
    %120 = vector.load %arg4[%c16_55, %c0_56] : memref<96x16xf32, #tpu.memory_space<vmem>>, vector<16x16xf32>
    %121 = arith.addf %119, %120 : vector<16x16xf32>
    %122 = arith.truncf %121 : vector<16x16xf32> to vector<16x16xbf16>
    %c0_57 = arith.constant 0 : index
    %c0_58 = arith.constant 0 : index
    %123 = vector.load %arg10[%c0_57, %c0_58] : memref<128x128xbf16, #tpu.memory_space<vmem>>, vector<16x16xbf16>
    tpu.vector_store %arg10[%c0_57, %c0_58], %122 {strides = array<i32>} : memref<128x128xbf16, #tpu.memory_space<vmem>>, vector<16x16xbf16>,
    %c16_59 = arith.constant 16 : index
    %c16_60 = arith.constant 16 : index
    %124 = vector.load %arg10[%c16_59, %c16_60] : memref<128x128xbf16, #tpu.memory_space<vmem>>, vector<16x16xbf16>
    tpu.vector_store %arg10[%c16_59, %c16_60], %122 {strides = array<i32>} : memref<128x128xbf16, #tpu.memory_space<vmem>>, vector<16x16xbf16>,
    %c32_61 = arith.constant 32 : index
    %c32_62 = arith.constant 32 : index
    %125 = vector.load %arg10[%c32_61, %c32_62] : memref<128x128xbf16, #tpu.memory_space<vmem>>, vector<16x16xbf16>
    tpu.vector_store %arg10[%c32_61, %c32_62], %122 {strides = array<i32>} : memref<128x128xbf16, #tpu.memory_space<vmem>>, vector<16x16xbf16>,
    %c48_63 = arith.constant 48 : index
    %c48_64 = arith.constant 48 : index
    %126 = vector.load %arg10[%c48_63, %c48_64] : memref<128x128xbf16, #tpu.memory_space<vmem>>, vector<16x16xbf16>
    tpu.vector_store %arg10[%c48_63, %c48_64], %122 {strides = array<i32>} : memref<128x128xbf16, #tpu.memory_space<vmem>>, vector<16x16xbf16>,
    %c64_65 = arith.constant 64 : index
    %c64_66 = arith.constant 64 : index
    %127 = vector.load %arg10[%c64_65, %c64_66] : memref<128x128xbf16, #tpu.memory_space<vmem>>, vector<16x16xbf16>
    tpu.vector_store %arg10[%c64_65, %c64_66], %122 {strides = array<i32>} : memref<128x128xbf16, #tpu.memory_space<vmem>>, vector<16x16xbf16>,
    %c80_67 = arith.constant 80 : index
    %c80_68 = arith.constant 80 : index
    %128 = vector.load %arg10[%c80_67, %c80_68] : memref<128x128xbf16, #tpu.memory_space<vmem>>, vector<16x16xbf16>
    tpu.vector_store %arg10[%c80_67, %c80_68], %122 {strides = array<i32>} : memref<128x128xbf16, #tpu.memory_space<vmem>>, vector<16x16xbf16>,
    %c96_69 = arith.constant 96 : index
    %c96_70 = arith.constant 96 : index
    %129 = vector.load %arg10[%c96_69, %c96_70] : memref<128x128xbf16, #tpu.memory_space<vmem>>, vector<16x16xbf16>
    tpu.vector_store %arg10[%c96_69, %c96_70], %122 {strides = array<i32>} : memref<128x128xbf16, #tpu.memory_space<vmem>>, vector<16x16xbf16>,
    %c112_71 = arith.constant 112 : index
    %c112_72 = arith.constant 112 : index
    %130 = vector.load %arg10[%c112_71, %c112_72] : memref<128x128xbf16, #tpu.memory_space<vmem>>, vector<16x16xbf16>
    tpu.vector_store %arg10[%c112_71, %c112_72], %122 {strides = array<i32>} : memref<128x128xbf16, #tpu.memory_space<vmem>>, vector<16x16xbf16>,
    %131 = vector.extract_strided_slice %24 {offsets = [72, 0], sizes = [16, 128], strides = [1, 1]} : vector<104x128xf32> to vector<16x128xf32>
    %132 = arith.truncf %131 : vector<16x128xf32> to vector<16x128xbf16>
    %c0_73 = arith.constant 0 : index
    %c0_74 = arith.constant 0 : index
    %133 = vector.load %arg10[%c0_73, %c0_74] : memref<128x128xbf16, #tpu.memory_space<vmem>>, vector<128x128xbf16>
    %cst_75 = arith.constant dense<0.000000e+00> : vector<16x128xf32>
    %134 = tpu.matmul %132, %133, %cst_75 {dimension_numbers = #tpu.dot_dimension_numbers<[1], [0], [0], [1], [0, 0, 1, 1], [], []>} : vector<16x128xbf16>, vector<128x128xbf16>, vector<16x128xf32> -> vector<16x128xf32>
    %135 = arith.addf %81, %134 : vector<16x128xf32>
    %136 = vector.extract_strided_slice %26 {offsets = [0, 16], sizes = [128, 8], strides = [1, 1]} : vector<128x24xf32> to vector<128x8xf32>
    %137 = vector.extract_strided_slice %24 {offsets = [40, 0], sizes = [8, 128], strides = [1, 1]} : vector<104x128xf32> to vector<8x128xf32>
    %138 = arith.truncf %136 : vector<128x8xf32> to vector<128x8xbf16>
    %139 = arith.truncf %137 : vector<8x128xf32> to vector<8x128xbf16>
    %cst_76 = arith.constant dense<0.000000e+00> : vector<128x128xf32>
    %140 = tpu.matmul %138, %139, %cst_76 {dimension_numbers = #tpu.dot_dimension_numbers<[1], [0], [0], [1], [0, 0, 1, 1], [], []>} : vector<128x8xbf16>, vector<8x128xbf16>, vector<128x128xf32> -> vector<128x128xf32>
    %141 = vector.extract_strided_slice %140 {offsets = [0, 0], sizes = [16, 16], strides = [1, 1]} : vector<128x128xf32> to vector<16x16xf32>
    %142 = vector.extract_strided_slice %140 {offsets = [16, 16], sizes = [16, 16], strides = [1, 1]} : vector<128x128xf32> to vector<16x16xf32>
    %143 = arith.addf %141, %142 : vector<16x16xf32>
    %144 = vector.extract_strided_slice %140 {offsets = [32, 32], sizes = [16, 16], strides = [1, 1]} : vector<128x128xf32> to vector<16x16xf32>
    %145 = arith.addf %143, %144 : vector<16x16xf32>
    %146 = vector.extract_strided_slice %140 {offsets = [48, 48], sizes = [16, 16], strides = [1, 1]} : vector<128x128xf32> to vector<16x16xf32>
    %147 = arith.addf %145, %146 : vector<16x16xf32>
    %148 = vector.extract_strided_slice %140 {offsets = [64, 64], sizes = [16, 16], strides = [1, 1]} : vector<128x128xf32> to vector<16x16xf32>
    %149 = arith.addf %147, %148 : vector<16x16xf32>
    %150 = vector.extract_strided_slice %140 {offsets = [80, 80], sizes = [16, 16], strides = [1, 1]} : vector<128x128xf32> to vector<16x16xf32>
    %151 = arith.addf %149, %150 : vector<16x16xf32>
    %152 = vector.extract_strided_slice %140 {offsets = [96, 96], sizes = [16, 16], strides = [1, 1]} : vector<128x128xf32> to vector<16x16xf32>
    %153 = arith.addf %151, %152 : vector<16x16xf32>
    %154 = vector.extract_strided_slice %140 {offsets = [112, 112], sizes = [16, 16], strides = [1, 1]} : vector<128x128xf32> to vector<16x16xf32>
    %155 = arith.addf %153, %154 : vector<16x16xf32>
    %cst_77 = arith.constant 3.125000e-02 : f32
    %156 = vector.broadcast %cst_77 : f32 to vector<16x16xf32>
    %157 = arith.mulf %155, %156 : vector<16x16xf32>
    %cst_78 = arith.constant dense<0xFF800000> : vector<16xf32>
    %158 = vector.multi_reduction <maximumf>, %157, %cst_78 [0] : vector<16x16xf32> to vector<16xf32>
    %159 = vector.shape_cast %158 : vector<16xf32> to vector<1x16xf32>
    %160 = vector.broadcast %159 : vector<1x16xf32> to vector<16x16xf32>
    %161 = arith.subf %157, %160 : vector<16x16xf32>
    %162 = math.exp %161 : vector<16x16xf32>
    %cst_79 = arith.constant dense<0.000000e+00> : vector<16xf32>
    %163 = vector.multi_reduction <add>, %162, %cst_79 [0] : vector<16x16xf32> to vector<16xf32>
    %164 = vector.shape_cast %163 : vector<16xf32> to vector<1x16xf32>
    %165 = vector.broadcast %164 : vector<1x16xf32> to vector<16x16xf32>
    %166 = arith.divf %162, %165 : vector<16x16xf32>
    %167 = vector.extract_strided_slice %24 {offsets = [50, 0], sizes = [1, 128], strides = [1, 1]} : vector<104x128xf32> to vector<1x128xf32>
    %cst_80 = arith.constant dense<0.000000e+00> : vector<1xf32>
    %168 = vector.multi_reduction <add>, %167, %cst_80 [1] : vector<1x128xf32> to vector<1xf32>
    %169 = vector.shape_cast %168 : vector<1xf32> to vector<1x1xf32>
    %cst_81 = arith.constant 7.812500e-03 : f32
    %170 = vector.broadcast %cst_81 : f32 to vector<1x1xf32>
    %171 = arith.mulf %169, %170 : vector<1x1xf32>
    %172 = vector.broadcast %171 : vector<1x1xf32> to vector<16x16xf32>
    %173 = arith.mulf %172, %166 : vector<16x16xf32>
    %c32_82 = arith.constant 32 : index
    %c0_83 = arith.constant 0 : index
    %174 = vector.load %arg4[%c32_82, %c0_83] : memref<96x16xf32, #tpu.memory_space<vmem>>, vector<16x16xf32>
    %175 = arith.addf %173, %174 : vector<16x16xf32>
    %176 = arith.truncf %175 : vector<16x16xf32> to vector<16x16xbf16>
    %c0_84 = arith.constant 0 : index
    %c0_85 = arith.constant 0 : index
    %177 = vector.load %arg10[%c0_84, %c0_85] : memref<128x128xbf16, #tpu.memory_space<vmem>>, vector<16x16xbf16>
    tpu.vector_store %arg10[%c0_84, %c0_85], %176 {strides = array<i32>} : memref<128x128xbf16, #tpu.memory_space<vmem>>, vector<16x16xbf16>,
    %c16_86 = arith.constant 16 : index
    %c16_87 = arith.constant 16 : index
    %178 = vector.load %arg10[%c16_86, %c16_87] : memref<128x128xbf16, #tpu.memory_space<vmem>>, vector<16x16xbf16>
    tpu.vector_store %arg10[%c16_86, %c16_87], %176 {strides = array<i32>} : memref<128x128xbf16, #tpu.memory_space<vmem>>, vector<16x16xbf16>,
    %c32_88 = arith.constant 32 : index
    %c32_89 = arith.constant 32 : index
    %179 = vector.load %arg10[%c32_88, %c32_89] : memref<128x128xbf16, #tpu.memory_space<vmem>>, vector<16x16xbf16>
    tpu.vector_store %arg10[%c32_88, %c32_89], %176 {strides = array<i32>} : memref<128x128xbf16, #tpu.memory_space<vmem>>, vector<16x16xbf16>,
    %c48_90 = arith.constant 48 : index
    %c48_91 = arith.constant 48 : index
    %180 = vector.load %arg10[%c48_90, %c48_91] : memref<128x128xbf16, #tpu.memory_space<vmem>>, vector<16x16xbf16>
    tpu.vector_store %arg10[%c48_90, %c48_91], %176 {strides = array<i32>} : memref<128x128xbf16, #tpu.memory_space<vmem>>, vector<16x16xbf16>,
    %c64_92 = arith.constant 64 : index
    %c64_93 = arith.constant 64 : index
    %181 = vector.load %arg10[%c64_92, %c64_93] : memref<128x128xbf16, #tpu.memory_space<vmem>>, vector<16x16xbf16>
    tpu.vector_store %arg10[%c64_92, %c64_93], %176 {strides = array<i32>} : memref<128x128xbf16, #tpu.memory_space<vmem>>, vector<16x16xbf16>,
    %c80_94 = arith.constant 80 : index
    %c80_95 = arith.constant 80 : index
    %182 = vector.load %arg10[%c80_94, %c80_95] : memref<128x128xbf16, #tpu.memory_space<vmem>>, vector<16x16xbf16>
    tpu.vector_store %arg10[%c80_94, %c80_95], %176 {strides = array<i32>} : memref<128x128xbf16, #tpu.memory_space<vmem>>, vector<16x16xbf16>,
    %c96_96 = arith.constant 96 : index
    %c96_97 = arith.constant 96 : index
    %183 = vector.load %arg10[%c96_96, %c96_97] : memref<128x128xbf16, #tpu.memory_space<vmem>>, vector<16x16xbf16>
    tpu.vector_store %arg10[%c96_96, %c96_97], %176 {strides = array<i32>} : memref<128x128xbf16, #tpu.memory_space<vmem>>, vector<16x16xbf16>,
    %c112_98 = arith.constant 112 : index
    %c112_99 = arith.constant 112 : index
    %184 = vector.load %arg10[%c112_98, %c112_99] : memref<128x128xbf16, #tpu.memory_space<vmem>>, vector<16x16xbf16>
    tpu.vector_store %arg10[%c112_98, %c112_99], %176 {strides = array<i32>} : memref<128x128xbf16, #tpu.memory_space<vmem>>, vector<16x16xbf16>,
    %185 = vector.extract_strided_slice %24 {offsets = [88, 0], sizes = [16, 128], strides = [1, 1]} : vector<104x128xf32> to vector<16x128xf32>
    %186 = arith.truncf %185 : vector<16x128xf32> to vector<16x128xbf16>
    %c0_100 = arith.constant 0 : index
    %c0_101 = arith.constant 0 : index
    %187 = vector.load %arg10[%c0_100, %c0_101] : memref<128x128xbf16, #tpu.memory_space<vmem>>, vector<128x128xbf16>
    %cst_102 = arith.constant dense<0.000000e+00> : vector<16x128xf32>
    %188 = tpu.matmul %186, %187, %cst_102 {dimension_numbers = #tpu.dot_dimension_numbers<[1], [0], [0], [1], [0, 0, 1, 1], [], []>} : vector<16x128xbf16>, vector<128x128xbf16>, vector<16x128xf32> -> vector<16x128xf32>
    %189 = arith.addf %135, %188 : vector<16x128xf32>
    %190 = vector.broadcast %1 : vector<16x1xf32> to vector<16x128xf32>
    %191 = arith.addf %189, %190 : vector<16x128xf32>
    %c0_103 = arith.constant 0 : index
    %c0_104 = arith.constant 0 : index
    %c0_105 = arith.constant 0 : index
    %192 = vector.load %arg6[%c0_103, %c0_104, %c0_105] : memref<2x16x128xf32, #tpu.memory_space<vmem>>, vector<1x16x128xf32>
    %193 = vector.shape_cast %192 : vector<1x16x128xf32> to vector<16x128xf32>
    %194 = vector.shape_cast %191 : vector<16x128xf32> to vector<1x16x128xf32>
    tpu.vector_store %arg6[%c0_103, %c0_104, %c0_105], %194 {strides = array<i32>} : memref<2x16x128xf32, #tpu.memory_space<vmem>>, vector<1x16x128xf32>,
    %cst_106 = arith.constant dense<0.000000e+00> : vector<16xf32>
    %195 = vector.multi_reduction <add>, %191, %cst_106 [1] : vector<16x128xf32> to vector<16xf32>
    %196 = vector.shape_cast %195 : vector<16xf32> to vector<16x1xf32>
    %197 = arith.addf %17, %196 : vector<16x1xf32>
    %198 = arith.mulf %191, %191 : vector<16x128xf32>
    %cst_107 = arith.constant dense<0.000000e+00> : vector<16xf32>
    %199 = vector.multi_reduction <add>, %198, %cst_107 [1] : vector<16x128xf32> to vector<16xf32>
    %200 = vector.shape_cast %199 : vector<16xf32> to vector<16x1xf32>
    %201 = arith.addf %18, %200 : vector<16x1xf32>
    %c1_108 = arith.constant 1 : index
    %c0_109 = arith.constant 0 : index
    %c0_110 = arith.constant 0 : index
    %202 = vector.load %arg0[%c1_108, %c0_109, %c0_110] : memref<2x16x128xf32, #tpu.memory_space<vmem>>, vector<1x16x128xf32>
    %203 = vector.shape_cast %202 : vector<1x16x128xf32> to vector<16x128xf32>
    %204 = arith.truncf %203 : vector<16x128xf32> to vector<16x128xbf16>
    %cst_111 = arith.constant dense<0.000000e+00> : vector<104x128xf32>
    %205 = tpu.matmul %11, %204, %cst_111 {dimension_numbers = #tpu.dot_dimension_numbers<[1], [0], [0], [1], [0, 0, 1, 1], [], []>} : vector<104x16xbf16>, vector<16x128xbf16>, vector<104x128xf32> -> vector<104x128xf32>
    %206 = vector.broadcast %0 : vector<104x1xf32> to vector<104x128xf32>
    %207 = arith.addf %205, %206 : vector<104x128xf32>
    %208 = vector.extract_strided_slice %207 {offsets = [0, 0], sizes = [24, 128], strides = [1, 1]} : vector<104x128xf32> to vector<24x128xf32>
    %209 = tpu.transpose %208, [1, 0] : vector<24x128xf32> -> vector<128x24xf32>
    %cst_112 = arith.constant 0.000000e+00 : f32
    %210 = vector.broadcast %cst_112 : f32 to vector<16x128xf32>
    %211 = vector.extract_strided_slice %209 {offsets = [0, 0], sizes = [128, 8], strides = [1, 1]} : vector<128x24xf32> to vector<128x8xf32>
    %212 = vector.extract_strided_slice %207 {offsets = [24, 0], sizes = [8, 128], strides = [1, 1]} : vector<104x128xf32> to vector<8x128xf32>
    %213 = arith.truncf %211 : vector<128x8xf32> to vector<128x8xbf16>
    %214 = arith.truncf %212 : vector<8x128xf32> to vector<8x128xbf16>
    %cst_113 = arith.constant dense<0.000000e+00> : vector<128x128xf32>
    %215 = tpu.matmul %213, %214, %cst_113 {dimension_numbers = #tpu.dot_dimension_numbers<[1], [0], [0], [1], [0, 0, 1, 1], [], []>} : vector<128x8xbf16>, vector<8x128xbf16>, vector<128x128xf32> -> vector<128x128xf32>
    %216 = vector.extract_strided_slice %215 {offsets = [0, 0], sizes = [16, 16], strides = [1, 1]} : vector<128x128xf32> to vector<16x16xf32>
    %217 = vector.extract_strided_slice %215 {offsets = [16, 16], sizes = [16, 16], strides = [1, 1]} : vector<128x128xf32> to vector<16x16xf32>
    %218 = arith.addf %216, %217 : vector<16x16xf32>
    %219 = vector.extract_strided_slice %215 {offsets = [32, 32], sizes = [16, 16], strides = [1, 1]} : vector<128x128xf32> to vector<16x16xf32>
    %220 = arith.addf %218, %219 : vector<16x16xf32>
    %221 = vector.extract_strided_slice %215 {offsets = [48, 48], sizes = [16, 16], strides = [1, 1]} : vector<128x128xf32> to vector<16x16xf32>
    %222 = arith.addf %220, %221 : vector<16x16xf32>
    %223 = vector.extract_strided_slice %215 {offsets = [64, 64], sizes = [16, 16], strides = [1, 1]} : vector<128x128xf32> to vector<16x16xf32>
    %224 = arith.addf %222, %223 : vector<16x16xf32>
    %225 = vector.extract_strided_slice %215 {offsets = [80, 80], sizes = [16, 16], strides = [1, 1]} : vector<128x128xf32> to vector<16x16xf32>
    %226 = arith.addf %224, %225 : vector<16x16xf32>
    %227 = vector.extract_strided_slice %215 {offsets = [96, 96], sizes = [16, 16], strides = [1, 1]} : vector<128x128xf32> to vector<16x16xf32>
    %228 = arith.addf %226, %227 : vector<16x16xf32>
    %229 = vector.extract_strided_slice %215 {offsets = [112, 112], sizes = [16, 16], strides = [1, 1]} : vector<128x128xf32> to vector<16x16xf32>
    %230 = arith.addf %228, %229 : vector<16x16xf32>
    %cst_114 = arith.constant 3.125000e-02 : f32
    %231 = vector.broadcast %cst_114 : f32 to vector<16x16xf32>
    %232 = arith.mulf %230, %231 : vector<16x16xf32>
    %cst_115 = arith.constant dense<0xFF800000> : vector<16xf32>
    %233 = vector.multi_reduction <maximumf>, %232, %cst_115 [0] : vector<16x16xf32> to vector<16xf32>
    %234 = vector.shape_cast %233 : vector<16xf32> to vector<1x16xf32>
    %235 = vector.broadcast %234 : vector<1x16xf32> to vector<16x16xf32>
    %236 = arith.subf %232, %235 : vector<16x16xf32>
    %237 = math.exp %236 : vector<16x16xf32>
    %cst_116 = arith.constant dense<0.000000e+00> : vector<16xf32>
    %238 = vector.multi_reduction <add>, %237, %cst_116 [0] : vector<16x16xf32> to vector<16xf32>
    %239 = vector.shape_cast %238 : vector<16xf32> to vector<1x16xf32>
    %240 = vector.broadcast %239 : vector<1x16xf32> to vector<16x16xf32>
    %241 = arith.divf %237, %240 : vector<16x16xf32>
    %242 = vector.extract_strided_slice %207 {offsets = [48, 0], sizes = [1, 128], strides = [1, 1]} : vector<104x128xf32> to vector<1x128xf32>
    %cst_117 = arith.constant dense<0.000000e+00> : vector<1xf32>
    %243 = vector.multi_reduction <add>, %242, %cst_117 [1] : vector<1x128xf32> to vector<1xf32>
    %244 = vector.shape_cast %243 : vector<1xf32> to vector<1x1xf32>
    %cst_118 = arith.constant 7.812500e-03 : f32
    %245 = vector.broadcast %cst_118 : f32 to vector<1x1xf32>
    %246 = arith.mulf %244, %245 : vector<1x1xf32>
    %247 = vector.broadcast %246 : vector<1x1xf32> to vector<16x16xf32>
    %248 = arith.mulf %247, %241 : vector<16x16xf32>
    %c0_119 = arith.constant 0 : index
    %c0_120 = arith.constant 0 : index
    %249 = vector.load %arg4[%c0_119, %c0_120] : memref<96x16xf32, #tpu.memory_space<vmem>>, vector<16x16xf32>
    %250 = arith.addf %248, %249 : vector<16x16xf32>
    %251 = arith.truncf %250 : vector<16x16xf32> to vector<16x16xbf16>
    %c0_121 = arith.constant 0 : index
    %c0_122 = arith.constant 0 : index
    %252 = vector.load %arg10[%c0_121, %c0_122] : memref<128x128xbf16, #tpu.memory_space<vmem>>, vector<16x16xbf16>
    tpu.vector_store %arg10[%c0_121, %c0_122], %251 {strides = array<i32>} : memref<128x128xbf16, #tpu.memory_space<vmem>>, vector<16x16xbf16>,
    %c16_123 = arith.constant 16 : index
    %c16_124 = arith.constant 16 : index
    %253 = vector.load %arg10[%c16_123, %c16_124] : memref<128x128xbf16, #tpu.memory_space<vmem>>, vector<16x16xbf16>
    tpu.vector_store %arg10[%c16_123, %c16_124], %251 {strides = array<i32>} : memref<128x128xbf16, #tpu.memory_space<vmem>>, vector<16x16xbf16>,
    %c32_125 = arith.constant 32 : index
    %c32_126 = arith.constant 32 : index
    %254 = vector.load %arg10[%c32_125, %c32_126] : memref<128x128xbf16, #tpu.memory_space<vmem>>, vector<16x16xbf16>
    tpu.vector_store %arg10[%c32_125, %c32_126], %251 {strides = array<i32>} : memref<128x128xbf16, #tpu.memory_space<vmem>>, vector<16x16xbf16>,
    %c48_127 = arith.constant 48 : index
    %c48_128 = arith.constant 48 : index
    %255 = vector.load %arg10[%c48_127, %c48_128] : memref<128x128xbf16, #tpu.memory_space<vmem>>, vector<16x16xbf16>
    tpu.vector_store %arg10[%c48_127, %c48_128], %251 {strides = array<i32>} : memref<128x128xbf16, #tpu.memory_space<vmem>>, vector<16x16xbf16>,
    %c64_129 = arith.constant 64 : index
    %c64_130 = arith.constant 64 : index
    %256 = vector.load %arg10[%c64_129, %c64_130] : memref<128x128xbf16, #tpu.memory_space<vmem>>, vector<16x16xbf16>
    tpu.vector_store %arg10[%c64_129, %c64_130], %251 {strides = array<i32>} : memref<128x128xbf16, #tpu.memory_space<vmem>>, vector<16x16xbf16>,
    %c80_131 = arith.constant 80 : index
    %c80_132 = arith.constant 80 : index
    %257 = vector.load %arg10[%c80_131, %c80_132] : memref<128x128xbf16, #tpu.memory_space<vmem>>, vector<16x16xbf16>
    tpu.vector_store %arg10[%c80_131, %c80_132], %251 {strides = array<i32>} : memref<128x128xbf16, #tpu.memory_space<vmem>>, vector<16x16xbf16>,
    %c96_133 = arith.constant 96 : index
    %c96_134 = arith.constant 96 : index
    %258 = vector.load %arg10[%c96_133, %c96_134] : memref<128x128xbf16, #tpu.memory_space<vmem>>, vector<16x16xbf16>
    tpu.vector_store %arg10[%c96_133, %c96_134], %251 {strides = array<i32>} : memref<128x128xbf16, #tpu.memory_space<vmem>>, vector<16x16xbf16>,
    %c112_135 = arith.constant 112 : index
    %c112_136 = arith.constant 112 : index
    %259 = vector.load %arg10[%c112_135, %c112_136] : memref<128x128xbf16, #tpu.memory_space<vmem>>, vector<16x16xbf16>
    tpu.vector_store %arg10[%c112_135, %c112_136], %251 {strides = array<i32>} : memref<128x128xbf16, #tpu.memory_space<vmem>>, vector<16x16xbf16>,
    %260 = vector.extract_strided_slice %207 {offsets = [56, 0], sizes = [16, 128], strides = [1, 1]} : vector<104x128xf32> to vector<16x128xf32>
    %261 = arith.truncf %260 : vector<16x128xf32> to vector<16x128xbf16>
    %c0_137 = arith.constant 0 : index
    %c0_138 = arith.constant 0 : index
    %262 = vector.load %arg10[%c0_137, %c0_138] : memref<128x128xbf16, #tpu.memory_space<vmem>>, vector<128x128xbf16>
    %cst_139 = arith.constant dense<0.000000e+00> : vector<16x128xf32>
    %263 = tpu.matmul %261, %262, %cst_139 {dimension_numbers = #tpu.dot_dimension_numbers<[1], [0], [0], [1], [0, 0, 1, 1], [], []>} : vector<16x128xbf16>, vector<128x128xbf16>, vector<16x128xf32> -> vector<16x128xf32>
    %264 = arith.addf %210, %263 : vector<16x128xf32>
    %265 = vector.extract_strided_slice %209 {offsets = [0, 8], sizes = [128, 8], strides = [1, 1]} : vector<128x24xf32> to vector<128x8xf32>
    %266 = vector.extract_strided_slice %207 {offsets = [32, 0], sizes = [8, 128], strides = [1, 1]} : vector<104x128xf32> to vector<8x128xf32>
    %267 = arith.truncf %265 : vector<128x8xf32> to vector<128x8xbf16>
    %268 = arith.truncf %266 : vector<8x128xf32> to vector<8x128xbf16>
    %cst_140 = arith.constant dense<0.000000e+00> : vector<128x128xf32>
    %269 = tpu.matmul %267, %268, %cst_140 {dimension_numbers = #tpu.dot_dimension_numbers<[1], [0], [0], [1], [0, 0, 1, 1], [], []>} : vector<128x8xbf16>, vector<8x128xbf16>, vector<128x128xf32> -> vector<128x128xf32>
    %270 = vector.extract_strided_slice %269 {offsets = [0, 0], sizes = [16, 16], strides = [1, 1]} : vector<128x128xf32> to vector<16x16xf32>
    %271 = vector.extract_strided_slice %269 {offsets = [16, 16], sizes = [16, 16], strides = [1, 1]} : vector<128x128xf32> to vector<16x16xf32>
    %272 = arith.addf %270, %271 : vector<16x16xf32>
    %273 = vector.extract_strided_slice %269 {offsets = [32, 32], sizes = [16, 16], strides = [1, 1]} : vector<128x128xf32> to vector<16x16xf32>
    %274 = arith.addf %272, %273 : vector<16x16xf32>
    %275 = vector.extract_strided_slice %269 {offsets = [48, 48], sizes = [16, 16], strides = [1, 1]} : vector<128x128xf32> to vector<16x16xf32>
    %276 = arith.addf %274, %275 : vector<16x16xf32>
    %277 = vector.extract_strided_slice %269 {offsets = [64, 64], sizes = [16, 16], strides = [1, 1]} : vector<128x128xf32> to vector<16x16xf32>
    %278 = arith.addf %276, %277 : vector<16x16xf32>
    %279 = vector.extract_strided_slice %269 {offsets = [80, 80], sizes = [16, 16], strides = [1, 1]} : vector<128x128xf32> to vector<16x16xf32>
    %280 = arith.addf %278, %279 : vector<16x16xf32>
    %281 = vector.extract_strided_slice %269 {offsets = [96, 96], sizes = [16, 16], strides = [1, 1]} : vector<128x128xf32> to vector<16x16xf32>
    %282 = arith.addf %280, %281 : vector<16x16xf32>
    %283 = vector.extract_strided_slice %269 {offsets = [112, 112], sizes = [16, 16], strides = [1, 1]} : vector<128x128xf32> to vector<16x16xf32>
    %284 = arith.addf %282, %283 : vector<16x16xf32>
    %cst_141 = arith.constant 3.125000e-02 : f32
    %285 = vector.broadcast %cst_141 : f32 to vector<16x16xf32>
    %286 = arith.mulf %284, %285 : vector<16x16xf32>
    %cst_142 = arith.constant dense<0xFF800000> : vector<16xf32>
    %287 = vector.multi_reduction <maximumf>, %286, %cst_142 [0] : vector<16x16xf32> to vector<16xf32>
    %288 = vector.shape_cast %287 : vector<16xf32> to vector<1x16xf32>
    %289 = vector.broadcast %288 : vector<1x16xf32> to vector<16x16xf32>
    %290 = arith.subf %286, %289 : vector<16x16xf32>
    %291 = math.exp %290 : vector<16x16xf32>
    %cst_143 = arith.constant dense<0.000000e+00> : vector<16xf32>
    %292 = vector.multi_reduction <add>, %291, %cst_143 [0] : vector<16x16xf32> to vector<16xf32>
    %293 = vector.shape_cast %292 : vector<16xf32> to vector<1x16xf32>
    %294 = vector.broadcast %293 : vector<1x16xf32> to vector<16x16xf32>
    %295 = arith.divf %291, %294 : vector<16x16xf32>
    %296 = vector.extract_strided_slice %207 {offsets = [49, 0], sizes = [1, 128], strides = [1, 1]} : vector<104x128xf32> to vector<1x128xf32>
    %cst_144 = arith.constant dense<0.000000e+00> : vector<1xf32>
    %297 = vector.multi_reduction <add>, %296, %cst_144 [1] : vector<1x128xf32> to vector<1xf32>
    %298 = vector.shape_cast %297 : vector<1xf32> to vector<1x1xf32>
    %cst_145 = arith.constant 7.812500e-03 : f32
    %299 = vector.broadcast %cst_145 : f32 to vector<1x1xf32>
    %300 = arith.mulf %298, %299 : vector<1x1xf32>
    %301 = vector.broadcast %300 : vector<1x1xf32> to vector<16x16xf32>
    %302 = arith.mulf %301, %295 : vector<16x16xf32>
    %c16_146 = arith.constant 16 : index
    %c0_147 = arith.constant 0 : index
    %303 = vector.load %arg4[%c16_146, %c0_147] : memref<96x16xf32, #tpu.memory_space<vmem>>, vector<16x16xf32>
    %304 = arith.addf %302, %303 : vector<16x16xf32>
    %305 = arith.truncf %304 : vector<16x16xf32> to vector<16x16xbf16>
    %c0_148 = arith.constant 0 : index
    %c0_149 = arith.constant 0 : index
    %306 = vector.load %arg10[%c0_148, %c0_149] : memref<128x128xbf16, #tpu.memory_space<vmem>>, vector<16x16xbf16>
    tpu.vector_store %arg10[%c0_148, %c0_149], %305 {strides = array<i32>} : memref<128x128xbf16, #tpu.memory_space<vmem>>, vector<16x16xbf16>,
    %c16_150 = arith.constant 16 : index
    %c16_151 = arith.constant 16 : index
    %307 = vector.load %arg10[%c16_150, %c16_151] : memref<128x128xbf16, #tpu.memory_space<vmem>>, vector<16x16xbf16>
    tpu.vector_store %arg10[%c16_150, %c16_151], %305 {strides = array<i32>} : memref<128x128xbf16, #tpu.memory_space<vmem>>, vector<16x16xbf16>,
    %c32_152 = arith.constant 32 : index
    %c32_153 = arith.constant 32 : index
    %308 = vector.load %arg10[%c32_152, %c32_153] : memref<128x128xbf16, #tpu.memory_space<vmem>>, vector<16x16xbf16>
    tpu.vector_store %arg10[%c32_152, %c32_153], %305 {strides = array<i32>} : memref<128x128xbf16, #tpu.memory_space<vmem>>, vector<16x16xbf16>,
    %c48_154 = arith.constant 48 : index
    %c48_155 = arith.constant 48 : index
    %309 = vector.load %arg10[%c48_154, %c48_155] : memref<128x128xbf16, #tpu.memory_space<vmem>>, vector<16x16xbf16>
    tpu.vector_store %arg10[%c48_154, %c48_155], %305 {strides = array<i32>} : memref<128x128xbf16, #tpu.memory_space<vmem>>, vector<16x16xbf16>,
    %c64_156 = arith.constant 64 : index
    %c64_157 = arith.constant 64 : index
    %310 = vector.load %arg10[%c64_156, %c64_157] : memref<128x128xbf16, #tpu.memory_space<vmem>>, vector<16x16xbf16>
    tpu.vector_store %arg10[%c64_156, %c64_157], %305 {strides = array<i32>} : memref<128x128xbf16, #tpu.memory_space<vmem>>, vector<16x16xbf16>,
    %c80_158 = arith.constant 80 : index
    %c80_159 = arith.constant 80 : index
    %311 = vector.load %arg10[%c80_158, %c80_159] : memref<128x128xbf16, #tpu.memory_space<vmem>>, vector<16x16xbf16>
    tpu.vector_store %arg10[%c80_158, %c80_159], %305 {strides = array<i32>} : memref<128x128xbf16, #tpu.memory_space<vmem>>, vector<16x16xbf16>,
    %c96_160 = arith.constant 96 : index
    %c96_161 = arith.constant 96 : index
    %312 = vector.load %arg10[%c96_160, %c96_161] : memref<128x128xbf16, #tpu.memory_space<vmem>>, vector<16x16xbf16>
    tpu.vector_store %arg10[%c96_160, %c96_161], %305 {strides = array<i32>} : memref<128x128xbf16, #tpu.memory_space<vmem>>, vector<16x16xbf16>,
    %c112_162 = arith.constant 112 : index
    %c112_163 = arith.constant 112 : index
    %313 = vector.load %arg10[%c112_162, %c112_163] : memref<128x128xbf16, #tpu.memory_space<vmem>>, vector<16x16xbf16>
    tpu.vector_store %arg10[%c112_162, %c112_163], %305 {strides = array<i32>} : memref<128x128xbf16, #tpu.memory_space<vmem>>, vector<16x16xbf16>,
    %314 = vector.extract_strided_slice %207 {offsets = [72, 0], sizes = [16, 128], strides = [1, 1]} : vector<104x128xf32> to vector<16x128xf32>
    %315 = arith.truncf %314 : vector<16x128xf32> to vector<16x128xbf16>
    %c0_164 = arith.constant 0 : index
    %c0_165 = arith.constant 0 : index
    %316 = vector.load %arg10[%c0_164, %c0_165] : memref<128x128xbf16, #tpu.memory_space<vmem>>, vector<128x128xbf16>
    %cst_166 = arith.constant dense<0.000000e+00> : vector<16x128xf32>
    %317 = tpu.matmul %315, %316, %cst_166 {dimension_numbers = #tpu.dot_dimension_numbers<[1], [0], [0], [1], [0, 0, 1, 1], [], []>} : vector<16x128xbf16>, vector<128x128xbf16>, vector<16x128xf32> -> vector<16x128xf32>
    %318 = arith.addf %264, %317 : vector<16x128xf32>
    %319 = vector.extract_strided_slice %209 {offsets = [0, 16], sizes = [128, 8], strides = [1, 1]} : vector<128x24xf32> to vector<128x8xf32>
    %320 = vector.extract_strided_slice %207 {offsets = [40, 0], sizes = [8, 128], strides = [1, 1]} : vector<104x128xf32> to vector<8x128xf32>
    %321 = arith.truncf %319 : vector<128x8xf32> to vector<128x8xbf16>
    %322 = arith.truncf %320 : vector<8x128xf32> to vector<8x128xbf16>
    %cst_167 = arith.constant dense<0.000000e+00> : vector<128x128xf32>
    %323 = tpu.matmul %321, %322, %cst_167 {dimension_numbers = #tpu.dot_dimension_numbers<[1], [0], [0], [1], [0, 0, 1, 1], [], []>} : vector<128x8xbf16>, vector<8x128xbf16>, vector<128x128xf32> -> vector<128x128xf32>
    %324 = vector.extract_strided_slice %323 {offsets = [0, 0], sizes = [16, 16], strides = [1, 1]} : vector<128x128xf32> to vector<16x16xf32>
    %325 = vector.extract_strided_slice %323 {offsets = [16, 16], sizes = [16, 16], strides = [1, 1]} : vector<128x128xf32> to vector<16x16xf32>
    %326 = arith.addf %324, %325 : vector<16x16xf32>
    %327 = vector.extract_strided_slice %323 {offsets = [32, 32], sizes = [16, 16], strides = [1, 1]} : vector<128x128xf32> to vector<16x16xf32>
    %328 = arith.addf %326, %327 : vector<16x16xf32>
    %329 = vector.extract_strided_slice %323 {offsets = [48, 48], sizes = [16, 16], strides = [1, 1]} : vector<128x128xf32> to vector<16x16xf32>
    %330 = arith.addf %328, %329 : vector<16x16xf32>
    %331 = vector.extract_strided_slice %323 {offsets = [64, 64], sizes = [16, 16], strides = [1, 1]} : vector<128x128xf32> to vector<16x16xf32>
    %332 = arith.addf %330, %331 : vector<16x16xf32>
    %333 = vector.extract_strided_slice %323 {offsets = [80, 80], sizes = [16, 16], strides = [1, 1]} : vector<128x128xf32> to vector<16x16xf32>
    %334 = arith.addf %332, %333 : vector<16x16xf32>
    %335 = vector.extract_strided_slice %323 {offsets = [96, 96], sizes = [16, 16], strides = [1, 1]} : vector<128x128xf32> to vector<16x16xf32>
    %336 = arith.addf %334, %335 : vector<16x16xf32>
    %337 = vector.extract_strided_slice %323 {offsets = [112, 112], sizes = [16, 16], strides = [1, 1]} : vector<128x128xf32> to vector<16x16xf32>
    %338 = arith.addf %336, %337 : vector<16x16xf32>
    %cst_168 = arith.constant 3.125000e-02 : f32
    %339 = vector.broadcast %cst_168 : f32 to vector<16x16xf32>
    %340 = arith.mulf %338, %339 : vector<16x16xf32>
    %cst_169 = arith.constant dense<0xFF800000> : vector<16xf32>
    %341 = vector.multi_reduction <maximumf>, %340, %cst_169 [0] : vector<16x16xf32> to vector<16xf32>
    %342 = vector.shape_cast %341 : vector<16xf32> to vector<1x16xf32>
    %343 = vector.broadcast %342 : vector<1x16xf32> to vector<16x16xf32>
    %344 = arith.subf %340, %343 : vector<16x16xf32>
    %345 = math.exp %344 : vector<16x16xf32>
    %cst_170 = arith.constant dense<0.000000e+00> : vector<16xf32>
    %346 = vector.multi_reduction <add>, %345, %cst_170 [0] : vector<16x16xf32> to vector<16xf32>
    %347 = vector.shape_cast %346 : vector<16xf32> to vector<1x16xf32>
    %348 = vector.broadcast %347 : vector<1x16xf32> to vector<16x16xf32>
    %349 = arith.divf %345, %348 : vector<16x16xf32>
    %350 = vector.extract_strided_slice %207 {offsets = [50, 0], sizes = [1, 128], strides = [1, 1]} : vector<104x128xf32> to vector<1x128xf32>
    %cst_171 = arith.constant dense<0.000000e+00> : vector<1xf32>
    %351 = vector.multi_reduction <add>, %350, %cst_171 [1] : vector<1x128xf32> to vector<1xf32>
    %352 = vector.shape_cast %351 : vector<1xf32> to vector<1x1xf32>
    %cst_172 = arith.constant 7.812500e-03 : f32
    %353 = vector.broadcast %cst_172 : f32 to vector<1x1xf32>
    %354 = arith.mulf %352, %353 : vector<1x1xf32>
    %355 = vector.broadcast %354 : vector<1x1xf32> to vector<16x16xf32>
    %356 = arith.mulf %355, %349 : vector<16x16xf32>
    %c32_173 = arith.constant 32 : index
    %c0_174 = arith.constant 0 : index
    %357 = vector.load %arg4[%c32_173, %c0_174] : memref<96x16xf32, #tpu.memory_space<vmem>>, vector<16x16xf32>
    %358 = arith.addf %356, %357 : vector<16x16xf32>
    %359 = arith.truncf %358 : vector<16x16xf32> to vector<16x16xbf16>
    %c0_175 = arith.constant 0 : index
    %c0_176 = arith.constant 0 : index
    %360 = vector.load %arg10[%c0_175, %c0_176] : memref<128x128xbf16, #tpu.memory_space<vmem>>, vector<16x16xbf16>
    tpu.vector_store %arg10[%c0_175, %c0_176], %359 {strides = array<i32>} : memref<128x128xbf16, #tpu.memory_space<vmem>>, vector<16x16xbf16>,
    %c16_177 = arith.constant 16 : index
    %c16_178 = arith.constant 16 : index
    %361 = vector.load %arg10[%c16_177, %c16_178] : memref<128x128xbf16, #tpu.memory_space<vmem>>, vector<16x16xbf16>
    tpu.vector_store %arg10[%c16_177, %c16_178], %359 {strides = array<i32>} : memref<128x128xbf16, #tpu.memory_space<vmem>>, vector<16x16xbf16>,
    %c32_179 = arith.constant 32 : index
    %c32_180 = arith.constant 32 : index
    %362 = vector.load %arg10[%c32_179, %c32_180] : memref<128x128xbf16, #tpu.memory_space<vmem>>, vector<16x16xbf16>
    tpu.vector_store %arg10[%c32_179, %c32_180], %359 {strides = array<i32>} : memref<128x128xbf16, #tpu.memory_space<vmem>>, vector<16x16xbf16>,
    %c48_181 = arith.constant 48 : index
    %c48_182 = arith.constant 48 : index
    %363 = vector.load %arg10[%c48_181, %c48_182] : memref<128x128xbf16, #tpu.memory_space<vmem>>, vector<16x16xbf16>
    tpu.vector_store %arg10[%c48_181, %c48_182], %359 {strides = array<i32>} : memref<128x128xbf16, #tpu.memory_space<vmem>>, vector<16x16xbf16>,
    %c64_183 = arith.constant 64 : index
    %c64_184 = arith.constant 64 : index
    %364 = vector.load %arg10[%c64_183, %c64_184] : memref<128x128xbf16, #tpu.memory_space<vmem>>, vector<16x16xbf16>
    tpu.vector_store %arg10[%c64_183, %c64_184], %359 {strides = array<i32>} : memref<128x128xbf16, #tpu.memory_space<vmem>>, vector<16x16xbf16>,
    %c80_185 = arith.constant 80 : index
    %c80_186 = arith.constant 80 : index
    %365 = vector.load %arg10[%c80_185, %c80_186] : memref<128x128xbf16, #tpu.memory_space<vmem>>, vector<16x16xbf16>
    tpu.vector_store %arg10[%c80_185, %c80_186], %359 {strides = array<i32>} : memref<128x128xbf16, #tpu.memory_space<vmem>>, vector<16x16xbf16>,
    %c96_187 = arith.constant 96 : index
    %c96_188 = arith.constant 96 : index
    %366 = vector.load %arg10[%c96_187, %c96_188] : memref<128x128xbf16, #tpu.memory_space<vmem>>, vector<16x16xbf16>
    tpu.vector_store %arg10[%c96_187, %c96_188], %359 {strides = array<i32>} : memref<128x128xbf16, #tpu.memory_space<vmem>>, vector<16x16xbf16>,
    %c112_189 = arith.constant 112 : index
    %c112_190 = arith.constant 112 : index
    %367 = vector.load %arg10[%c112_189, %c112_190] : memref<128x128xbf16, #tpu.memory_space<vmem>>, vector<16x16xbf16>
    tpu.vector_store %arg10[%c112_189, %c112_190], %359 {strides = array<i32>} : memref<128x128xbf16, #tpu.memory_space<vmem>>, vector<16x16xbf16>,
    %368 = vector.extract_strided_slice %207 {offsets = [88, 0], sizes = [16, 128], strides = [1, 1]} : vector<104x128xf32> to vector<16x128xf32>
    %369 = arith.truncf %368 : vector<16x128xf32> to vector<16x128xbf16>
    %c0_191 = arith.constant 0 : index
    %c0_192 = arith.constant 0 : index
    %370 = vector.load %arg10[%c0_191, %c0_192] : memref<128x128xbf16, #tpu.memory_space<vmem>>, vector<128x128xbf16>
    %cst_193 = arith.constant dense<0.000000e+00> : vector<16x128xf32>
    %371 = tpu.matmul %369, %370, %cst_193 {dimension_numbers = #tpu.dot_dimension_numbers<[1], [0], [0], [1], [0, 0, 1, 1], [], []>} : vector<16x128xbf16>, vector<128x128xbf16>, vector<16x128xf32> -> vector<16x128xf32>
    %372 = arith.addf %318, %371 : vector<16x128xf32>
    %373 = vector.broadcast %1 : vector<16x1xf32> to vector<16x128xf32>
    %374 = arith.addf %372, %373 : vector<16x128xf32>
    %c1_194 = arith.constant 1 : index
    %c0_195 = arith.constant 0 : index
    %c0_196 = arith.constant 0 : index
    %375 = vector.load %arg6[%c1_194, %c0_195, %c0_196] : memref<2x16x128xf32, #tpu.memory_space<vmem>>, vector<1x16x128xf32>
    %376 = vector.shape_cast %375 : vector<1x16x128xf32> to vector<16x128xf32>
    %377 = vector.shape_cast %374 : vector<16x128xf32> to vector<1x16x128xf32>
    tpu.vector_store %arg6[%c1_194, %c0_195, %c0_196], %377 {strides = array<i32>} : memref<2x16x128xf32, #tpu.memory_space<vmem>>, vector<1x16x128xf32>,
    %cst_197 = arith.constant dense<0.000000e+00> : vector<16xf32>
    %378 = vector.multi_reduction <add>, %374, %cst_197 [1] : vector<16x128xf32> to vector<16xf32>
    %379 = vector.shape_cast %378 : vector<16xf32> to vector<16x1xf32>
    %380 = arith.addf %197, %379 : vector<16x1xf32>
    %381 = arith.mulf %374, %374 : vector<16x128xf32>
    %cst_198 = arith.constant dense<0.000000e+00> : vector<16xf32>
    %382 = vector.multi_reduction <add>, %381, %cst_198 [1] : vector<16x128xf32> to vector<16xf32>
    %383 = vector.shape_cast %382 : vector<16xf32> to vector<16x1xf32>
    %384 = arith.addf %201, %383 : vector<16x1xf32>
    %cst_199 = arith.constant 3.906250e-03 : f32
    %385 = vector.broadcast %cst_199 : f32 to vector<16x1xf32>
    %386 = arith.mulf %380, %385 : vector<16x1xf32>
    %cst_200 = arith.constant 3.906250e-03 : f32
    %387 = vector.broadcast %cst_200 : f32 to vector<16x1xf32>
    %388 = arith.mulf %384, %387 : vector<16x1xf32>
    %389 = arith.mulf %386, %386 : vector<16x1xf32>
    %390 = arith.subf %388, %389 : vector<16x1xf32>
    %cst_201 = arith.constant 0.000000e+00 : f32
    %391 = vector.broadcast %cst_201 : f32 to vector<16x1xf32>
    %392 = arith.maximumf %390, %391 : vector<16x1xf32>
    %cst_202 = arith.constant 9.99999974E-6 : f32
    %393 = vector.broadcast %cst_202 : f32 to vector<16x1xf32>
    %394 = arith.addf %392, %393 : vector<16x1xf32>
    %395 = math.rsqrt %394 : vector<16x1xf32>
    %396 = arith.mulf %2, %395 : vector<16x1xf32>
    %397 = arith.mulf %386, %396 : vector<16x1xf32>
    %398 = arith.subf %3, %397 : vector<16x1xf32>
    %cst_203 = arith.constant 0.000000e+00 : f32
    %399 = vector.broadcast %cst_203 : f32 to vector<16x1xf32>
    %cst_204 = arith.constant 0.000000e+00 : f32
    %400 = vector.broadcast %cst_204 : f32 to vector<16x1xf32>
    %c0_205 = arith.constant 0 : index
    %c0_206 = arith.constant 0 : index
    %c0_207 = arith.constant 0 : index
    %401 = vector.load %arg6[%c0_205, %c0_206, %c0_207] : memref<2x16x128xf32, #tpu.memory_space<vmem>>, vector<1x16x128xf32>
    %402 = vector.shape_cast %401 : vector<1x16x128xf32> to vector<16x128xf32>
    %403 = vector.broadcast %396 : vector<16x1xf32> to vector<16x128xf32>
    %404 = arith.mulf %402, %403 : vector<16x128xf32>
    %405 = vector.broadcast %398 : vector<16x1xf32> to vector<16x128xf32>
    %406 = arith.addf %404, %405 : vector<16x128xf32>
    %cst_208 = arith.constant dense<0.000000e+00> : vector<16xf32>
    %407 = vector.multi_reduction <add>, %406, %cst_208 [1] : vector<16x128xf32> to vector<16xf32>
    %408 = vector.shape_cast %407 : vector<16xf32> to vector<16x1xf32>
    %cst_209 = arith.constant 7.812500e-03 : f32
    %409 = vector.broadcast %cst_209 : f32 to vector<16x1xf32>
    %410 = arith.mulf %408, %409 : vector<16x1xf32>
    %cst_210 = arith.constant dense<0.000000e+00> : vector<8x1xf32>
    %411 = tpu.matmul %7, %410, %cst_210 {dimension_numbers = #tpu.dot_dimension_numbers<[1], [0], [0], [1], [0, 0, 1, 1], [], []>} : vector<8x16xf32>, vector<16x1xf32>, vector<8x1xf32> -> vector<8x1xf32>
    %cst_211 = arith.constant 0.000000e+00 : f32
    %412 = vector.broadcast %cst_211 : f32 to vector<8x1xf32>
    %413 = arith.maximumf %411, %412 : vector<8x1xf32>
    %cst_212 = arith.constant dense<0.000000e+00> : vector<16x1xf32>
    %414 = tpu.matmul %8, %413, %cst_212 {dimension_numbers = #tpu.dot_dimension_numbers<[1], [0], [0], [1], [0, 0, 1, 1], [], []>} : vector<16x8xf32>, vector<8x1xf32>, vector<16x1xf32> -> vector<16x1xf32>
    %415 = arith.negf %414 : vector<16x1xf32>
    %416 = math.exp %415 : vector<16x1xf32>
    %cst_213 = arith.constant 1.000000e+00 : f32
    %417 = vector.broadcast %cst_213 : f32 to vector<16x1xf32>
    %418 = arith.addf %417, %416 : vector<16x1xf32>
    %419 = arith.divf %417, %418 : vector<16x1xf32>
    %420 = vector.broadcast %419 : vector<16x1xf32> to vector<16x128xf32>
    %421 = arith.mulf %406, %420 : vector<16x128xf32>
    %c0_214 = arith.constant 0 : index
    %c0_215 = arith.constant 0 : index
    %c0_216 = arith.constant 0 : index
    %422 = vector.load %arg0[%c0_214, %c0_215, %c0_216] : memref<2x16x128xf32, #tpu.memory_space<vmem>>, vector<1x16x128xf32>
    %423 = vector.shape_cast %422 : vector<1x16x128xf32> to vector<16x128xf32>
    %424 = arith.addf %421, %423 : vector<16x128xf32>
    %cst_217 = arith.constant 0.000000e+00 : f32
    %425 = vector.broadcast %cst_217 : f32 to vector<16x128xf32>
    %426 = arith.maximumf %424, %425 : vector<16x128xf32>
    %427 = arith.truncf %426 : vector<16x128xf32> to vector<16x128xbf16>
    %c0_218 = arith.constant 0 : index
    %c64_219 = arith.constant 64 : index
    %428 = vector.load %arg8[%c0_218, %c64_219] : memref<16x256xbf16, #tpu.memory_space<vmem>>, vector<16x128xbf16>
    tpu.vector_store %arg8[%c0_218, %c64_219], %427 {strides = array<i32>} : memref<16x256xbf16, #tpu.memory_space<vmem>>, vector<16x128xbf16>,
    %c0_220 = arith.constant 0 : index
    %c0_221 = arith.constant 0 : index
    %429 = vector.load %arg8[%c0_220, %c0_221] : memref<16x256xbf16, #tpu.memory_space<vmem>>, vector<16x128xbf16>
    %c0_222 = arith.constant 0 : index
    %c0_223 = arith.constant 0 : index
    %430 = vector.load %arg9[%c0_222, %c0_223] : memref<144x128xbf16, #tpu.memory_space<vmem>>, vector<16x128xbf16>
    tpu.vector_store %arg9[%c0_222, %c0_223], %429 {strides = array<i32>} : memref<144x128xbf16, #tpu.memory_space<vmem>>, vector<16x128xbf16>,
    %c0_224 = arith.constant 0 : index
    %c16_225 = arith.constant 16 : index
    %431 = vector.load %arg8[%c0_224, %c16_225] : memref<16x256xbf16, #tpu.memory_space<vmem>>, vector<16x128xbf16>
    %c16_226 = arith.constant 16 : index
    %c0_227 = arith.constant 0 : index
    %432 = vector.load %arg9[%c16_226, %c0_227] : memref<144x128xbf16, #tpu.memory_space<vmem>>, vector<16x128xbf16>
    tpu.vector_store %arg9[%c16_226, %c0_227], %431 {strides = array<i32>} : memref<144x128xbf16, #tpu.memory_space<vmem>>, vector<16x128xbf16>,
    %c0_228 = arith.constant 0 : index
    %c32_229 = arith.constant 32 : index
    %433 = vector.load %arg8[%c0_228, %c32_229] : memref<16x256xbf16, #tpu.memory_space<vmem>>, vector<16x128xbf16>
    %c32_230 = arith.constant 32 : index
    %c0_231 = arith.constant 0 : index
    %434 = vector.load %arg9[%c32_230, %c0_231] : memref<144x128xbf16, #tpu.memory_space<vmem>>, vector<16x128xbf16>
    tpu.vector_store %arg9[%c32_230, %c0_231], %433 {strides = array<i32>} : memref<144x128xbf16, #tpu.memory_space<vmem>>, vector<16x128xbf16>,
    %c0_232 = arith.constant 0 : index
    %c48_233 = arith.constant 48 : index
    %435 = vector.load %arg8[%c0_232, %c48_233] : memref<16x256xbf16, #tpu.memory_space<vmem>>, vector<16x128xbf16>
    %c48_234 = arith.constant 48 : index
    %c0_235 = arith.constant 0 : index
    %436 = vector.load %arg9[%c48_234, %c0_235] : memref<144x128xbf16, #tpu.memory_space<vmem>>, vector<16x128xbf16>
    tpu.vector_store %arg9[%c48_234, %c0_235], %435 {strides = array<i32>} : memref<144x128xbf16, #tpu.memory_space<vmem>>, vector<16x128xbf16>,
    %c0_236 = arith.constant 0 : index
    %c64_237 = arith.constant 64 : index
    %437 = vector.load %arg8[%c0_236, %c64_237] : memref<16x256xbf16, #tpu.memory_space<vmem>>, vector<16x128xbf16>
    %c64_238 = arith.constant 64 : index
    %c0_239 = arith.constant 0 : index
    %438 = vector.load %arg9[%c64_238, %c0_239] : memref<144x128xbf16, #tpu.memory_space<vmem>>, vector<16x128xbf16>
    tpu.vector_store %arg9[%c64_238, %c0_239], %437 {strides = array<i32>} : memref<144x128xbf16, #tpu.memory_space<vmem>>, vector<16x128xbf16>,
    %c0_240 = arith.constant 0 : index
    %c80_241 = arith.constant 80 : index
    %439 = vector.load %arg8[%c0_240, %c80_241] : memref<16x256xbf16, #tpu.memory_space<vmem>>, vector<16x128xbf16>
    %c80_242 = arith.constant 80 : index
    %c0_243 = arith.constant 0 : index
    %440 = vector.load %arg9[%c80_242, %c0_243] : memref<144x128xbf16, #tpu.memory_space<vmem>>, vector<16x128xbf16>
    tpu.vector_store %arg9[%c80_242, %c0_243], %439 {strides = array<i32>} : memref<144x128xbf16, #tpu.memory_space<vmem>>, vector<16x128xbf16>,
    %c0_244 = arith.constant 0 : index
    %c96_245 = arith.constant 96 : index
    %441 = vector.load %arg8[%c0_244, %c96_245] : memref<16x256xbf16, #tpu.memory_space<vmem>>, vector<16x128xbf16>
    %c96_246 = arith.constant 96 : index
    %c0_247 = arith.constant 0 : index
    %442 = vector.load %arg9[%c96_246, %c0_247] : memref<144x128xbf16, #tpu.memory_space<vmem>>, vector<16x128xbf16>
    tpu.vector_store %arg9[%c96_246, %c0_247], %441 {strides = array<i32>} : memref<144x128xbf16, #tpu.memory_space<vmem>>, vector<16x128xbf16>,
    %c0_248 = arith.constant 0 : index
    %c112_249 = arith.constant 112 : index
    %443 = vector.load %arg8[%c0_248, %c112_249] : memref<16x256xbf16, #tpu.memory_space<vmem>>, vector<16x128xbf16>
    %c112_250 = arith.constant 112 : index
    %c0_251 = arith.constant 0 : index
    %444 = vector.load %arg9[%c112_250, %c0_251] : memref<144x128xbf16, #tpu.memory_space<vmem>>, vector<16x128xbf16>
    tpu.vector_store %arg9[%c112_250, %c0_251], %443 {strides = array<i32>} : memref<144x128xbf16, #tpu.memory_space<vmem>>, vector<16x128xbf16>,
    %c0_252 = arith.constant 0 : index
    %c128 = arith.constant 128 : index
    %445 = vector.load %arg8[%c0_252, %c128] : memref<16x256xbf16, #tpu.memory_space<vmem>>, vector<16x128xbf16>
    %c128_253 = arith.constant 128 : index
    %c0_254 = arith.constant 0 : index
    %446 = vector.load %arg9[%c128_253, %c0_254] : memref<144x128xbf16, #tpu.memory_space<vmem>>, vector<16x128xbf16>
    tpu.vector_store %arg9[%c128_253, %c0_254], %445 {strides = array<i32>} : memref<144x128xbf16, #tpu.memory_space<vmem>>, vector<16x128xbf16>,
    %c0_255 = arith.constant 0 : index
    %c0_256 = arith.constant 0 : index
    %447 = vector.load %arg9[%c0_255, %c0_256] : memref<144x128xbf16, #tpu.memory_space<vmem>>, vector<144x128xbf16>
    %cst_257 = arith.constant dense<0.000000e+00> : vector<32x128xf32>
    %448 = tpu.matmul %12, %447, %cst_257 {dimension_numbers = #tpu.dot_dimension_numbers<[1], [0], [0], [1], [0, 0, 1, 1], [], []>} : vector<32x144xbf16>, vector<144x128xbf16>, vector<32x128xf32> -> vector<32x128xf32>
    %449 = vector.broadcast %6 : vector<32x1xf32> to vector<32x128xf32>
    %450 = arith.addf %448, %449 : vector<32x128xf32>
    %451 = vector.extract_strided_slice %450 {offsets = [0, 0], sizes = [16, 128], strides = [1, 1]} : vector<32x128xf32> to vector<16x128xf32>
    %452 = vector.extract_strided_slice %450 {offsets = [16, 0], sizes = [16, 128], strides = [1, 1]} : vector<32x128xf32> to vector<16x128xf32>
    %453 = arith.negf %452 : vector<16x128xf32>
    %454 = math.exp %453 : vector<16x128xf32>
    %cst_258 = arith.constant 1.000000e+00 : f32
    %455 = vector.broadcast %cst_258 : f32 to vector<16x128xf32>
    %456 = arith.addf %455, %454 : vector<16x128xf32>
    %457 = arith.divf %455, %456 : vector<16x128xf32>
    %458 = arith.mulf %451, %457 : vector<16x128xf32>
    %c0_259 = arith.constant 0 : index
    %c0_260 = arith.constant 0 : index
    %c0_261 = arith.constant 0 : index
    %459 = vector.load %arg7[%c0_259, %c0_260, %c0_261] : memref<2x16x128xf32, #tpu.memory_space<vmem>>, vector<1x16x128xf32>
    %460 = vector.shape_cast %459 : vector<1x16x128xf32> to vector<16x128xf32>
    %461 = vector.shape_cast %458 : vector<16x128xf32> to vector<1x16x128xf32>
    tpu.vector_store %arg7[%c0_259, %c0_260, %c0_261], %461 {strides = array<i32>} : memref<2x16x128xf32, #tpu.memory_space<vmem>>, vector<1x16x128xf32>,
    %cst_262 = arith.constant dense<0.000000e+00> : vector<16xf32>
    %462 = vector.multi_reduction <add>, %458, %cst_262 [1] : vector<16x128xf32> to vector<16xf32>
    %463 = vector.shape_cast %462 : vector<16xf32> to vector<16x1xf32>
    %464 = arith.addf %399, %463 : vector<16x1xf32>
    %465 = arith.mulf %458, %458 : vector<16x128xf32>
    %cst_263 = arith.constant dense<0.000000e+00> : vector<16xf32>
    %466 = vector.multi_reduction <add>, %465, %cst_263 [1] : vector<16x128xf32> to vector<16xf32>
    %467 = vector.shape_cast %466 : vector<16xf32> to vector<16x1xf32>
    %468 = arith.addf %400, %467 : vector<16x1xf32>
    %c1_264 = arith.constant 1 : index
    %c0_265 = arith.constant 0 : index
    %c0_266 = arith.constant 0 : index
    %469 = vector.load %arg6[%c1_264, %c0_265, %c0_266] : memref<2x16x128xf32, #tpu.memory_space<vmem>>, vector<1x16x128xf32>
    %470 = vector.shape_cast %469 : vector<1x16x128xf32> to vector<16x128xf32>
    %471 = vector.broadcast %396 : vector<16x1xf32> to vector<16x128xf32>
    %472 = arith.mulf %470, %471 : vector<16x128xf32>
    %473 = vector.broadcast %398 : vector<16x1xf32> to vector<16x128xf32>
    %474 = arith.addf %472, %473 : vector<16x128xf32>
    %cst_267 = arith.constant dense<0.000000e+00> : vector<16xf32>
    %475 = vector.multi_reduction <add>, %474, %cst_267 [1] : vector<16x128xf32> to vector<16xf32>
    %476 = vector.shape_cast %475 : vector<16xf32> to vector<16x1xf32>
    %cst_268 = arith.constant 7.812500e-03 : f32
    %477 = vector.broadcast %cst_268 : f32 to vector<16x1xf32>
    %478 = arith.mulf %476, %477 : vector<16x1xf32>
    %cst_269 = arith.constant dense<0.000000e+00> : vector<8x1xf32>
    %479 = tpu.matmul %7, %478, %cst_269 {dimension_numbers = #tpu.dot_dimension_numbers<[1], [0], [0], [1], [0, 0, 1, 1], [], []>} : vector<8x16xf32>, vector<16x1xf32>, vector<8x1xf32> -> vector<8x1xf32>
    %cst_270 = arith.constant 0.000000e+00 : f32
    %480 = vector.broadcast %cst_270 : f32 to vector<8x1xf32>
    %481 = arith.maximumf %479, %480 : vector<8x1xf32>
    %cst_271 = arith.constant dense<0.000000e+00> : vector<16x1xf32>
    %482 = tpu.matmul %8, %481, %cst_271 {dimension_numbers = #tpu.dot_dimension_numbers<[1], [0], [0], [1], [0, 0, 1, 1], [], []>} : vector<16x8xf32>, vector<8x1xf32>, vector<16x1xf32> -> vector<16x1xf32>
    %483 = arith.negf %482 : vector<16x1xf32>
    %484 = math.exp %483 : vector<16x1xf32>
    %cst_272 = arith.constant 1.000000e+00 : f32
    %485 = vector.broadcast %cst_272 : f32 to vector<16x1xf32>
    %486 = arith.addf %485, %484 : vector<16x1xf32>
    %487 = arith.divf %485, %486 : vector<16x1xf32>
    %488 = vector.broadcast %487 : vector<16x1xf32> to vector<16x128xf32>
    %489 = arith.mulf %474, %488 : vector<16x128xf32>
    %c1_273 = arith.constant 1 : index
    %c0_274 = arith.constant 0 : index
    %c0_275 = arith.constant 0 : index
    %490 = vector.load %arg0[%c1_273, %c0_274, %c0_275] : memref<2x16x128xf32, #tpu.memory_space<vmem>>, vector<1x16x128xf32>
    %491 = vector.shape_cast %490 : vector<1x16x128xf32> to vector<16x128xf32>
    %492 = arith.addf %489, %491 : vector<16x128xf32>
    %cst_276 = arith.constant 0.000000e+00 : f32
    %493 = vector.broadcast %cst_276 : f32 to vector<16x128xf32>
    %494 = arith.maximumf %492, %493 : vector<16x128xf32>
    %495 = arith.truncf %494 : vector<16x128xf32> to vector<16x128xbf16>
    %c0_277 = arith.constant 0 : index
    %c64_278 = arith.constant 64 : index
    %496 = vector.load %arg8[%c0_277, %c64_278] : memref<16x256xbf16, #tpu.memory_space<vmem>>, vector<16x128xbf16>
    tpu.vector_store %arg8[%c0_277, %c64_278], %495 {strides = array<i32>} : memref<16x256xbf16, #tpu.memory_space<vmem>>, vector<16x128xbf16>,
    %c0_279 = arith.constant 0 : index
    %c0_280 = arith.constant 0 : index
    %497 = vector.load %arg8[%c0_279, %c0_280] : memref<16x256xbf16, #tpu.memory_space<vmem>>, vector<16x128xbf16>
    %c0_281 = arith.constant 0 : index
    %c0_282 = arith.constant 0 : index
    %498 = vector.load %arg9[%c0_281, %c0_282] : memref<144x128xbf16, #tpu.memory_space<vmem>>, vector<16x128xbf16>
    tpu.vector_store %arg9[%c0_281, %c0_282], %497 {strides = array<i32>} : memref<144x128xbf16, #tpu.memory_space<vmem>>, vector<16x128xbf16>,
    %c0_283 = arith.constant 0 : index
    %c16_284 = arith.constant 16 : index
    %499 = vector.load %arg8[%c0_283, %c16_284] : memref<16x256xbf16, #tpu.memory_space<vmem>>, vector<16x128xbf16>
    %c16_285 = arith.constant 16 : index
    %c0_286 = arith.constant 0 : index
    %500 = vector.load %arg9[%c16_285, %c0_286] : memref<144x128xbf16, #tpu.memory_space<vmem>>, vector<16x128xbf16>
    tpu.vector_store %arg9[%c16_285, %c0_286], %499 {strides = array<i32>} : memref<144x128xbf16, #tpu.memory_space<vmem>>, vector<16x128xbf16>,
    %c0_287 = arith.constant 0 : index
    %c32_288 = arith.constant 32 : index
    %501 = vector.load %arg8[%c0_287, %c32_288] : memref<16x256xbf16, #tpu.memory_space<vmem>>, vector<16x128xbf16>
    %c32_289 = arith.constant 32 : index
    %c0_290 = arith.constant 0 : index
    %502 = vector.load %arg9[%c32_289, %c0_290] : memref<144x128xbf16, #tpu.memory_space<vmem>>, vector<16x128xbf16>
    tpu.vector_store %arg9[%c32_289, %c0_290], %501 {strides = array<i32>} : memref<144x128xbf16, #tpu.memory_space<vmem>>, vector<16x128xbf16>,
    %c0_291 = arith.constant 0 : index
    %c48_292 = arith.constant 48 : index
    %503 = vector.load %arg8[%c0_291, %c48_292] : memref<16x256xbf16, #tpu.memory_space<vmem>>, vector<16x128xbf16>
    %c48_293 = arith.constant 48 : index
    %c0_294 = arith.constant 0 : index
    %504 = vector.load %arg9[%c48_293, %c0_294] : memref<144x128xbf16, #tpu.memory_space<vmem>>, vector<16x128xbf16>
    tpu.vector_store %arg9[%c48_293, %c0_294], %503 {strides = array<i32>} : memref<144x128xbf16, #tpu.memory_space<vmem>>, vector<16x128xbf16>,
    %c0_295 = arith.constant 0 : index
    %c64_296 = arith.constant 64 : index
    %505 = vector.load %arg8[%c0_295, %c64_296] : memref<16x256xbf16, #tpu.memory_space<vmem>>, vector<16x128xbf16>
    %c64_297 = arith.constant 64 : index
    %c0_298 = arith.constant 0 : index
    %506 = vector.load %arg9[%c64_297, %c0_298] : memref<144x128xbf16, #tpu.memory_space<vmem>>, vector<16x128xbf16>
    tpu.vector_store %arg9[%c64_297, %c0_298], %505 {strides = array<i32>} : memref<144x128xbf16, #tpu.memory_space<vmem>>, vector<16x128xbf16>,
    %c0_299 = arith.constant 0 : index
    %c80_300 = arith.constant 80 : index
    %507 = vector.load %arg8[%c0_299, %c80_300] : memref<16x256xbf16, #tpu.memory_space<vmem>>, vector<16x128xbf16>
    %c80_301 = arith.constant 80 : index
    %c0_302 = arith.constant 0 : index
    %508 = vector.load %arg9[%c80_301, %c0_302] : memref<144x128xbf16, #tpu.memory_space<vmem>>, vector<16x128xbf16>
    tpu.vector_store %arg9[%c80_301, %c0_302], %507 {strides = array<i32>} : memref<144x128xbf16, #tpu.memory_space<vmem>>, vector<16x128xbf16>,
    %c0_303 = arith.constant 0 : index
    %c96_304 = arith.constant 96 : index
    %509 = vector.load %arg8[%c0_303, %c96_304] : memref<16x256xbf16, #tpu.memory_space<vmem>>, vector<16x128xbf16>
    %c96_305 = arith.constant 96 : index
    %c0_306 = arith.constant 0 : index
    %510 = vector.load %arg9[%c96_305, %c0_306] : memref<144x128xbf16, #tpu.memory_space<vmem>>, vector<16x128xbf16>
    tpu.vector_store %arg9[%c96_305, %c0_306], %509 {strides = array<i32>} : memref<144x128xbf16, #tpu.memory_space<vmem>>, vector<16x128xbf16>,
    %c0_307 = arith.constant 0 : index
    %c112_308 = arith.constant 112 : index
    %511 = vector.load %arg8[%c0_307, %c112_308] : memref<16x256xbf16, #tpu.memory_space<vmem>>, vector<16x128xbf16>
    %c112_309 = arith.constant 112 : index
    %c0_310 = arith.constant 0 : index
    %512 = vector.load %arg9[%c112_309, %c0_310] : memref<144x128xbf16, #tpu.memory_space<vmem>>, vector<16x128xbf16>
    tpu.vector_store %arg9[%c112_309, %c0_310], %511 {strides = array<i32>} : memref<144x128xbf16, #tpu.memory_space<vmem>>, vector<16x128xbf16>,
    %c0_311 = arith.constant 0 : index
    %c128_312 = arith.constant 128 : index
    %513 = vector.load %arg8[%c0_311, %c128_312] : memref<16x256xbf16, #tpu.memory_space<vmem>>, vector<16x128xbf16>
    %c128_313 = arith.constant 128 : index
    %c0_314 = arith.constant 0 : index
    %514 = vector.load %arg9[%c128_313, %c0_314] : memref<144x128xbf16, #tpu.memory_space<vmem>>, vector<16x128xbf16>
    tpu.vector_store %arg9[%c128_313, %c0_314], %513 {strides = array<i32>} : memref<144x128xbf16, #tpu.memory_space<vmem>>, vector<16x128xbf16>,
    %c0_315 = arith.constant 0 : index
    %c0_316 = arith.constant 0 : index
    %515 = vector.load %arg9[%c0_315, %c0_316] : memref<144x128xbf16, #tpu.memory_space<vmem>>, vector<144x128xbf16>
    %cst_317 = arith.constant dense<0.000000e+00> : vector<32x128xf32>
    %516 = tpu.matmul %12, %515, %cst_317 {dimension_numbers = #tpu.dot_dimension_numbers<[1], [0], [0], [1], [0, 0, 1, 1], [], []>} : vector<32x144xbf16>, vector<144x128xbf16>, vector<32x128xf32> -> vector<32x128xf32>
    %517 = vector.broadcast %6 : vector<32x1xf32> to vector<32x128xf32>
    %518 = arith.addf %516, %517 : vector<32x128xf32>
    %519 = vector.extract_strided_slice %518 {offsets = [0, 0], sizes = [16, 128], strides = [1, 1]} : vector<32x128xf32> to vector<16x128xf32>
    %520 = vector.extract_strided_slice %518 {offsets = [16, 0], sizes = [16, 128], strides = [1, 1]} : vector<32x128xf32> to vector<16x128xf32>
    %521 = arith.negf %520 : vector<16x128xf32>
    %522 = math.exp %521 : vector<16x128xf32>
    %cst_318 = arith.constant 1.000000e+00 : f32
    %523 = vector.broadcast %cst_318 : f32 to vector<16x128xf32>
    %524 = arith.addf %523, %522 : vector<16x128xf32>
    %525 = arith.divf %523, %524 : vector<16x128xf32>
    %526 = arith.mulf %519, %525 : vector<16x128xf32>
    %c1_319 = arith.constant 1 : index
    %c0_320 = arith.constant 0 : index
    %c0_321 = arith.constant 0 : index
    %527 = vector.load %arg7[%c1_319, %c0_320, %c0_321] : memref<2x16x128xf32, #tpu.memory_space<vmem>>, vector<1x16x128xf32>
    %528 = vector.shape_cast %527 : vector<1x16x128xf32> to vector<16x128xf32>
    %529 = vector.shape_cast %526 : vector<16x128xf32> to vector<1x16x128xf32>
    tpu.vector_store %arg7[%c1_319, %c0_320, %c0_321], %529 {strides = array<i32>} : memref<2x16x128xf32, #tpu.memory_space<vmem>>, vector<1x16x128xf32>,
    %cst_322 = arith.constant dense<0.000000e+00> : vector<16xf32>
    %530 = vector.multi_reduction <add>, %526, %cst_322 [1] : vector<16x128xf32> to vector<16xf32>
    %531 = vector.shape_cast %530 : vector<16xf32> to vector<16x1xf32>
    %532 = arith.addf %464, %531 : vector<16x1xf32>
    %533 = arith.mulf %526, %526 : vector<16x128xf32>
    %cst_323 = arith.constant dense<0.000000e+00> : vector<16xf32>
    %534 = vector.multi_reduction <add>, %533, %cst_323 [1] : vector<16x128xf32> to vector<16xf32>
    %535 = vector.shape_cast %534 : vector<16xf32> to vector<16x1xf32>
    %536 = arith.addf %468, %535 : vector<16x1xf32>
    %cst_324 = arith.constant 3.906250e-03 : f32
    %537 = vector.broadcast %cst_324 : f32 to vector<16x1xf32>
    %538 = arith.mulf %532, %537 : vector<16x1xf32>
    %cst_325 = arith.constant 3.906250e-03 : f32
    %539 = vector.broadcast %cst_325 : f32 to vector<16x1xf32>
    %540 = arith.mulf %536, %539 : vector<16x1xf32>
    %541 = arith.mulf %538, %538 : vector<16x1xf32>
    %542 = arith.subf %540, %541 : vector<16x1xf32>
    %cst_326 = arith.constant 0.000000e+00 : f32
    %543 = vector.broadcast %cst_326 : f32 to vector<16x1xf32>
    %544 = arith.maximumf %542, %543 : vector<16x1xf32>
    %cst_327 = arith.constant 9.99999974E-6 : f32
    %545 = vector.broadcast %cst_327 : f32 to vector<16x1xf32>
    %546 = arith.addf %544, %545 : vector<16x1xf32>
    %547 = math.rsqrt %546 : vector<16x1xf32>
    %548 = arith.mulf %4, %547 : vector<16x1xf32>
    %549 = arith.mulf %538, %548 : vector<16x1xf32>
    %550 = arith.subf %5, %549 : vector<16x1xf32>
    %c0_328 = arith.constant 0 : index
    %c0_329 = arith.constant 0 : index
    %c0_330 = arith.constant 0 : index
    %551 = vector.load %arg7[%c0_328, %c0_329, %c0_330] : memref<2x16x128xf32, #tpu.memory_space<vmem>>, vector<1x16x128xf32>
    %552 = vector.shape_cast %551 : vector<1x16x128xf32> to vector<16x128xf32>
    %553 = vector.broadcast %548 : vector<16x1xf32> to vector<16x128xf32>
    %554 = arith.mulf %552, %553 : vector<16x128xf32>
    %555 = vector.broadcast %550 : vector<16x1xf32> to vector<16x128xf32>
    %556 = arith.addf %554, %555 : vector<16x128xf32>
    %cst_331 = arith.constant dense<0.000000e+00> : vector<16xf32>
    %557 = vector.multi_reduction <add>, %556, %cst_331 [1] : vector<16x128xf32> to vector<16xf32>
    %558 = vector.shape_cast %557 : vector<16xf32> to vector<16x1xf32>
    %cst_332 = arith.constant 7.812500e-03 : f32
    %559 = vector.broadcast %cst_332 : f32 to vector<16x1xf32>
    %560 = arith.mulf %558, %559 : vector<16x1xf32>
    %cst_333 = arith.constant dense<0.000000e+00> : vector<8x1xf32>
    %561 = tpu.matmul %9, %560, %cst_333 {dimension_numbers = #tpu.dot_dimension_numbers<[1], [0], [0], [1], [0, 0, 1, 1], [], []>} : vector<8x16xf32>, vector<16x1xf32>, vector<8x1xf32> -> vector<8x1xf32>
    %cst_334 = arith.constant 0.000000e+00 : f32
    %562 = vector.broadcast %cst_334 : f32 to vector<8x1xf32>
    %563 = arith.maximumf %561, %562 : vector<8x1xf32>
    %cst_335 = arith.constant dense<0.000000e+00> : vector<16x1xf32>
    %564 = tpu.matmul %10, %563, %cst_335 {dimension_numbers = #tpu.dot_dimension_numbers<[1], [0], [0], [1], [0, 0, 1, 1], [], []>} : vector<16x8xf32>, vector<8x1xf32>, vector<16x1xf32> -> vector<16x1xf32>
    %565 = arith.negf %564 : vector<16x1xf32>
    %566 = math.exp %565 : vector<16x1xf32>
    %cst_336 = arith.constant 1.000000e+00 : f32
    %567 = vector.broadcast %cst_336 : f32 to vector<16x1xf32>
    %568 = arith.addf %567, %566 : vector<16x1xf32>
    %569 = arith.divf %567, %568 : vector<16x1xf32>
    %570 = vector.broadcast %569 : vector<16x1xf32> to vector<16x128xf32>
    %571 = arith.mulf %556, %570 : vector<16x128xf32>
    %c0_337 = arith.constant 0 : index
    %c0_338 = arith.constant 0 : index
    %c0_339 = arith.constant 0 : index
    %572 = vector.load %arg0[%c0_337, %c0_338, %c0_339] : memref<2x16x128xf32, #tpu.memory_space<vmem>>, vector<1x16x128xf32>
    %573 = vector.shape_cast %572 : vector<1x16x128xf32> to vector<16x128xf32>
    %574 = arith.addf %571, %573 : vector<16x128xf32>
    %cst_340 = arith.constant 0.000000e+00 : f32
    %575 = vector.broadcast %cst_340 : f32 to vector<16x128xf32>
    %576 = arith.maximumf %574, %575 : vector<16x128xf32>
    %c0_341 = arith.constant 0 : index
    %c0_342 = arith.constant 0 : index
    %c0_343 = arith.constant 0 : index
    %577 = vector.load %arg5[%c0_341, %c0_342, %c0_343] : memref<2x16x128xf32, #tpu.memory_space<vmem>>, vector<1x16x128xf32>
    %578 = vector.shape_cast %577 : vector<1x16x128xf32> to vector<16x128xf32>
    %579 = vector.shape_cast %576 : vector<16x128xf32> to vector<1x16x128xf32>
    tpu.vector_store %arg5[%c0_341, %c0_342, %c0_343], %579 {strides = array<i32>} : memref<2x16x128xf32, #tpu.memory_space<vmem>>, vector<1x16x128xf32>,
    %c1_344 = arith.constant 1 : index
    %c0_345 = arith.constant 0 : index
    %c0_346 = arith.constant 0 : index
    %580 = vector.load %arg7[%c1_344, %c0_345, %c0_346] : memref<2x16x128xf32, #tpu.memory_space<vmem>>, vector<1x16x128xf32>
    %581 = vector.shape_cast %580 : vector<1x16x128xf32> to vector<16x128xf32>
    %582 = vector.broadcast %548 : vector<16x1xf32> to vector<16x128xf32>
    %583 = arith.mulf %581, %582 : vector<16x128xf32>
    %584 = vector.broadcast %550 : vector<16x1xf32> to vector<16x128xf32>
    %585 = arith.addf %583, %584 : vector<16x128xf32>
    %cst_347 = arith.constant dense<0.000000e+00> : vector<16xf32>
    %586 = vector.multi_reduction <add>, %585, %cst_347 [1] : vector<16x128xf32> to vector<16xf32>
    %587 = vector.shape_cast %586 : vector<16xf32> to vector<16x1xf32>
    %cst_348 = arith.constant 7.812500e-03 : f32
    %588 = vector.broadcast %cst_348 : f32 to vector<16x1xf32>
    %589 = arith.mulf %587, %588 : vector<16x1xf32>
    %cst_349 = arith.constant dense<0.000000e+00> : vector<8x1xf32>
    %590 = tpu.matmul %9, %589, %cst_349 {dimension_numbers = #tpu.dot_dimension_numbers<[1], [0], [0], [1], [0, 0, 1, 1], [], []>} : vector<8x16xf32>, vector<16x1xf32>, vector<8x1xf32> -> vector<8x1xf32>
    %cst_350 = arith.constant 0.000000e+00 : f32
    %591 = vector.broadcast %cst_350 : f32 to vector<8x1xf32>
    %592 = arith.maximumf %590, %591 : vector<8x1xf32>
    %cst_351 = arith.constant dense<0.000000e+00> : vector<16x1xf32>
    %593 = tpu.matmul %10, %592, %cst_351 {dimension_numbers = #tpu.dot_dimension_numbers<[1], [0], [0], [1], [0, 0, 1, 1], [], []>} : vector<16x8xf32>, vector<8x1xf32>, vector<16x1xf32> -> vector<16x1xf32>
    %594 = arith.negf %593 : vector<16x1xf32>
    %595 = math.exp %594 : vector<16x1xf32>
    %cst_352 = arith.constant 1.000000e+00 : f32
    %596 = vector.broadcast %cst_352 : f32 to vector<16x1xf32>
    %597 = arith.addf %596, %595 : vector<16x1xf32>
    %598 = arith.divf %596, %597 : vector<16x1xf32>
    %599 = vector.broadcast %598 : vector<16x1xf32> to vector<16x128xf32>
    %600 = arith.mulf %585, %599 : vector<16x128xf32>
    %c1_353 = arith.constant 1 : index
    %c0_354 = arith.constant 0 : index
    %c0_355 = arith.constant 0 : index
    %601 = vector.load %arg0[%c1_353, %c0_354, %c0_355] : memref<2x16x128xf32, #tpu.memory_space<vmem>>, vector<1x16x128xf32>
    %602 = vector.shape_cast %601 : vector<1x16x128xf32> to vector<16x128xf32>
    %603 = arith.addf %600, %602 : vector<16x128xf32>
    %cst_356 = arith.constant 0.000000e+00 : f32
    %604 = vector.broadcast %cst_356 : f32 to vector<16x128xf32>
    %605 = arith.maximumf %603, %604 : vector<16x128xf32>
    %c1_357 = arith.constant 1 : index
    %c0_358 = arith.constant 0 : index
    %c0_359 = arith.constant 0 : index
    %606 = vector.load %arg5[%c1_357, %c0_358, %c0_359] : memref<2x16x128xf32, #tpu.memory_space<vmem>>, vector<1x16x128xf32>
    %607 = vector.shape_cast %606 : vector<1x16x128xf32> to vector<16x128xf32>
    %608 = vector.shape_cast %605 : vector<16x128xf32> to vector<1x16x128xf32>
    tpu.vector_store %arg5[%c1_357, %c0_358, %c0_359], %608 {strides = array<i32>} : memref<2x16x128xf32, #tpu.memory_space<vmem>>, vector<1x16x128xf32>,
    return
  }
}

</mosaic_0001>

<llo_original>
// kernel: _lambda_.1
$region0: #{_lambda_.1}
  #allocation0 [shape = 'u32[]', space=smem, size = 0x4, offset = 0x4, fixed_abs, tag = 'smem constant byte address 0x4 - core index']
  #allocation1 [shape = 'u32[72,128]{1,0:T(1,128)}', space=vmem, size = 0x9000, scoped, tag = 'internal scratch']
  #allocation2 [shape = 'f32[2,16,128]{2,1,0:T(8,128)}', space=vmem, size = 0x4000, scoped, tag = 'scratch operand']
  #allocation3 [shape = 'f32[2,16,128]{2,1,0:T(8,128)}', space=vmem, size = 0x4000, scoped, tag = 'scratch operand']
  #allocation4 [shape = 'bf16[16,256]{1,0:T(8,128)(2,1)}', space=vmem, size = 0x2000, scoped, tag = 'scratch operand']
  #allocation5 [shape = 'bf16[144,128]{1,0:T(8,128)(2,1)}', space=vmem, size = 0x9000, scoped, tag = 'scratch operand']
  #allocation6 [shape = 'bf16[128,128]{1,0:T(8,128)(2,1)}', space=vmem, size = 0x8000, scoped, tag = 'scratch operand']
  %s0 = inlined_call_operand.vmem [shape: f32[2,16,128], index: 0, kind: input, shape index: {}]
  %s1 = inlined_call_operand.vmem [shape: bf16[104,16], index: 1, kind: input, shape index: {}]
  %s2 = inlined_call_operand.vmem [shape: bf16[32,144], index: 2, kind: input, shape index: {}]
  %s3 = inlined_call_operand.vmem [shape: f32[104,8], index: 3, kind: input, shape index: {}]
  %s4 = inlined_call_operand.vmem [shape: f32[96,16], index: 4, kind: input, shape index: {}]
  %s5 = inlined_call_operand.vmem [shape: f32[2,16,128], index: 5, kind: output, shape index: {}]
  %s6 = sld [smem:[#allocation0]]
  $region30: #{_lambda_.1} parent=0
    _
  %s8 = ssub.s32 1, %s6
  %s9 = scalar_select 0, %s8, %s6
  // Predicated region
  $region2: #{_lambda_.1} parent=0 // pred_check
    _
  $region3: #{_lambda_.1} parent=0 // pred_check_branch
    %11 = sbr.rel (0) target = $region5
  $region4: #{_lambda_.1} parent=0 // pred_region
    _
  $region5: #{_lambda_.1} parent=0 // pred_fallthru
    _
  // Predicated region
  $region6: #{_lambda_.1} parent=0 // pred_check
    _
  $region7: #{_lambda_.1} parent=0 // pred_check_branch
    %13 = sbr.rel (0) target = $region9
  $region8: #{_lambda_.1} parent=0 // pred_region
    _
  $region9: #{_lambda_.1} parent=0 // pred_fallthru
    _
  // Predicated region
  $region10: #{_lambda_.1} parent=0 // pred_check
    _
  $region11: #{_lambda_.1} parent=0 // pred_check_branch
    %15 = sbr.rel (0) target = $region13
  $region12: #{_lambda_.1} parent=0 // pred_region
    _
  $region13: #{_lambda_.1} parent=0 // pred_fallthru
    _
  // Predicated region
  $region14: #{_lambda_.1} parent=0 // pred_check
    _
  $region15: #{_lambda_.1} parent=0 // pred_check_branch
    %17 = sbr.rel (0) target = $region17
  $region16: #{_lambda_.1} parent=0 // pred_region
    _
  $region17: #{_lambda_.1} parent=0 // pred_fallthru
    _
  // Predicated region
  $region18: #{_lambda_.1} parent=0 // pred_check
    _
  $region19: #{_lambda_.1} parent=0 // pred_check_branch
    %19 = sbr.rel (0) target = $region21
  $region20: #{_lambda_.1} parent=0 // pred_region
    _
  $region21: #{_lambda_.1} parent=0 // pred_fallthru
    _
  %v21 = vld [vmem:[%s3] sm:$0xff]
  %v22 = vld [vmem:[%s3 + $0x8] sm:$0xff]
  %v23 = vld [vmem:[%s3 + $0x10] sm:$0xff]
  %v24 = vld [vmem:[%s3 + $0x18] sm:$0xff]
  %v25 = vld [vmem:[%s3 + $0x20] sm:$0xff]
  %v26 = vld [vmem:[%s3 + $0x28] sm:$0xff]
  %v27 = vld [vmem:[%s3 + $0x30] sm:$0xff]
  %v28 = vld [vmem:[%s3 + $0x38] sm:$0xff]
  %v29 = vld [vmem:[%s3 + $0x40] sm:$0xff]
  %v30 = vld [vmem:[%s3 + $0x48] sm:$0xff]
  %v31 = vld [vmem:[%s3 + $0x50] sm:$0xff]
  %v32 = vld [vmem:[%s3 + $0x58] sm:$0xff]
  %v33 = vld [vmem:[%s3 + $0x60] sm:$0xff]
  %v34 = vld [vmem:[%s4 + $0x30] sm:$0xff]
  %v35 = vld [vmem:[%s4 + $0x38] sm:$0xff]
  %v36 = vld [vmem:[%s4 + $0x40] sm:$0xff]
  %v37 = vld [vmem:[%s4 + $0x48] sm:$0xff]
  %v38 = vld [vmem:[%s4 + $0x50] sm:$0xff]
  %v39 = vld [vmem:[%s4 + $0x58] sm:$0xff]
  %v40 = vld [vmem:[%s1] sm:$0xf]
  %v41 = vld [vmem:[%s1 + $0x4] sm:$0xf]
  %v42 = vld [vmem:[%s1 + $0x8] sm:$0xf]
  %v43 = vld [vmem:[%s1 + $0xc] sm:$0xf]
  %v44 = vld [vmem:[%s1 + $0x10] sm:$0xf]
  %v45 = vld [vmem:[%s1 + $0x14] sm:$0xf]
  %v46 = vld [vmem:[%s1 + $0x18] sm:$0xf]
  %v47 = vld [vmem:[%s1 + $0x1c] sm:$0xf]
  %v48 = vld [vmem:[%s1 + $0x20] sm:$0xf]
  %v49 = vld [vmem:[%s1 + $0x24] sm:$0xf]
  %v50 = vld [vmem:[%s1 + $0x28] sm:$0xf]
  %v51 = vld [vmem:[%s1 + $0x2c] sm:$0xf]
  %v52 = vld [vmem:[%s1 + $0x30] sm:$0xf]
  %v53 = vld [vmem:[%s2] sm:$0xff]
  %v54 = vld [vmem:[%s2 + $0x8] sm:$0xff]
  %v55 = vld [vmem:[%s2 + $0x10] sm:$0xff]
  %v56 = vld [vmem:[%s2 + $0x18] sm:$0xff]
  %57 = vst [vmem:[#allocation4] sm:$0xff] 0
  %58 = vst [vmem:[#allocation4 + $0x8] sm:$0xff] 0
  %59 = vst [vmem:[#allocation6] sm:$0xf] 0
  %60 = vst [vmem:[#allocation6 + $0x4] sm:$0xf] 0
  %61 = vst [vmem:[#allocation6 + $0x8] sm:$0xf] 0
  %62 = vst [vmem:[#allocation6 + $0xc] sm:$0xf] 0
  %63 = vst [vmem:[#allocation6 + $0x10] sm:$0xf] 0
  %64 = vst [vmem:[#allocation6 + $0x14] sm:$0xf] 0
  %65 = vst [vmem:[#allocation6 + $0x18] sm:$0xf] 0
  %66 = vst [vmem:[#allocation6 + $0x1c] sm:$0xf] 0
  %67 = vst [vmem:[#allocation6 + $0x20] sm:$0xf] 0
  %68 = vst [vmem:[#allocation6 + $0x24] sm:$0xf] 0
  %69 = vst [vmem:[#allocation6 + $0x28] sm:$0xf] 0
  %70 = vst [vmem:[#allocation6 + $0x2c] sm:$0xf] 0
  %71 = vst [vmem:[#allocation6 + $0x30] sm:$0xf] 0
  %72 = vst [vmem:[#allocation6 + $0x34] sm:$0xf] 0
  %73 = vst [vmem:[#allocation6 + $0x38] sm:$0xf] 0
  %74 = vst [vmem:[#allocation6 + $0x3c] sm:$0xf] 0
  %v75 = vld [vmem:[%s0] sm:$0xff]
  %v76 = vld [vmem:[%s0 + $0x8] sm:$0xff]
  %v77 = vpack.c.bf16 %v76, %v75
  %79 = vset.pattern.permute.xlu0 0
  %80 = vperm.xlu0 %79, %v21
  %v81 = vpop.permute.xlu0 %80
  %84 = vset.pattern.permute.xlu0 0
  %85 = vperm.xlu0 %84, %v22
  %v86 = vpop.permute.xlu0 %85
  %89 = vset.pattern.permute.xlu0 0
  %90 = vperm.xlu0 %89, %v23
  %v91 = vpop.permute.xlu0 %90
  %94 = vset.pattern.permute.xlu0 0
  %95 = vperm.xlu0 %94, %v24
  %v96 = vpop.permute.xlu0 %95
  %99 = vset.pattern.permute.xlu0 0
  %100 = vperm.xlu0 %99, %v25
  %v101 = vpop.permute.xlu0 %100
  %104 = vset.pattern.permute.xlu0 0
  %105 = vperm.xlu0 %104, %v26
  %v106 = vpop.permute.xlu0 %105
  %109 = vset.pattern.permute.xlu0 0
  %110 = vperm.xlu0 %109, %v27
  %v111 = vpop.permute.xlu0 %110
  %114 = vset.pattern.permute.xlu0 0
  %115 = vperm.xlu0 %114, %v28
  %v116 = vpop.permute.xlu0 %115
  %119 = vset.pattern.permute.xlu0 0
  %120 = vperm.xlu0 %119, %v29
  %v121 = vpop.permute.xlu0 %120
  %124 = vset.pattern.permute.xlu0 0
  %125 = vperm.xlu0 %124, %v30
  %v126 = vpop.permute.xlu0 %125
  %129 = vset.pattern.permute.xlu0 0
  %130 = vperm.xlu0 %129, %v31
  %v131 = vpop.permute.xlu0 %130
  %134 = vset.pattern.permute.xlu0 0
  %135 = vperm.xlu0 %134, %v32
  %v136 = vpop.permute.xlu0 %135
  %139 = vset.pattern.permute.xlu0 0
  %140 = vperm.xlu0 %139, %v33
  %v141 = vpop.permute.xlu0 %140
  %v156 = vunpack.c.l.b16 %v40
  %v157 = vunpack.c.l.b16 %v41
  %v158 = vunpack.c.l.b16 %v42
  %v159 = vunpack.c.l.b16 %v43
  %v160 = vunpack.c.l.b16 %v44
  %v161 = vunpack.c.l.b16 %v45
  %v162 = vunpack.c.l.b16 %v46
  %v163 = vunpack.c.l.b16 %v47
  %v164 = vunpack.c.l.b16 %v48
  %v165 = vunpack.c.l.b16 %v49
  %v166 = vunpack.c.l.b16 %v50
  %v167 = vunpack.c.l.b16 %v51
  %v168 = vunpack.c.l.b16 %v52
  %v169 = vpack.c.b16 %v157, %v156
  %v170 = vpack.c.b16 %v159, %v158
  %v171 = vpack.c.b16 %v161, %v160
  %v172 = vpack.c.b16 %v163, %v162
  %v173 = vpack.c.b16 %v165, %v164
  %v174 = vpack.c.b16 %v167, %v166
  %v175 = vpack.c.b16 %v168, %v168
  %vm176 = vcmask 130048
  %v178 = vsel %vm176, %v169, 0
  %v181 = vsel %vm176, %v170, 0
  %v184 = vsel %vm176, %v171, 0
  %v187 = vsel %vm176, %v172, 0
  %v190 = vsel %vm176, %v173, 0
  %v193 = vsel %vm176, %v174, 0
  %v196 = vsel %vm176, %v175, 0
  %198 = vmatpush.bf16.msra.mxu0 0
  %199 = vmatpush.bf16.msra.mxu0 0
  %200 = vmatpush.bf16.msra.mxu0 0
  %201 = vmatpush.bf16.msra.mxu0 0
  %202 = vmatpush.bf16.msra.mxu0 0
  %203 = vmatpush.bf16.msra.mxu0 0
  %204 = vmatpush.bf16.msra.mxu0 0
  %205 = vmatpush.bf16.msra.mxu0 %v77
  %206 = vmatmul.bf16.gmra.mxu0 %v178
  %v207 = vpop.f32.mrf.mxu0
  %v208 = vadd.f32 %v81, %v207
  %v209 = vpop.f32.mrf.mxu0
  %v210 = vadd.f32 %v86, %v209
  %211 = vmatmul.bf16.gmra.mxu0 %v181
  %v212 = vpop.f32.mrf.mxu0
  %v213 = vadd.f32 %v91, %v212
  %v214 = vpop.f32.mrf.mxu0
  %v215 = vadd.f32 %v96, %v214
  %216 = vmatmul.bf16.gmra.mxu0 %v184
  %v217 = vpop.f32.mrf.mxu0
  %v218 = vadd.f32 %v101, %v217
  %v219 = vpop.f32.mrf.mxu0
  %v220 = vadd.f32 %v106, %v219
  %221 = vmatmul.bf16.gmra.mxu0 %v187
  %v222 = vpop.f32.mrf.mxu0
  %v223 = vadd.f32 %v111, %v222
  %v224 = vpop.f32.mrf.mxu0
  %v225 = vadd.f32 %v116, %v224
  %226 = vmatmul.bf16.gmra.mxu0 %v190
  %v227 = vpop.f32.mrf.mxu0
  %v228 = vadd.f32 %v121, %v227
  %v229 = vpop.f32.mrf.mxu0
  %v230 = vadd.f32 %v126, %v229
  %231 = vmatmul.bf16.gmra.mxu0 %v193
  %v232 = vpop.f32.mrf.mxu0
  %v233 = vadd.f32 %v131, %v232
  %v234 = vpop.f32.mrf.mxu0
  %v235 = vadd.f32 %v136, %v234
  %236 = vmatmul.bf16.gmra.mxu0 %v196
  %v237 = vpop.f32.mrf.mxu0
  %v238 = vadd.f32 %v141, %v237
  %v239 = vpop.f32.mrf.mxu0
  %240 = vdwg.mxu0
  %241 = vxpose.xlu0.b32.start [1/16] %v208, 128
  %242 = vxpose.xlu0.b32.cont [2/16] %v210, 128
  %243 = vxpose.xlu0.b32.cont [3/16] %v213, 128
  %244 = vxpose.xlu0.b32.cont [4/16] 0.0, 128
  %245 = vxpose.xlu0.b32.cont [5/16] 0.0, 128
  %246 = vxpose.xlu0.b32.cont [6/16] 0.0, 128
  %247 = vxpose.xlu0.b32.cont [7/16] 0.0, 128
  %248 = vxpose.xlu0.b32.cont [8/16] 0.0, 128
  %249 = vxpose.xlu0.b32.cont [9/16] 0.0, 128
  %250 = vxpose.xlu0.b32.cont [10/16] 0.0, 128
  %251 = vxpose.xlu0.b32.cont [11/16] 0.0, 128
  %252 = vxpose.xlu0.b32.cont [12/16] 0.0, 128
  %253 = vxpose.xlu0.b32.cont [13/16] 0.0, 128
  %254 = vxpose.xlu0.b32.cont [14/16] 0.0, 128
  %255 = vxpose.xlu0.b32.cont [15/16] 0.0, 128
  %256 = vxpose.xlu0.b32.end [16/16] 0.0, 128
  %v257 = vpop.trf.xlu0
  %v258 = vpop.trf.xlu0
  %v259 = vpop.trf.xlu0
  %v260 = vpop.trf.xlu0
  %v261 = vpop.trf.xlu0
  %v262 = vpop.trf.xlu0
  %v263 = vpop.trf.xlu0
  %v264 = vpop.trf.xlu0
  %v265 = vpop.trf.xlu0
  %v266 = vpop.trf.xlu0
  %v267 = vpop.trf.xlu0
  %v268 = vpop.trf.xlu0
  %v269 = vpop.trf.xlu0
  %v270 = vpop.trf.xlu0
  %v271 = vpop.trf.xlu0
  %v272 = vpop.trf.xlu0
  %v273 = vpack.c.bf16 %v258, %v257
  %v274 = vpack.c.bf16 %v260, %v259
  %v275 = vpack.c.bf16 %v262, %v261
  %v276 = vpack.c.bf16 %v264, %v263
  %v277 = vpack.c.bf16 %v266, %v265
  %v278 = vpack.c.bf16 %v268, %v267
  %v279 = vpack.c.bf16 %v270, %v269
  %v280 = vpack.c.bf16 %v272, %v271
  %v281 = vpack.c.bf16 %v215, %v215
  %vm282 = vcmask 64512
  %v284 = vsel %vm282, %v273, 0
  %v287 = vsel %vm282, %v274, 0
  %v290 = vsel %vm282, %v275, 0
  %v293 = vsel %vm282, %v276, 0
  %v296 = vsel %vm282, %v277, 0
  %v299 = vsel %vm282, %v278, 0
  %v302 = vsel %vm282, %v279, 0
  %v305 = vsel %vm282, %v280, 0
  %vm307 = vcmask 1043456
  %v309 = vsel %vm307, %v281, 0
  %311 = vmatpush.bf16.msra.mxu0 0
  %312 = vmatpush.bf16.msra.mxu0 0
  %313 = vmatpush.bf16.msra.mxu0 0
  %314 = vmatpush.bf16.msra.mxu0 0
  %315 = vmatpush.bf16.msra.mxu0 0
  %316 = vmatpush.bf16.msra.mxu0 0
  %317 = vmatpush.bf16.msra.mxu0 0
  %318 = vmatpush.bf16.msra.mxu0 %v309
  %319 = vmatmul.bf16.gmra.mxu0 %v284
  %v320 = vpop.f32.mrf.mxu0
  %v321 = vadd.f32 0.0, %v320
  %v322 = vpop.f32.mrf.mxu0
  %v323 = vadd.f32 0.0, %v322
  %324 = vmatmul.bf16.gmra.mxu0 %v287
  %v325 = vpop.f32.mrf.mxu0
  %v326 = vadd.f32 0.0, %v325
  %v327 = vpop.f32.mrf.mxu0
  %v328 = vadd.f32 0.0, %v327
  %329 = vmatmul.bf16.gmra.mxu0 %v290
  %v330 = vpop.f32.mrf.mxu0
  %v331 = vadd.f32 0.0, %v330
  %v332 = vpop.f32.mrf.mxu0
  %v333 = vadd.f32 0.0, %v332
  %334 = vmatmul.bf16.gmra.mxu0 %v293
  %v335 = vpop.f32.mrf.mxu0
  %v336 = vadd.f32 0.0, %v335
  %v337 = vpop.f32.mrf.mxu0
  %v338 = vadd.f32 0.0, %v337
  %339 = vmatmul.bf16.gmra.mxu0 %v296
  %v340 = vpop.f32.mrf.mxu0
  %v341 = vadd.f32 0.0, %v340
  %v342 = vpop.f32.mrf.mxu0
  %v343 = vadd.f32 0.0, %v342
  %344 = vmatmul.bf16.gmra.mxu0 %v299
  %v345 = vpop.f32.mrf.mxu0
  %v346 = vadd.f32 0.0, %v345
  %v347 = vpop.f32.mrf.mxu0
  %v348 = vadd.f32 0.0, %v347
  %349 = vmatmul.bf16.gmra.mxu0 %v302
  %v350 = vpop.f32.mrf.mxu0
  %v351 = vadd.f32 0.0, %v350
  %v352 = vpop.f32.mrf.mxu0
  %v353 = vadd.f32 0.0, %v352
  %354 = vmatmul.bf16.gmra.mxu0 %v305
  %v355 = vpop.f32.mrf.mxu0
  %v356 = vadd.f32 0.0, %v355
  %v357 = vpop.f32.mrf.mxu0
  %v358 = vadd.f32 0.0, %v357
  %359 = vdwg.mxu0
  %362 = vrot.lane.b32.xlu0 %v326, 112
  %v363 = vpop.permute.xlu0 %362
  %364 = vrot.lane.b32.xlu0 %v328, 112
  %v365 = vpop.permute.xlu0 %364
  %v368 = vadd.f32 %v321, %v363
  %v369 = vadd.f32 %v323, %v365
  %372 = vrot.lane.b32.xlu0 %v331, 96
  %v373 = vpop.permute.xlu0 %372
  %374 = vrot.lane.b32.xlu0 %v333, 96
  %v375 = vpop.permute.xlu0 %374
  %v378 = vadd.f32 %v368, %v373
  %v379 = vadd.f32 %v369, %v375
  %382 = vrot.lane.b32.xlu0 %v336, 80
  %v383 = vpop.permute.xlu0 %382
  %384 = vrot.lane.b32.xlu0 %v338, 80
  %v385 = vpop.permute.xlu0 %384
  %v388 = vadd.f32 %v378, %v383
  %v389 = vadd.f32 %v379, %v385
  %392 = vrot.lane.b32.xlu0 %v341, 64
  %v393 = vpop.permute.xlu0 %392
  %394 = vrot.lane.b32.xlu0 %v343, 64
  %v395 = vpop.permute.xlu0 %394
  %v398 = vadd.f32 %v388, %v393
  %v399 = vadd.f32 %v389, %v395
  %402 = vrot.lane.b32.xlu0 %v346, 48
  %v403 = vpop.permute.xlu0 %402
  %404 = vrot.lane.b32.xlu0 %v348, 48
  %v405 = vpop.permute.xlu0 %404
  %v408 = vadd.f32 %v398, %v403
  %v409 = vadd.f32 %v399, %v405
  %412 = vrot.lane.b32.xlu0 %v351, 32
  %v413 = vpop.permute.xlu0 %412
  %414 = vrot.lane.b32.xlu0 %v353, 32
  %v415 = vpop.permute.xlu0 %414
  %v418 = vadd.f32 %v408, %v413
  %v419 = vadd.f32 %v409, %v415
  %422 = vrot.lane.b32.xlu0 %v356, 16
  %v423 = vpop.permute.xlu0 %422
  %424 = vrot.lane.b32.xlu0 %v358, 16
  %v425 = vpop.permute.xlu0 %424
  %v428 = vadd.f32 %v418, %v423
  %v429 = vadd.f32 %v419, %v425
  %v430 = vmul.f32 %v428, 0.03125
  %v431 = vmul.f32 %v429, 0.03125
  %v432 = vsel %vm176, %v430, -inf
  %v433 = vsel %vm176, %v431, -inf
  %v434 = vmax.f32 %v432, %v433
  %v435 = vrot.slane %v434, 4
  %v436 = vmax.f32 %v434, %v435
  %v437 = vrot.slane %v436, 2
  %v438 = vmax.f32 %v436, %v437
  %v439 = vrot.slane %v438, 1
  %v440 = vmax.f32 %v438, %v439
  %v441 = vsub.f32 %v430, %v440
  %v442 = vsub.f32 %v431, %v440
  %v443 = vmul.f32 %v441, 1.442695
  %v444 = vpow.pop %v443
  %v445 = vmul.f32 %v442, 1.442695
  %v446 = vpow.pop %v445
  %v447 = vsel %vm176, %v444, 0.0
  %v448 = vsel %vm176, %v446, 0.0
  %v449 = vadd.f32 %v447, %v448
  %v450 = vrot.slane %v449, 4
  %v451 = vadd.f32 %v449, %v450
  %v452 = vrot.slane %v451, 2
  %v453 = vadd.f32 %v451, %v452
  %v454 = vrot.slane %v453, 1
  %v455 = vadd.f32 %v453, %v454
  %v456 = vrcp.pop %v455
  %v457 = vmul.f32 %v455, %v456
  %v458 = vsub.f32 1.0, %v457
  %v459 = vmul.f32 %v456, %v458
  %v460 = vadd.f32 %v456, %v459
  %vm461 = vweird.f32 %v455
  %vm462 = vweird.f32 %v456
  %vm463 = vmor %vm461, %vm462
  %v464 = vsel %vm463, %v456, %v460
  %v465 = vand.u32 2147483647, %v455
  %vm466 = vcmp.eq.f32.partialorder %v465, 8.507059e+37
  %v467 = vand.u32 %v455, 2147483648
  %v468 = vor.u32 1.1754944e-38, %v467
  %v469 = vsel %vm466, %v468, %v464
  %v470 = vmul.f32 %v444, %v469
  %v471 = vmul.f32 %v446, %v469
  %vm472 = vcmask 1040384
  %v473 = vsel %vm472, %v223, 0.0
  %474 = vadd.xlane.f32.xlu0 %v473
  %v475 = vpop.xlane.xlu0 %474
  %v476 = vmul.f32 %v475, 0.0078125
  %v477 = vperm.slane %v476, 0
  %v478 = vmul.f32 %v477, %v470
  %v479 = vmul.f32 %v477, %v471
  %v480 = vld [vmem:[%s4] sm:$0xff]
  %v481 = vld [vmem:[%s4 + $0x8] sm:$0xff]
  %v482 = vadd.f32 %v478, %v480
  %v483 = vadd.f32 %v479, %v481
  %v484 = vpack.c.bf16 %v482, %v482
  %v485 = vpack.c.bf16 %v483, %v483
  %vm486 = vcmask 125952
  %487 = vst.msk [vmem:[#allocation6] sm:$0xf] %vm486, %v484
  %488 = vst.msk [vmem:[#allocation6 + $0x4] sm:$0xf] %vm486, %v485
  %491 = vrot.lane.b32.xlu0 %v484, 16
  %v492 = vpop.permute.xlu0 %491
  %493 = vrot.lane.b32.xlu0 %v485, 16
  %v494 = vpop.permute.xlu0 %493
  %vm497 = vcmask 257152
  %498 = vst.msk [vmem:[#allocation6 + $0x8] sm:$0xf] %vm497, %v492
  %499 = vst.msk [vmem:[#allocation6 + $0xc] sm:$0xf] %vm497, %v494
  %500 = vrot.lane.b32.xlu0 %v484, 32
  %v501 = vpop.permute.xlu0 %500
  %502 = vrot.lane.b32.xlu0 %v485, 32
  %v503 = vpop.permute.xlu0 %502
  %vm506 = vcmask 388352
  %507 = vst.msk [vmem:[#allocation6 + $0x10] sm:$0xf] %vm506, %v501
  %508 = vst.msk [vmem:[#allocation6 + $0x14] sm:$0xf] %vm506, %v503
  %509 = vrot.lane.b32.xlu0 %v484, 48
  %v510 = vpop.permute.xlu0 %509
  %511 = vrot.lane.b32.xlu0 %v485, 48
  %v512 = vpop.permute.xlu0 %511
  %vm515 = vcmask 519552
  %516 = vst.msk [vmem:[#allocation6 + $0x18] sm:$0xf] %vm515, %v510
  %517 = vst.msk [vmem:[#allocation6 + $0x1c] sm:$0xf] %vm515, %v512
  %518 = vrot.lane.b32.xlu0 %v484, 64
  %v519 = vpop.permute.xlu0 %518
  %520 = vrot.lane.b32.xlu0 %v485, 64
  %v521 = vpop.permute.xlu0 %520
  %vm524 = vcmask 650752
  %525 = vst.msk [vmem:[#allocation6 + $0x20] sm:$0xf] %vm524, %v519
  %526 = vst.msk [vmem:[#allocation6 + $0x24] sm:$0xf] %vm524, %v521
  %527 = vrot.lane.b32.xlu0 %v484, 80
  %v528 = vpop.permute.xlu0 %527
  %529 = vrot.lane.b32.xlu0 %v485, 80
  %v530 = vpop.permute.xlu0 %529
  %vm533 = vcmask 781952
  %534 = vst.msk [vmem:[#allocation6 + $0x28] sm:$0xf] %vm533, %v528
  %535 = vst.msk [vmem:[#allocation6 + $0x2c] sm:$0xf] %vm533, %v530
  %536 = vrot.lane.b32.xlu0 %v484, 96
  %v537 = vpop.permute.xlu0 %536
  %538 = vrot.lane.b32.xlu0 %v485, 96
  %v539 = vpop.permute.xlu0 %538
  %vm542 = vcmask 913152
  %543 = vst.msk [vmem:[#allocation6 + $0x30] sm:$0xf] %vm542, %v537
  %544 = vst.msk [vmem:[#allocation6 + $0x34] sm:$0xf] %vm542, %v539
  %545 = vrot.lane.b32.xlu0 %v484, 112
  %v546 = vpop.permute.xlu0 %545
  %547 = vrot.lane.b32.xlu0 %v485, 112
  %v548 = vpop.permute.xlu0 %547
  %vm551 = vcmask 1044352
  %552 = vst.msk [vmem:[#allocation6 + $0x38] sm:$0xf] %vm551, %v546
  %553 = vst.msk [vmem:[#allocation6 + $0x3c] sm:$0xf] %vm551, %v548
  %v554 = vpack.c.bf16 %v228, %v225
  %v555 = vld [vmem:[#allocation6] sm:$0xf]
  %v556 = vld [vmem:[#allocation6 + $0x4] sm:$0xf]
  %v557 = vld [vmem:[#allocation6 + $0x8] sm:$0xf]
  %v558 = vld [vmem:[#allocation6 + $0xc] sm:$0xf]
  %v559 = vld [vmem:[#allocation6 + $0x10] sm:$0xf]
  %v560 = vld [vmem:[#allocation6 + $0x14] sm:$0xf]
  %v561 = vld [vmem:[#allocation6 + $0x18] sm:$0xf]
  %v562 = vld [vmem:[#allocation6 + $0x1c] sm:$0xf]
  %v563 = vld [vmem:[#allocation6 + $0x20] sm:$0xf]
  %v564 = vld [vmem:[#allocation6 + $0x24] sm:$0xf]
  %v565 = vld [vmem:[#allocation6 + $0x28] sm:$0xf]
  %v566 = vld [vmem:[#allocation6 + $0x2c] sm:$0xf]
  %v567 = vld [vmem:[#allocation6 + $0x30] sm:$0xf]
  %v568 = vld [vmem:[#allocation6 + $0x34] sm:$0xf]
  %v569 = vld [vmem:[#allocation6 + $0x38] sm:$0xf]
  %v570 = vld [vmem:[#allocation6 + $0x3c] sm:$0xf]
  %v571 = vpack.c.bf16 %v218, %v218
  %580 = vrot.lane.b32.xlu0 %v273, 120
  %v581 = vpop.permute.xlu0 %580
  %582 = vrot.lane.b32.xlu0 %v274, 120
  %v583 = vpop.permute.xlu0 %582
  %584 = vrot.lane.b32.xlu0 %v275, 120
  %v585 = vpop.permute.xlu0 %584
  %586 = vrot.lane.b32.xlu0 %v276, 120
  %v587 = vpop.permute.xlu0 %586
  %588 = vrot.lane.b32.xlu0 %v277, 120
  %v589 = vpop.permute.xlu0 %588
  %590 = vrot.lane.b32.xlu0 %v278, 120
  %v591 = vpop.permute.xlu0 %590
  %592 = vrot.lane.b32.xlu0 %v279, 120
  %v593 = vpop.permute.xlu0 %592
  %594 = vrot.lane.b32.xlu0 %v280, 120
  %v595 = vpop.permute.xlu0 %594
  %v597 = vsel %vm282, %v581, 0
  %v600 = vsel %vm282, %v583, 0
  %v603 = vsel %vm282, %v585, 0
  %v606 = vsel %vm282, %v587, 0
  %v609 = vsel %vm282, %v589, 0
  %v612 = vsel %vm282, %v591, 0
  %v615 = vsel %vm282, %v593, 0
  %v618 = vsel %vm282, %v595, 0
  %v621 = vsel %vm307, %v571, 0
  %623 = vmatpush.bf16.msra.mxu0 0
  %624 = vmatpush.bf16.msra.mxu0 0
  %625 = vmatpush.bf16.msra.mxu0 0
  %626 = vmatpush.bf16.msra.mxu0 0
  %627 = vmatpush.bf16.msra.mxu0 0
  %628 = vmatpush.bf16.msra.mxu0 0
  %629 = vmatpush.bf16.msra.mxu0 0
  %630 = vmatpush.bf16.msra.mxu0 %v621
  %631 = vmatmul.bf16.gmra.mxu0 %v597
  %v632 = vpop.f32.mrf.mxu0
  %v633 = vadd.f32 0.0, %v632
  %v634 = vpop.f32.mrf.mxu0
  %v635 = vadd.f32 0.0, %v634
  %636 = vmatmul.bf16.gmra.mxu0 %v600
  %v637 = vpop.f32.mrf.mxu0
  %v638 = vadd.f32 0.0, %v637
  %v639 = vpop.f32.mrf.mxu0
  %v640 = vadd.f32 0.0, %v639
  %641 = vmatmul.bf16.gmra.mxu0 %v603
  %v642 = vpop.f32.mrf.mxu0
  %v643 = vadd.f32 0.0, %v642
  %v644 = vpop.f32.mrf.mxu0
  %v645 = vadd.f32 0.0, %v644
  %646 = vmatmul.bf16.gmra.mxu0 %v606
  %v647 = vpop.f32.mrf.mxu0
  %v648 = vadd.f32 0.0, %v647
  %v649 = vpop.f32.mrf.mxu0
  %v650 = vadd.f32 0.0, %v649
  %651 = vmatmul.bf16.gmra.mxu0 %v609
  %v652 = vpop.f32.mrf.mxu0
  %v653 = vadd.f32 0.0, %v652
  %v654 = vpop.f32.mrf.mxu0
  %v655 = vadd.f32 0.0, %v654
  %656 = vmatmul.bf16.gmra.mxu0 %v612
  %v657 = vpop.f32.mrf.mxu0
  %v658 = vadd.f32 0.0, %v657
  %v659 = vpop.f32.mrf.mxu0
  %v660 = vadd.f32 0.0, %v659
  %661 = vmatmul.bf16.gmra.mxu0 %v615
  %v662 = vpop.f32.mrf.mxu0
  %v663 = vadd.f32 0.0, %v662
  %v664 = vpop.f32.mrf.mxu0
  %v665 = vadd.f32 0.0, %v664
  %666 = vmatmul.bf16.gmra.mxu0 %v618
  %v667 = vpop.f32.mrf.mxu0
  %v668 = vadd.f32 0.0, %v667
  %v669 = vpop.f32.mrf.mxu0
  %v670 = vadd.f32 0.0, %v669
  %671 = vdwg.mxu0
  %674 = vrot.lane.b32.xlu0 %v638, 112
  %v675 = vpop.permute.xlu0 %674
  %676 = vrot.lane.b32.xlu0 %v640, 112
  %v677 = vpop.permute.xlu0 %676
  %v680 = vadd.f32 %v633, %v675
  %v681 = vadd.f32 %v635, %v677
  %684 = vrot.lane.b32.xlu0 %v643, 96
  %v685 = vpop.permute.xlu0 %684
  %686 = vrot.lane.b32.xlu0 %v645, 96
  %v687 = vpop.permute.xlu0 %686
  %v690 = vadd.f32 %v680, %v685
  %v691 = vadd.f32 %v681, %v687
  %694 = vrot.lane.b32.xlu0 %v648, 80
  %v695 = vpop.permute.xlu0 %694
  %696 = vrot.lane.b32.xlu0 %v650, 80
  %v697 = vpop.permute.xlu0 %696
  %v700 = vadd.f32 %v690, %v695
  %v701 = vadd.f32 %v691, %v697
  %704 = vrot.lane.b32.xlu0 %v653, 64
  %v705 = vpop.permute.xlu0 %704
  %706 = vrot.lane.b32.xlu0 %v655, 64
  %v707 = vpop.permute.xlu0 %706
  %v710 = vadd.f32 %v700, %v705
  %v711 = vadd.f32 %v701, %v707
  %714 = vrot.lane.b32.xlu0 %v658, 48
  %v715 = vpop.permute.xlu0 %714
  %716 = vrot.lane.b32.xlu0 %v660, 48
  %v717 = vpop.permute.xlu0 %716
  %v720 = vadd.f32 %v710, %v715
  %v721 = vadd.f32 %v711, %v717
  %724 = vrot.lane.b32.xlu0 %v663, 32
  %v725 = vpop.permute.xlu0 %724
  %726 = vrot.lane.b32.xlu0 %v665, 32
  %v727 = vpop.permute.xlu0 %726
  %v730 = vadd.f32 %v720, %v725
  %v731 = vadd.f32 %v721, %v727
  %734 = vrot.lane.b32.xlu0 %v668, 16
  %v735 = vpop.permute.xlu0 %734
  %736 = vrot.lane.b32.xlu0 %v670, 16
  %v737 = vpop.permute.xlu0 %736
  %v740 = vadd.f32 %v730, %v735
  %v741 = vadd.f32 %v731, %v737
  %v742 = vmul.f32 %v740, 0.03125
  %v743 = vmul.f32 %v741, 0.03125
  %v744 = vsel %vm176, %v742, -inf
  %v745 = vsel %vm176, %v743, -inf
  %v746 = vmax.f32 %v744, %v745
  %v747 = vrot.slane %v746, 4
  %v748 = vmax.f32 %v746, %v747
  %v749 = vrot.slane %v748, 2
  %v750 = vmax.f32 %v748, %v749
  %v751 = vrot.slane %v750, 1
  %v752 = vmax.f32 %v750, %v751
  %v753 = vsub.f32 %v742, %v752
  %v754 = vsub.f32 %v743, %v752
  %v755 = vmul.f32 %v753, 1.442695
  %v756 = vpow.pop %v755
  %v757 = vmul.f32 %v754, 1.442695
  %v758 = vpow.pop %v757
  %v759 = vsel %vm176, %v756, 0.0
  %v760 = vsel %vm176, %v758, 0.0
  %v761 = vadd.f32 %v759, %v760
  %v762 = vrot.slane %v761, 4
  %v763 = vadd.f32 %v761, %v762
  %v764 = vrot.slane %v763, 2
  %v765 = vadd.f32 %v763, %v764
  %v766 = vrot.slane %v765, 1
  %v767 = vadd.f32 %v765, %v766
  %v768 = vrcp.pop %v767
  %v769 = vmul.f32 %v767, %v768
  %v770 = vsub.f32 1.0, %v769
  %v771 = vmul.f32 %v768, %v770
  %v772 = vadd.f32 %v768, %v771
  %vm773 = vweird.f32 %v767
  %vm774 = vweird.f32 %v768
  %vm775 = vmor %vm773, %vm774
  %v776 = vsel %vm775, %v768, %v772
  %v777 = vand.u32 2147483647, %v767
  %vm778 = vcmp.eq.f32.partialorder %v777, 8.507059e+37
  %v779 = vand.u32 %v767, 2147483648
  %v780 = vor.u32 1.1754944e-38, %v779
  %v781 = vsel %vm778, %v780, %v776
  %v782 = vmul.f32 %v756, %v781
  %v783 = vmul.f32 %v758, %v781
  %vm784 = vcmask 1041409
  %v785 = vsel %vm784, %v223, 0.0
  %786 = vadd.xlane.f32.xlu0 %v785
  %v787 = vpop.xlane.xlu0 %786
  %v788 = vmul.f32 %v787, 0.0078125
  %v789 = vperm.slane %v788, 1
  %v790 = vmul.f32 %v789, %v782
  %v791 = vmul.f32 %v789, %v783
  %v792 = vld [vmem:[%s4 + $0x10] sm:$0xff]
  %v793 = vld [vmem:[%s4 + $0x18] sm:$0xff]
  %v794 = vadd.f32 %v790, %v792
  %v795 = vadd.f32 %v791, %v793
  %v796 = vpack.c.bf16 %v794, %v794
  %v797 = vpack.c.bf16 %v795, %v795
  %798 = vst.msk [vmem:[#allocation6] sm:$0xf] %vm486, %v796
  %799 = vst.msk [vmem:[#allocation6 + $0x4] sm:$0xf] %vm486, %v797
  %802 = vrot.lane.b32.xlu0 %v796, 16
  %v803 = vpop.permute.xlu0 %802
  %804 = vrot.lane.b32.xlu0 %v797, 16
  %v805 = vpop.permute.xlu0 %804
  %808 = vst.msk [vmem:[#allocation6 + $0x8] sm:$0xf] %vm497, %v803
  %809 = vst.msk [vmem:[#allocation6 + $0xc] sm:$0xf] %vm497, %v805
  %810 = vrot.lane.b32.xlu0 %v796, 32
  %v811 = vpop.permute.xlu0 %810
  %812 = vrot.lane.b32.xlu0 %v797, 32
  %v813 = vpop.permute.xlu0 %812
  %816 = vst.msk [vmem:[#allocation6 + $0x10] sm:$0xf] %vm506, %v811
  %817 = vst.msk [vmem:[#allocation6 + $0x14] sm:$0xf] %vm506, %v813
  %818 = vrot.lane.b32.xlu0 %v796, 48
  %v819 = vpop.permute.xlu0 %818
  %820 = vrot.lane.b32.xlu0 %v797, 48
  %v821 = vpop.permute.xlu0 %820
  %824 = vst.msk [vmem:[#allocation6 + $0x18] sm:$0xf] %vm515, %v819
  %825 = vst.msk [vmem:[#allocation6 + $0x1c] sm:$0xf] %vm515, %v821
  %826 = vrot.lane.b32.xlu0 %v796, 64
  %v827 = vpop.permute.xlu0 %826
  %828 = vrot.lane.b32.xlu0 %v797, 64
  %v829 = vpop.permute.xlu0 %828
  %832 = vst.msk [vmem:[#allocation6 + $0x20] sm:$0xf] %vm524, %v827
  %833 = vst.msk [vmem:[#allocation6 + $0x24] sm:$0xf] %vm524, %v829
  %834 = vrot.lane.b32.xlu0 %v796, 80
  %v835 = vpop.permute.xlu0 %834
  %836 = vrot.lane.b32.xlu0 %v797, 80
  %v837 = vpop.permute.xlu0 %836
  %840 = vst.msk [vmem:[#allocation6 + $0x28] sm:$0xf] %vm533, %v835
  %841 = vst.msk [vmem:[#allocation6 + $0x2c] sm:$0xf] %vm533, %v837
  %842 = vrot.lane.b32.xlu0 %v796, 96
  %v843 = vpop.permute.xlu0 %842
  %844 = vrot.lane.b32.xlu0 %v797, 96
  %v845 = vpop.permute.xlu0 %844
  %848 = vst.msk [vmem:[#allocation6 + $0x30] sm:$0xf] %vm542, %v843
  %849 = vst.msk [vmem:[#allocation6 + $0x34] sm:$0xf] %vm542, %v845
  %850 = vrot.lane.b32.xlu0 %v796, 112
  %v851 = vpop.permute.xlu0 %850
  %852 = vrot.lane.b32.xlu0 %v797, 112
  %v853 = vpop.permute.xlu0 %852
  %856 = vst.msk [vmem:[#allocation6 + $0x38] sm:$0xf] %vm551, %v851
  %857 = vst.msk [vmem:[#allocation6 + $0x3c] sm:$0xf] %vm551, %v853
  %v858 = vpack.c.bf16 %v233, %v230
  %v859 = vld [vmem:[#allocation6] sm:$0xf]
  %v860 = vld [vmem:[#allocation6 + $0x4] sm:$0xf]
  %v861 = vld [vmem:[#allocation6 + $0x8] sm:$0xf]
  %v862 = vld [vmem:[#allocation6 + $0xc] sm:$0xf]
  %v863 = vld [vmem:[#allocation6 + $0x10] sm:$0xf]
  %v864 = vld [vmem:[#allocation6 + $0x14] sm:$0xf]
  %v865 = vld [vmem:[#allocation6 + $0x18] sm:$0xf]
  %v866 = vld [vmem:[#allocation6 + $0x1c] sm:$0xf]
  %v867 = vld [vmem:[#allocation6 + $0x20] sm:$0xf]
  %v868 = vld [vmem:[#allocation6 + $0x24] sm:$0xf]
  %v869 = vld [vmem:[#allocation6 + $0x28] sm:$0xf]
  %v870 = vld [vmem:[#allocation6 + $0x2c] sm:$0xf]
  %v871 = vld [vmem:[#allocation6 + $0x30] sm:$0xf]
  %v872 = vld [vmem:[#allocation6 + $0x34] sm:$0xf]
  %v873 = vld [vmem:[#allocation6 + $0x38] sm:$0xf]
  %v874 = vld [vmem:[#allocation6 + $0x3c] sm:$0xf]
  %v891 = vunpack.c.l.b16 %v859
  %v892 = vunpack.c.l.b16 %v860
  %v893 = vunpack.c.l.b16 %v861
  %v894 = vunpack.c.l.b16 %v862
  %v895 = vunpack.c.l.b16 %v863
  %v896 = vunpack.c.l.b16 %v864
  %v897 = vunpack.c.l.b16 %v865
  %v898 = vunpack.c.l.b16 %v866
  %v899 = vunpack.c.l.b16 %v867
  %v900 = vunpack.c.l.b16 %v868
  %v901 = vunpack.c.l.b16 %v869
  %v902 = vunpack.c.l.b16 %v870
  %v903 = vunpack.c.l.b16 %v871
  %v904 = vunpack.c.l.b16 %v872
  %v905 = vunpack.c.l.b16 %v873
  %v906 = vunpack.c.l.b16 %v874
  %v907 = vpack.c.b16 %v892, %v891
  %v908 = vpack.c.b16 %v894, %v893
  %v909 = vpack.c.b16 %v896, %v895
  %v910 = vpack.c.b16 %v898, %v897
  %v911 = vpack.c.b16 %v900, %v899
  %v912 = vpack.c.b16 %v902, %v901
  %v913 = vpack.c.b16 %v904, %v903
  %v914 = vpack.c.b16 %v906, %v905
  %923 = vmatpush.bf16.msra.mxu0 %v914
  %924 = vmatpush.bf16.msra.mxu0 %v913
  %925 = vmatpush.bf16.msra.mxu0 %v912
  %926 = vmatpush.bf16.msra.mxu0 %v911
  %927 = vmatpush.bf16.msra.mxu0 %v910
  %928 = vmatpush.bf16.msra.mxu0 %v909
  %929 = vmatpush.bf16.msra.mxu0 %v908
  %930 = vmatpush.bf16.msra.mxu0 %v907
  %931 = vmatmul.bf16.gmra.mxu0 %v858
  %v932 = vpop.f32.mrf.mxu0
  %v933 = vadd.f32 0.0, %v932
  %v934 = vpop.f32.mrf.mxu0
  %v935 = vadd.f32 0.0, %v934
  %936 = vdwg.mxu0
  %v953 = vunpack.c.l.b16 %v555
  %v954 = vunpack.c.l.b16 %v556
  %v955 = vunpack.c.l.b16 %v557
  %v956 = vunpack.c.l.b16 %v558
  %v957 = vunpack.c.l.b16 %v559
  %v958 = vunpack.c.l.b16 %v560
  %v959 = vunpack.c.l.b16 %v561
  %v960 = vunpack.c.l.b16 %v562
  %v961 = vunpack.c.l.b16 %v563
  %v962 = vunpack.c.l.b16 %v564
  %v963 = vunpack.c.l.b16 %v565
  %v964 = vunpack.c.l.b16 %v566
  %v965 = vunpack.c.l.b16 %v567
  %v966 = vunpack.c.l.b16 %v568
  %v967 = vunpack.c.l.b16 %v569
  %v968 = vunpack.c.l.b16 %v570
  %v969 = vpack.c.b16 %v954, %v953
  %v970 = vpack.c.b16 %v956, %v955
  %v971 = vpack.c.b16 %v958, %v957
  %v972 = vpack.c.b16 %v960, %v959
  %v973 = vpack.c.b16 %v962, %v961
  %v974 = vpack.c.b16 %v964, %v963
  %v975 = vpack.c.b16 %v966, %v965
  %v976 = vpack.c.b16 %v968, %v967
  %985 = vmatpush.bf16.msra.mxu0 %v976
  %986 = vmatpush.bf16.msra.mxu0 %v975
  %987 = vmatpush.bf16.msra.mxu0 %v974
  %988 = vmatpush.bf16.msra.mxu0 %v973
  %989 = vmatpush.bf16.msra.mxu0 %v972
  %990 = vmatpush.bf16.msra.mxu0 %v971
  %991 = vmatpush.bf16.msra.mxu0 %v970
  %992 = vmatpush.bf16.msra.mxu0 %v969
  %993 = vmatmul.bf16.gmra.mxu0 %v554
  %v994 = vpop.f32.mrf.mxu0
  %v995 = vadd.f32 %v933, %v994
  %v996 = vpop.f32.mrf.mxu0
  %v997 = vadd.f32 %v935, %v996
  %998 = vdwg.mxu0
  %v999 = vpack.c.bf16 %v220, %v220
  %1000 = vrot.lane.b32.xlu0 %v273, 112
  %v1001 = vpop.permute.xlu0 %1000
  %1002 = vrot.lane.b32.xlu0 %v274, 112
  %v1003 = vpop.permute.xlu0 %1002
  %1004 = vrot.lane.b32.xlu0 %v275, 112
  %v1005 = vpop.permute.xlu0 %1004
  %1006 = vrot.lane.b32.xlu0 %v276, 112
  %v1007 = vpop.permute.xlu0 %1006
  %1008 = vrot.lane.b32.xlu0 %v277, 112
  %v1009 = vpop.permute.xlu0 %1008
  %1010 = vrot.lane.b32.xlu0 %v278, 112
  %v1011 = vpop.permute.xlu0 %1010
  %1012 = vrot.lane.b32.xlu0 %v279, 112
  %v1013 = vpop.permute.xlu0 %1012
  %1014 = vrot.lane.b32.xlu0 %v280, 112
  %v1015 = vpop.permute.xlu0 %1014
  %v1017 = vsel %vm282, %v1001, 0
  %v1020 = vsel %vm282, %v1003, 0
  %v1023 = vsel %vm282, %v1005, 0
  %v1026 = vsel %vm282, %v1007, 0
  %v1029 = vsel %vm282, %v1009, 0
  %v1032 = vsel %vm282, %v1011, 0
  %v1035 = vsel %vm282, %v1013, 0
  %v1038 = vsel %vm282, %v1015, 0
  %v1041 = vsel %vm307, %v999, 0
  %1043 = vmatpush.bf16.msra.mxu0 0
  %1044 = vmatpush.bf16.msra.mxu0 0
  %1045 = vmatpush.bf16.msra.mxu0 0
  %1046 = vmatpush.bf16.msra.mxu0 0
  %1047 = vmatpush.bf16.msra.mxu0 0
  %1048 = vmatpush.bf16.msra.mxu0 0
  %1049 = vmatpush.bf16.msra.mxu0 0
  %1050 = vmatpush.bf16.msra.mxu0 %v1041
  %1051 = vmatmul.bf16.gmra.mxu0 %v1017
  %v1052 = vpop.f32.mrf.mxu0
  %v1053 = vadd.f32 0.0, %v1052
  %v1054 = vpop.f32.mrf.mxu0
  %v1055 = vadd.f32 0.0, %v1054
  %1056 = vmatmul.bf16.gmra.mxu0 %v1020
  %v1057 = vpop.f32.mrf.mxu0
  %v1058 = vadd.f32 0.0, %v1057
  %v1059 = vpop.f32.mrf.mxu0
  %v1060 = vadd.f32 0.0, %v1059
  %1061 = vmatmul.bf16.gmra.mxu0 %v1023
  %v1062 = vpop.f32.mrf.mxu0
  %v1063 = vadd.f32 0.0, %v1062
  %v1064 = vpop.f32.mrf.mxu0
  %v1065 = vadd.f32 0.0, %v1064
  %1066 = vmatmul.bf16.gmra.mxu0 %v1026
  %v1067 = vpop.f32.mrf.mxu0
  %v1068 = vadd.f32 0.0, %v1067
  %v1069 = vpop.f32.mrf.mxu0
  %v1070 = vadd.f32 0.0, %v1069
  %1071 = vmatmul.bf16.gmra.mxu0 %v1029
  %v1072 = vpop.f32.mrf.mxu0
  %v1073 = vadd.f32 0.0, %v1072
  %v1074 = vpop.f32.mrf.mxu0
  %v1075 = vadd.f32 0.0, %v1074
  %1076 = vmatmul.bf16.gmra.mxu0 %v1032
  %v1077 = vpop.f32.mrf.mxu0
  %v1078 = vadd.f32 0.0, %v1077
  %v1079 = vpop.f32.mrf.mxu0
  %v1080 = vadd.f32 0.0, %v1079
  %1081 = vmatmul.bf16.gmra.mxu0 %v1035
  %v1082 = vpop.f32.mrf.mxu0
  %v1083 = vadd.f32 0.0, %v1082
  %v1084 = vpop.f32.mrf.mxu0
  %v1085 = vadd.f32 0.0, %v1084
  %1086 = vmatmul.bf16.gmra.mxu0 %v1038
  %v1087 = vpop.f32.mrf.mxu0
  %v1088 = vadd.f32 0.0, %v1087
  %v1089 = vpop.f32.mrf.mxu0
  %v1090 = vadd.f32 0.0, %v1089
  %1091 = vdwg.mxu0
  %1094 = vrot.lane.b32.xlu0 %v1058, 112
  %v1095 = vpop.permute.xlu0 %1094
  %1096 = vrot.lane.b32.xlu0 %v1060, 112
  %v1097 = vpop.permute.xlu0 %1096
  %v1100 = vadd.f32 %v1053, %v1095
  %v1101 = vadd.f32 %v1055, %v1097
  %1104 = vrot.lane.b32.xlu0 %v1063, 96
  %v1105 = vpop.permute.xlu0 %1104
  %1106 = vrot.lane.b32.xlu0 %v1065, 96
  %v1107 = vpop.permute.xlu0 %1106
  %v1110 = vadd.f32 %v1100, %v1105
  %v1111 = vadd.f32 %v1101, %v1107
  %1114 = vrot.lane.b32.xlu0 %v1068, 80
  %v1115 = vpop.permute.xlu0 %1114
  %1116 = vrot.lane.b32.xlu0 %v1070, 80
  %v1117 = vpop.permute.xlu0 %1116
  %v1120 = vadd.f32 %v1110, %v1115
  %v1121 = vadd.f32 %v1111, %v1117
  %1124 = vrot.lane.b32.xlu0 %v1073, 64
  %v1125 = vpop.permute.xlu0 %1124
  %1126 = vrot.lane.b32.xlu0 %v1075, 64
  %v1127 = vpop.permute.xlu0 %1126
  %v1130 = vadd.f32 %v1120, %v1125
  %v1131 = vadd.f32 %v1121, %v1127
  %1134 = vrot.lane.b32.xlu0 %v1078, 48
  %v1135 = vpop.permute.xlu0 %1134
  %1136 = vrot.lane.b32.xlu0 %v1080, 48
  %v1137 = vpop.permute.xlu0 %1136
  %v1140 = vadd.f32 %v1130, %v1135
  %v1141 = vadd.f32 %v1131, %v1137
  %1144 = vrot.lane.b32.xlu0 %v1083, 32
  %v1145 = vpop.permute.xlu0 %1144
  %1146 = vrot.lane.b32.xlu0 %v1085, 32
  %v1147 = vpop.permute.xlu0 %1146
  %v1150 = vadd.f32 %v1140, %v1145
  %v1151 = vadd.f32 %v1141, %v1147
  %1154 = vrot.lane.b32.xlu0 %v1088, 16
  %v1155 = vpop.permute.xlu0 %1154
  %1156 = vrot.lane.b32.xlu0 %v1090, 16
  %v1157 = vpop.permute.xlu0 %1156
  %v1160 = vadd.f32 %v1150, %v1155
  %v1161 = vadd.f32 %v1151, %v1157
  %v1162 = vmul.f32 %v1160, 0.03125
  %v1163 = vmul.f32 %v1161, 0.03125
  %v1164 = vsel %vm176, %v1162, -inf
  %v1165 = vsel %vm176, %v1163, -inf
  %v1166 = vmax.f32 %v1164, %v1165
  %v1167 = vrot.slane %v1166, 4
  %v1168 = vmax.f32 %v1166, %v1167
  %v1169 = vrot.slane %v1168, 2
  %v1170 = vmax.f32 %v1168, %v1169
  %v1171 = vrot.slane %v1170, 1
  %v1172 = vmax.f32 %v1170, %v1171
  %v1173 = vsub.f32 %v1162, %v1172
  %v1174 = vsub.f32 %v1163, %v1172
  %v1175 = vmul.f32 %v1173, 1.442695
  %v1176 = vpow.pop %v1175
  %v1177 = vmul.f32 %v1174, 1.442695
  %v1178 = vpow.pop %v1177
  %v1179 = vsel %vm176, %v1176, 0.0
  %v1180 = vsel %vm176, %v1178, 0.0
  %v1181 = vadd.f32 %v1179, %v1180
  %v1182 = vrot.slane %v1181, 4
  %v1183 = vadd.f32 %v1181, %v1182
  %v1184 = vrot.slane %v1183, 2
  %v1185 = vadd.f32 %v1183, %v1184
  %v1186 = vrot.slane %v1185, 1
  %v1187 = vadd.f32 %v1185, %v1186
  %v1188 = vrcp.pop %v1187
  %v1189 = vmul.f32 %v1187, %v1188
  %v1190 = vsub.f32 1.0, %v1189
  %v1191 = vmul.f32 %v1188, %v1190
  %v1192 = vadd.f32 %v1188, %v1191
  %vm1193 = vweird.f32 %v1187
  %vm1194 = vweird.f32 %v1188
  %vm1195 = vmor %vm1193, %vm1194
  %v1196 = vsel %vm1195, %v1188, %v1192
  %v1197 = vand.u32 2147483647, %v1187
  %vm1198 = vcmp.eq.f32.partialorder %v1197, 8.507059e+37
  %v1199 = vand.u32 %v1187, 2147483648
  %v1200 = vor.u32 1.1754944e-38, %v1199
  %v1201 = vsel %vm1198, %v1200, %v1196
  %v1202 = vmul.f32 %v1176, %v1201
  %v1203 = vmul.f32 %v1178, %v1201
  %vm1204 = vcmask 1042434
  %v1205 = vsel %vm1204, %v223, 0.0
  %1206 = vadd.xlane.f32.xlu0 %v1205
  %v1207 = vpop.xlane.xlu0 %1206
  %v1208 = vmul.f32 %v1207, 0.0078125
  %v1209 = vperm.slane %v1208, 2
  %v1210 = vmul.f32 %v1209, %v1202
  %v1211 = vmul.f32 %v1209, %v1203
  %v1212 = vld [vmem:[%s4 + $0x20] sm:$0xff]
  %v1213 = vld [vmem:[%s4 + $0x28] sm:$0xff]
  %v1214 = vadd.f32 %v1210, %v1212
  %v1215 = vadd.f32 %v1211, %v1213
  %v1216 = vpack.c.bf16 %v1214, %v1214
  %v1217 = vpack.c.bf16 %v1215, %v1215
  %1218 = vst.msk [vmem:[#allocation6] sm:$0xf] %vm486, %v1216
  %1219 = vst.msk [vmem:[#allocation6 + $0x4] sm:$0xf] %vm486, %v1217
  %1222 = vrot.lane.b32.xlu0 %v1216, 16
  %v1223 = vpop.permute.xlu0 %1222
  %1224 = vrot.lane.b32.xlu0 %v1217, 16
  %v1225 = vpop.permute.xlu0 %1224
  %1228 = vst.msk [vmem:[#allocation6 + $0x8] sm:$0xf] %vm497, %v1223
  %1229 = vst.msk [vmem:[#allocation6 + $0xc] sm:$0xf] %vm497, %v1225
  %1230 = vrot.lane.b32.xlu0 %v1216, 32
  %v1231 = vpop.permute.xlu0 %1230
  %1232 = vrot.lane.b32.xlu0 %v1217, 32
  %v1233 = vpop.permute.xlu0 %1232
  %1236 = vst.msk [vmem:[#allocation6 + $0x10] sm:$0xf] %vm506, %v1231
  %1237 = vst.msk [vmem:[#allocation6 + $0x14] sm:$0xf] %vm506, %v1233
  %1238 = vrot.lane.b32.xlu0 %v1216, 48
  %v1239 = vpop.permute.xlu0 %1238
  %1240 = vrot.lane.b32.xlu0 %v1217, 48
  %v1241 = vpop.permute.xlu0 %1240
  %1244 = vst.msk [vmem:[#allocation6 + $0x18] sm:$0xf] %vm515, %v1239
  %1245 = vst.msk [vmem:[#allocation6 + $0x1c] sm:$0xf] %vm515, %v1241
  %1246 = vrot.lane.b32.xlu0 %v1216, 64
  %v1247 = vpop.permute.xlu0 %1246
  %1248 = vrot.lane.b32.xlu0 %v1217, 64
  %v1249 = vpop.permute.xlu0 %1248
  %1252 = vst.msk [vmem:[#allocation6 + $0x20] sm:$0xf] %vm524, %v1247
  %1253 = vst.msk [vmem:[#allocation6 + $0x24] sm:$0xf] %vm524, %v1249
  %1254 = vrot.lane.b32.xlu0 %v1216, 80
  %v1255 = vpop.permute.xlu0 %1254
  %1256 = vrot.lane.b32.xlu0 %v1217, 80
  %v1257 = vpop.permute.xlu0 %1256
  %1260 = vst.msk [vmem:[#allocation6 + $0x28] sm:$0xf] %vm533, %v1255
  %1261 = vst.msk [vmem:[#allocation6 + $0x2c] sm:$0xf] %vm533, %v1257
  %1262 = vrot.lane.b32.xlu0 %v1216, 96
  %v1263 = vpop.permute.xlu0 %1262
  %1264 = vrot.lane.b32.xlu0 %v1217, 96
  %v1265 = vpop.permute.xlu0 %1264
  %1268 = vst.msk [vmem:[#allocation6 + $0x30] sm:$0xf] %vm542, %v1263
  %1269 = vst.msk [vmem:[#allocation6 + $0x34] sm:$0xf] %vm542, %v1265
  %1270 = vrot.lane.b32.xlu0 %v1216, 112
  %v1271 = vpop.permute.xlu0 %1270
  %1272 = vrot.lane.b32.xlu0 %v1217, 112
  %v1273 = vpop.permute.xlu0 %1272
  %1276 = vst.msk [vmem:[#allocation6 + $0x38] sm:$0xf] %vm551, %v1271
  %1277 = vst.msk [vmem:[#allocation6 + $0x3c] sm:$0xf] %vm551, %v1273
  %v1278 = vpack.c.bf16 %v238, %v235
  %v1279 = vld [vmem:[#allocation6] sm:$0xf]
  %v1280 = vld [vmem:[#allocation6 + $0x4] sm:$0xf]
  %v1281 = vld [vmem:[#allocation6 + $0x8] sm:$0xf]
  %v1282 = vld [vmem:[#allocation6 + $0xc] sm:$0xf]
  %v1283 = vld [vmem:[#allocation6 + $0x10] sm:$0xf]
  %v1284 = vld [vmem:[#allocation6 + $0x14] sm:$0xf]
  %v1285 = vld [vmem:[#allocation6 + $0x18] sm:$0xf]
  %v1286 = vld [vmem:[#allocation6 + $0x1c] sm:$0xf]
  %v1287 = vld [vmem:[#allocation6 + $0x20] sm:$0xf]
  %v1288 = vld [vmem:[#allocation6 + $0x24] sm:$0xf]
  %v1289 = vld [vmem:[#allocation6 + $0x28] sm:$0xf]
  %v1290 = vld [vmem:[#allocation6 + $0x2c] sm:$0xf]
  %v1291 = vld [vmem:[#allocation6 + $0x30] sm:$0xf]
  %v1292 = vld [vmem:[#allocation6 + $0x34] sm:$0xf]
  %v1293 = vld [vmem:[#allocation6 + $0x38] sm:$0xf]
  %v1294 = vld [vmem:[#allocation6 + $0x3c] sm:$0xf]
  %v1311 = vunpack.c.l.b16 %v1279
  %v1312 = vunpack.c.l.b16 %v1280
  %v1313 = vunpack.c.l.b16 %v1281
  %v1314 = vunpack.c.l.b16 %v1282
  %v1315 = vunpack.c.l.b16 %v1283
  %v1316 = vunpack.c.l.b16 %v1284
  %v1317 = vunpack.c.l.b16 %v1285
  %v1318 = vunpack.c.l.b16 %v1286
  %v1319 = vunpack.c.l.b16 %v1287
  %v1320 = vunpack.c.l.b16 %v1288
  %v1321 = vunpack.c.l.b16 %v1289
  %v1322 = vunpack.c.l.b16 %v1290
  %v1323 = vunpack.c.l.b16 %v1291
  %v1324 = vunpack.c.l.b16 %v1292
  %v1325 = vunpack.c.l.b16 %v1293
  %v1326 = vunpack.c.l.b16 %v1294
  %v1327 = vpack.c.b16 %v1312, %v1311
  %v1328 = vpack.c.b16 %v1314, %v1313
  %v1329 = vpack.c.b16 %v1316, %v1315
  %v1330 = vpack.c.b16 %v1318, %v1317
  %v1331 = vpack.c.b16 %v1320, %v1319
  %v1332 = vpack.c.b16 %v1322, %v1321
  %v1333 = vpack.c.b16 %v1324, %v1323
  %v1334 = vpack.c.b16 %v1326, %v1325
  %1343 = vmatpush.bf16.msra.mxu0 %v1334
  %1344 = vmatpush.bf16.msra.mxu0 %v1333
  %1345 = vmatpush.bf16.msra.mxu0 %v1332
  %1346 = vmatpush.bf16.msra.mxu0 %v1331
  %1347 = vmatpush.bf16.msra.mxu0 %v1330
  %1348 = vmatpush.bf16.msra.mxu0 %v1329
  %1349 = vmatpush.bf16.msra.mxu0 %v1328
  %1350 = vmatpush.bf16.msra.mxu0 %v1327
  %1351 = vmatmul.bf16.gmra.mxu0 %v1278
  %v1352 = vpop.f32.mrf.mxu0
  %v1353 = vadd.f32 0.0, %v1352
  %v1354 = vpop.f32.mrf.mxu0
  %v1355 = vadd.f32 0.0, %v1354
  %1356 = vdwg.mxu0
  %v1357 = vadd.f32 %v995, %v1353
  %v1358 = vadd.f32 %v997, %v1355
  %1359 = vset.pattern.permute.xlu0 1
  %1360 = vperm.xlu0 %1359, %v21
  %v1361 = vpop.permute.xlu0 %1360
  %1363 = vset.pattern.permute.xlu0 1
  %1364 = vperm.xlu0 %1363, %v22
  %v1365 = vpop.permute.xlu0 %1364
  %v1367 = vadd.f32 %v1357, %v1361
  %v1368 = vadd.f32 %v1358, %v1365
  %1369 = vst [vmem:[#allocation2] sm:$0xff] %v1367
  %1370 = vst [vmem:[#allocation2 + $0x8] sm:$0xff] %v1368
  %1371 = vadd.xlane.f32.xlu0 %v1367
  %v1372 = vpop.xlane.xlu0 %1371
  %1373 = vadd.xlane.f32.xlu0 %v1368
  %v1374 = vpop.xlane.xlu0 %1373
  %v1375 = vadd.f32 %v1372, 0.0
  %v1376 = vadd.f32 %v1374, 0.0
  %v1377 = vmul.f32 %v1367, %v1367
  %v1378 = vmul.f32 %v1368, %v1368
  %1379 = vadd.xlane.f32.xlu0 %v1377
  %v1380 = vpop.xlane.xlu0 %1379
  %1381 = vadd.xlane.f32.xlu0 %v1378
  %v1382 = vpop.xlane.xlu0 %1381
  %v1383 = vadd.f32 %v1380, 0.0
  %v1384 = vadd.f32 %v1382, 0.0
  %s1385 = scalar_lea.vmem %s0, 16
  %v1386 = vld [vmem:[%s1385] sm:$0xff]
  %v1387 = vld [vmem:[%s1385 + $0x8] sm:$0xff]
  %v1388 = vpack.c.bf16 %v1387, %v1386
  %1389 = vmatpush.bf16.msra.mxu0 0
  %1390 = vmatpush.bf16.msra.mxu0 0
  %1391 = vmatpush.bf16.msra.mxu0 0
  %1392 = vmatpush.bf16.msra.mxu0 0
  %1393 = vmatpush.bf16.msra.mxu0 0
  %1394 = vmatpush.bf16.msra.mxu0 0
  %1395 = vmatpush.bf16.msra.mxu0 0
  %1396 = vmatpush.bf16.msra.mxu0 %v1388
  %1397 = vmatmul.bf16.gmra.mxu0 %v178
  %v1398 = vpop.f32.mrf.mxu0
  %v1399 = vadd.f32 %v81, %v1398
  %v1400 = vpop.f32.mrf.mxu0
  %v1401 = vadd.f32 %v86, %v1400
  %1402 = vmatmul.bf16.gmra.mxu0 %v181
  %v1403 = vpop.f32.mrf.mxu0
  %v1404 = vadd.f32 %v91, %v1403
  %v1405 = vpop.f32.mrf.mxu0
  %v1406 = vadd.f32 %v96, %v1405
  %1407 = vmatmul.bf16.gmra.mxu0 %v184
  %v1408 = vpop.f32.mrf.mxu0
  %v1409 = vadd.f32 %v101, %v1408
  %v1410 = vpop.f32.mrf.mxu0
  %v1411 = vadd.f32 %v106, %v1410
  %1412 = vmatmul.bf16.gmra.mxu0 %v187
  %v1413 = vpop.f32.mrf.mxu0
  %v1414 = vadd.f32 %v111, %v1413
  %v1415 = vpop.f32.mrf.mxu0
  %v1416 = vadd.f32 %v116, %v1415
  %1417 = vmatmul.bf16.gmra.mxu0 %v190
  %v1418 = vpop.f32.mrf.mxu0
  %v1419 = vadd.f32 %v121, %v1418
  %v1420 = vpop.f32.mrf.mxu0
  %v1421 = vadd.f32 %v126, %v1420
  %1422 = vmatmul.bf16.gmra.mxu0 %v193
  %v1423 = vpop.f32.mrf.mxu0
  %v1424 = vadd.f32 %v131, %v1423
  %v1425 = vpop.f32.mrf.mxu0
  %v1426 = vadd.f32 %v136, %v1425
  %1427 = vmatmul.bf16.gmra.mxu0 %v196
  %v1428 = vpop.f32.mrf.mxu0
  %v1429 = vadd.f32 %v141, %v1428
  %v1430 = vpop.f32.mrf.mxu0
  %1431 = vdwg.mxu0
  %1432 = vxpose.xlu0.b32.start [1/16] %v1399, 128
  %1433 = vxpose.xlu0.b32.cont [2/16] %v1401, 128
  %1434 = vxpose.xlu0.b32.cont [3/16] %v1404, 128
  %1435 = vxpose.xlu0.b32.cont [4/16] 0.0, 128
  %1436 = vxpose.xlu0.b32.cont [5/16] 0.0, 128
  %1437 = vxpose.xlu0.b32.cont [6/16] 0.0, 128
  %1438 = vxpose.xlu0.b32.cont [7/16] 0.0, 128
  %1439 = vxpose.xlu0.b32.cont [8/16] 0.0, 128
  %1440 = vxpose.xlu0.b32.cont [9/16] 0.0, 128
  %1441 = vxpose.xlu0.b32.cont [10/16] 0.0, 128
  %1442 = vxpose.xlu0.b32.cont [11/16] 0.0, 128
  %1443 = vxpose.xlu0.b32.cont [12/16] 0.0, 128
  %1444 = vxpose.xlu0.b32.cont [13/16] 0.0, 128
  %1445 = vxpose.xlu0.b32.cont [14/16] 0.0, 128
  %1446 = vxpose.xlu0.b32.cont [15/16] 0.0, 128
  %1447 = vxpose.xlu0.b32.end [16/16] 0.0, 128
  %v1448 = vpop.trf.xlu0
  %v1449 = vpop.trf.xlu0
  %v1450 = vpop.trf.xlu0
  %v1451 = vpop.trf.xlu0
  %v1452 = vpop.trf.xlu0
  %v1453 = vpop.trf.xlu0
  %v1454 = vpop.trf.xlu0
  %v1455 = vpop.trf.xlu0
  %v1456 = vpop.trf.xlu0
  %v1457 = vpop.trf.xlu0
  %v1458 = vpop.trf.xlu0
  %v1459 = vpop.trf.xlu0
  %v1460 = vpop.trf.xlu0
  %v1461 = vpop.trf.xlu0
  %v1462 = vpop.trf.xlu0
  %v1463 = vpop.trf.xlu0
  %v1464 = vpack.c.bf16 %v1449, %v1448
  %v1465 = vpack.c.bf16 %v1451, %v1450
  %v1466 = vpack.c.bf16 %v1453, %v1452
  %v1467 = vpack.c.bf16 %v1455, %v1454
  %v1468 = vpack.c.bf16 %v1457, %v1456
  %v1469 = vpack.c.bf16 %v1459, %v1458
  %v1470 = vpack.c.bf16 %v1461, %v1460
  %v1471 = vpack.c.bf16 %v1463, %v1462
  %v1472 = vpack.c.bf16 %v1406, %v1406
  %v1474 = vsel %vm282, %v1464, 0
  %v1477 = vsel %vm282, %v1465, 0
  %v1480 = vsel %vm282, %v1466, 0
  %v1483 = vsel %vm282, %v1467, 0
  %v1486 = vsel %vm282, %v1468, 0
  %v1489 = vsel %vm282, %v1469, 0
  %v1492 = vsel %vm282, %v1470, 0
  %v1495 = vsel %vm282, %v1471, 0
  %v1498 = vsel %vm307, %v1472, 0
  %1500 = vmatpush.bf16.msra.mxu0 0
  %1501 = vmatpush.bf16.msra.mxu0 0
  %1502 = vmatpush.bf16.msra.mxu0 0
  %1503 = vmatpush.bf16.msra.mxu0 0
  %1504 = vmatpush.bf16.msra.mxu0 0
  %1505 = vmatpush.bf16.msra.mxu0 0
  %1506 = vmatpush.bf16.msra.mxu0 0
  %1507 = vmatpush.bf16.msra.mxu0 %v1498
  %1508 = vmatmul.bf16.gmra.mxu0 %v1474
  %v1509 = vpop.f32.mrf.mxu0
  %v1510 = vadd.f32 0.0, %v1509
  %v1511 = vpop.f32.mrf.mxu0
  %v1512 = vadd.f32 0.0, %v1511
  %1513 = vmatmul.bf16.gmra.mxu0 %v1477
  %v1514 = vpop.f32.mrf.mxu0
  %v1515 = vadd.f32 0.0, %v1514
  %v1516 = vpop.f32.mrf.mxu0
  %v1517 = vadd.f32 0.0, %v1516
  %1518 = vmatmul.bf16.gmra.mxu0 %v1480
  %v1519 = vpop.f32.mrf.mxu0
  %v1520 = vadd.f32 0.0, %v1519
  %v1521 = vpop.f32.mrf.mxu0
  %v1522 = vadd.f32 0.0, %v1521
  %1523 = vmatmul.bf16.gmra.mxu0 %v1483
  %v1524 = vpop.f32.mrf.mxu0
  %v1525 = vadd.f32 0.0, %v1524
  %v1526 = vpop.f32.mrf.mxu0
  %v1527 = vadd.f32 0.0, %v1526
  %1528 = vmatmul.bf16.gmra.mxu0 %v1486
  %v1529 = vpop.f32.mrf.mxu0
  %v1530 = vadd.f32 0.0, %v1529
  %v1531 = vpop.f32.mrf.mxu0
  %v1532 = vadd.f32 0.0, %v1531
  %1533 = vmatmul.bf16.gmra.mxu0 %v1489
  %v1534 = vpop.f32.mrf.mxu0
  %v1535 = vadd.f32 0.0, %v1534
  %v1536 = vpop.f32.mrf.mxu0
  %v1537 = vadd.f32 0.0, %v1536
  %1538 = vmatmul.bf16.gmra.mxu0 %v1492
  %v1539 = vpop.f32.mrf.mxu0
  %v1540 = vadd.f32 0.0, %v1539
  %v1541 = vpop.f32.mrf.mxu0
  %v1542 = vadd.f32 0.0, %v1541
  %1543 = vmatmul.bf16.gmra.mxu0 %v1495
  %v1544 = vpop.f32.mrf.mxu0
  %v1545 = vadd.f32 0.0, %v1544
  %v1546 = vpop.f32.mrf.mxu0
  %v1547 = vadd.f32 0.0, %v1546
  %1548 = vdwg.mxu0
  %1551 = vrot.lane.b32.xlu0 %v1515, 112
  %v1552 = vpop.permute.xlu0 %1551
  %1553 = vrot.lane.b32.xlu0 %v1517, 112
  %v1554 = vpop.permute.xlu0 %1553
  %v1557 = vadd.f32 %v1510, %v1552
  %v1558 = vadd.f32 %v1512, %v1554
  %1561 = vrot.lane.b32.xlu0 %v1520, 96
  %v1562 = vpop.permute.xlu0 %1561
  %1563 = vrot.lane.b32.xlu0 %v1522, 96
  %v1564 = vpop.permute.xlu0 %1563
  %v1567 = vadd.f32 %v1557, %v1562
  %v1568 = vadd.f32 %v1558, %v1564
  %1571 = vrot.lane.b32.xlu0 %v1525, 80
  %v1572 = vpop.permute.xlu0 %1571
  %1573 = vrot.lane.b32.xlu0 %v1527, 80
  %v1574 = vpop.permute.xlu0 %1573
  %v1577 = vadd.f32 %v1567, %v1572
  %v1578 = vadd.f32 %v1568, %v1574
  %1581 = vrot.lane.b32.xlu0 %v1530, 64
  %v1582 = vpop.permute.xlu0 %1581
  %1583 = vrot.lane.b32.xlu0 %v1532, 64
  %v1584 = vpop.permute.xlu0 %1583
  %v1587 = vadd.f32 %v1577, %v1582
  %v1588 = vadd.f32 %v1578, %v1584
  %1591 = vrot.lane.b32.xlu0 %v1535, 48
  %v1592 = vpop.permute.xlu0 %1591
  %1593 = vrot.lane.b32.xlu0 %v1537, 48
  %v1594 = vpop.permute.xlu0 %1593
  %v1597 = vadd.f32 %v1587, %v1592
  %v1598 = vadd.f32 %v1588, %v1594
  %1601 = vrot.lane.b32.xlu0 %v1540, 32
  %v1602 = vpop.permute.xlu0 %1601
  %1603 = vrot.lane.b32.xlu0 %v1542, 32
  %v1604 = vpop.permute.xlu0 %1603
  %v1607 = vadd.f32 %v1597, %v1602
  %v1608 = vadd.f32 %v1598, %v1604
  %1611 = vrot.lane.b32.xlu0 %v1545, 16
  %v1612 = vpop.permute.xlu0 %1611
  %1613 = vrot.lane.b32.xlu0 %v1547, 16
  %v1614 = vpop.permute.xlu0 %1613
  %v1617 = vadd.f32 %v1607, %v1612
  %v1618 = vadd.f32 %v1608, %v1614
  %v1619 = vmul.f32 %v1617, 0.03125
  %v1620 = vmul.f32 %v1618, 0.03125
  %v1621 = vsel %vm176, %v1619, -inf
  %v1622 = vsel %vm176, %v1620, -inf
  %v1623 = vmax.f32 %v1621, %v1622
  %v1624 = vrot.slane %v1623, 4
  %v1625 = vmax.f32 %v1623, %v1624
  %v1626 = vrot.slane %v1625, 2
  %v1627 = vmax.f32 %v1625, %v1626
  %v1628 = vrot.slane %v1627, 1
  %v1629 = vmax.f32 %v1627, %v1628
  %v1630 = vsub.f32 %v1619, %v1629
  %v1631 = vsub.f32 %v1620, %v1629
  %v1632 = vmul.f32 %v1630, 1.442695
  %v1633 = vpow.pop %v1632
  %v1634 = vmul.f32 %v1631, 1.442695
  %v1635 = vpow.pop %v1634
  %v1636 = vsel %vm176, %v1633, 0.0
  %v1637 = vsel %vm176, %v1635, 0.0
  %v1638 = vadd.f32 %v1636, %v1637
  %v1639 = vrot.slane %v1638, 4
  %v1640 = vadd.f32 %v1638, %v1639
  %v1641 = vrot.slane %v1640, 2
  %v1642 = vadd.f32 %v1640, %v1641
  %v1643 = vrot.slane %v1642, 1
  %v1644 = vadd.f32 %v1642, %v1643
  %v1645 = vrcp.pop %v1644
  %v1646 = vmul.f32 %v1644, %v1645
  %v1647 = vsub.f32 1.0, %v1646
  %v1648 = vmul.f32 %v1645, %v1647
  %v1649 = vadd.f32 %v1645, %v1648
  %vm1650 = vweird.f32 %v1644
  %vm1651 = vweird.f32 %v1645
  %vm1652 = vmor %vm1650, %vm1651
  %v1653 = vsel %vm1652, %v1645, %v1649
  %v1654 = vand.u32 2147483647, %v1644
  %vm1655 = vcmp.eq.f32.partialorder %v1654, 8.507059e+37
  %v1656 = vand.u32 %v1644, 2147483648
  %v1657 = vor.u32 1.1754944e-38, %v1656
  %v1658 = vsel %vm1655, %v1657, %v1653
  %v1659 = vmul.f32 %v1633, %v1658
  %v1660 = vmul.f32 %v1635, %v1658
  %v1661 = vsel %vm472, %v1414, 0.0
  %1662 = vadd.xlane.f32.xlu0 %v1661
  %v1663 = vpop.xlane.xlu0 %1662
  %v1664 = vmul.f32 %v1663, 0.0078125
  %v1665 = vperm.slane %v1664, 0
  %v1666 = vmul.f32 %v1665, %v1659
  %v1667 = vmul.f32 %v1665, %v1660
  %v1668 = vld [vmem:[%s4] sm:$0xff]
  %v1669 = vld [vmem:[%s4 + $0x8] sm:$0xff]
  %v1670 = vadd.f32 %v1666, %v1668
  %v1671 = vadd.f32 %v1667, %v1669
  %v1672 = vpack.c.bf16 %v1670, %v1670
  %v1673 = vpack.c.bf16 %v1671, %v1671
  %1674 = vst.msk [vmem:[#allocation6] sm:$0xf] %vm486, %v1672
  %1675 = vst.msk [vmem:[#allocation6 + $0x4] sm:$0xf] %vm486, %v1673
  %1678 = vrot.lane.b32.xlu0 %v1672, 16
  %v1679 = vpop.permute.xlu0 %1678
  %1680 = vrot.lane.b32.xlu0 %v1673, 16
  %v1681 = vpop.permute.xlu0 %1680
  %1684 = vst.msk [vmem:[#allocation6 + $0x8] sm:$0xf] %vm497, %v1679
  %1685 = vst.msk [vmem:[#allocation6 + $0xc] sm:$0xf] %vm497, %v1681
  %1686 = vrot.lane.b32.xlu0 %v1672, 32
  %v1687 = vpop.permute.xlu0 %1686
  %1688 = vrot.lane.b32.xlu0 %v1673, 32
  %v1689 = vpop.permute.xlu0 %1688
  %1692 = vst.msk [vmem:[#allocation6 + $0x10] sm:$0xf] %vm506, %v1687
  %1693 = vst.msk [vmem:[#allocation6 + $0x14] sm:$0xf] %vm506, %v1689
  %1694 = vrot.lane.b32.xlu0 %v1672, 48
  %v1695 = vpop.permute.xlu0 %1694
  %1696 = vrot.lane.b32.xlu0 %v1673, 48
  %v1697 = vpop.permute.xlu0 %1696
  %1700 = vst.msk [vmem:[#allocation6 + $0x18] sm:$0xf] %vm515, %v1695
  %1701 = vst.msk [vmem:[#allocation6 + $0x1c] sm:$0xf] %vm515, %v1697
  %1702 = vrot.lane.b32.xlu0 %v1672, 64
  %v1703 = vpop.permute.xlu0 %1702
  %1704 = vrot.lane.b32.xlu0 %v1673, 64
  %v1705 = vpop.permute.xlu0 %1704
  %1708 = vst.msk [vmem:[#allocation6 + $0x20] sm:$0xf] %vm524, %v1703
  %1709 = vst.msk [vmem:[#allocation6 + $0x24] sm:$0xf] %vm524, %v1705
  %1710 = vrot.lane.b32.xlu0 %v1672, 80
  %v1711 = vpop.permute.xlu0 %1710
  %1712 = vrot.lane.b32.xlu0 %v1673, 80
  %v1713 = vpop.permute.xlu0 %1712
  %1716 = vst.msk [vmem:[#allocation6 + $0x28] sm:$0xf] %vm533, %v1711
  %1717 = vst.msk [vmem:[#allocation6 + $0x2c] sm:$0xf] %vm533, %v1713
  %1718 = vrot.lane.b32.xlu0 %v1672, 96
  %v1719 = vpop.permute.xlu0 %1718
  %1720 = vrot.lane.b32.xlu0 %v1673, 96
  %v1721 = vpop.permute.xlu0 %1720
  %1724 = vst.msk [vmem:[#allocation6 + $0x30] sm:$0xf] %vm542, %v1719
  %1725 = vst.msk [vmem:[#allocation6 + $0x34] sm:$0xf] %vm542, %v1721
  %1726 = vrot.lane.b32.xlu0 %v1672, 112
  %v1727 = vpop.permute.xlu0 %1726
  %1728 = vrot.lane.b32.xlu0 %v1673, 112
  %v1729 = vpop.permute.xlu0 %1728
  %1732 = vst.msk [vmem:[#allocation6 + $0x38] sm:$0xf] %vm551, %v1727
  %1733 = vst.msk [vmem:[#allocation6 + $0x3c] sm:$0xf] %vm551, %v1729
  %v1734 = vpack.c.bf16 %v1419, %v1416
  %v1735 = vld [vmem:[#allocation6] sm:$0xf]
  %v1736 = vld [vmem:[#allocation6 + $0x4] sm:$0xf]
  %v1737 = vld [vmem:[#allocation6 + $0x8] sm:$0xf]
  %v1738 = vld [vmem:[#allocation6 + $0xc] sm:$0xf]
  %v1739 = vld [vmem:[#allocation6 + $0x10] sm:$0xf]
  %v1740 = vld [vmem:[#allocation6 + $0x14] sm:$0xf]
  %v1741 = vld [vmem:[#allocation6 + $0x18] sm:$0xf]
  %v1742 = vld [vmem:[#allocation6 + $0x1c] sm:$0xf]
  %v1743 = vld [vmem:[#allocation6 + $0x20] sm:$0xf]
  %v1744 = vld [vmem:[#allocation6 + $0x24] sm:$0xf]
  %v1745 = vld [vmem:[#allocation6 + $0x28] sm:$0xf]
  %v1746 = vld [vmem:[#allocation6 + $0x2c] sm:$0xf]
  %v1747 = vld [vmem:[#allocation6 + $0x30] sm:$0xf]
  %v1748 = vld [vmem:[#allocation6 + $0x34] sm:$0xf]
  %v1749 = vld [vmem:[#allocation6 + $0x38] sm:$0xf]
  %v1750 = vld [vmem:[#allocation6 + $0x3c] sm:$0xf]
  %v1751 = vpack.c.bf16 %v1409, %v1409
  %1760 = vrot.lane.b32.xlu0 %v1464, 120
  %v1761 = vpop.permute.xlu0 %1760
  %1762 = vrot.lane.b32.xlu0 %v1465, 120
  %v1763 = vpop.permute.xlu0 %1762
  %1764 = vrot.lane.b32.xlu0 %v1466, 120
  %v1765 = vpop.permute.xlu0 %1764
  %1766 = vrot.lane.b32.xlu0 %v1467, 120
  %v1767 = vpop.permute.xlu0 %1766
  %1768 = vrot.lane.b32.xlu0 %v1468, 120
  %v1769 = vpop.permute.xlu0 %1768
  %1770 = vrot.lane.b32.xlu0 %v1469, 120
  %v1771 = vpop.permute.xlu0 %1770
  %1772 = vrot.lane.b32.xlu0 %v1470, 120
  %v1773 = vpop.permute.xlu0 %1772
  %1774 = vrot.lane.b32.xlu0 %v1471, 120
  %v1775 = vpop.permute.xlu0 %1774
  %v1777 = vsel %vm282, %v1761, 0
  %v1780 = vsel %vm282, %v1763, 0
  %v1783 = vsel %vm282, %v1765, 0
  %v1786 = vsel %vm282, %v1767, 0
  %v1789 = vsel %vm282, %v1769, 0
  %v1792 = vsel %vm282, %v1771, 0
  %v1795 = vsel %vm282, %v1773, 0
  %v1798 = vsel %vm282, %v1775, 0
  %v1801 = vsel %vm307, %v1751, 0
  %1803 = vmatpush.bf16.msra.mxu0 0
  %1804 = vmatpush.bf16.msra.mxu0 0
  %1805 = vmatpush.bf16.msra.mxu0 0
  %1806 = vmatpush.bf16.msra.mxu0 0
  %1807 = vmatpush.bf16.msra.mxu0 0
  %1808 = vmatpush.bf16.msra.mxu0 0
  %1809 = vmatpush.bf16.msra.mxu0 0
  %1810 = vmatpush.bf16.msra.mxu0 %v1801
  %1811 = vmatmul.bf16.gmra.mxu0 %v1777
  %v1812 = vpop.f32.mrf.mxu0
  %v1813 = vadd.f32 0.0, %v1812
  %v1814 = vpop.f32.mrf.mxu0
  %v1815 = vadd.f32 0.0, %v1814
  %1816 = vmatmul.bf16.gmra.mxu0 %v1780
  %v1817 = vpop.f32.mrf.mxu0
  %v1818 = vadd.f32 0.0, %v1817
  %v1819 = vpop.f32.mrf.mxu0
  %v1820 = vadd.f32 0.0, %v1819
  %1821 = vmatmul.bf16.gmra.mxu0 %v1783
  %v1822 = vpop.f32.mrf.mxu0
  %v1823 = vadd.f32 0.0, %v1822
  %v1824 = vpop.f32.mrf.mxu0
  %v1825 = vadd.f32 0.0, %v1824
  %1826 = vmatmul.bf16.gmra.mxu0 %v1786
  %v1827 = vpop.f32.mrf.mxu0
  %v1828 = vadd.f32 0.0, %v1827
  %v1829 = vpop.f32.mrf.mxu0
  %v1830 = vadd.f32 0.0, %v1829
  %1831 = vmatmul.bf16.gmra.mxu0 %v1789
  %v1832 = vpop.f32.mrf.mxu0
  %v1833 = vadd.f32 0.0, %v1832
  %v1834 = vpop.f32.mrf.mxu0
  %v1835 = vadd.f32 0.0, %v1834
  %1836 = vmatmul.bf16.gmra.mxu0 %v1792
  %v1837 = vpop.f32.mrf.mxu0
  %v1838 = vadd.f32 0.0, %v1837
  %v1839 = vpop.f32.mrf.mxu0
  %v1840 = vadd.f32 0.0, %v1839
  %1841 = vmatmul.bf16.gmra.mxu0 %v1795
  %v1842 = vpop.f32.mrf.mxu0
  %v1843 = vadd.f32 0.0, %v1842
  %v1844 = vpop.f32.mrf.mxu0
  %v1845 = vadd.f32 0.0, %v1844
  %1846 = vmatmul.bf16.gmra.mxu0 %v1798
  %v1847 = vpop.f32.mrf.mxu0
  %v1848 = vadd.f32 0.0, %v1847
  %v1849 = vpop.f32.mrf.mxu0
  %v1850 = vadd.f32 0.0, %v1849
  %1851 = vdwg.mxu0
  %1854 = vrot.lane.b32.xlu0 %v1818, 112
  %v1855 = vpop.permute.xlu0 %1854
  %1856 = vrot.lane.b32.xlu0 %v1820, 112
  %v1857 = vpop.permute.xlu0 %1856
  %v1860 = vadd.f32 %v1813, %v1855
  %v1861 = vadd.f32 %v1815, %v1857
  %1864 = vrot.lane.b32.xlu0 %v1823, 96
  %v1865 = vpop.permute.xlu0 %1864
  %1866 = vrot.lane.b32.xlu0 %v1825, 96
  %v1867 = vpop.permute.xlu0 %1866
  %v1870 = vadd.f32 %v1860, %v1865
  %v1871 = vadd.f32 %v1861, %v1867
  %1874 = vrot.lane.b32.xlu0 %v1828, 80
  %v1875 = vpop.permute.xlu0 %1874
  %1876 = vrot.lane.b32.xlu0 %v1830, 80
  %v1877 = vpop.permute.xlu0 %1876
  %v1880 = vadd.f32 %v1870, %v1875
  %v1881 = vadd.f32 %v1871, %v1877
  %1884 = vrot.lane.b32.xlu0 %v1833, 64
  %v1885 = vpop.permute.xlu0 %1884
  %1886 = vrot.lane.b32.xlu0 %v1835, 64
  %v1887 = vpop.permute.xlu0 %1886
  %v1890 = vadd.f32 %v1880, %v1885
  %v1891 = vadd.f32 %v1881, %v1887
  %1894 = vrot.lane.b32.xlu0 %v1838, 48
  %v1895 = vpop.permute.xlu0 %1894
  %1896 = vrot.lane.b32.xlu0 %v1840, 48
  %v1897 = vpop.permute.xlu0 %1896
  %v1900 = vadd.f32 %v1890, %v1895
  %v1901 = vadd.f32 %v1891, %v1897
  %1904 = vrot.lane.b32.xlu0 %v1843, 32
  %v1905 = vpop.permute.xlu0 %1904
  %1906 = vrot.lane.b32.xlu0 %v1845, 32
  %v1907 = vpop.permute.xlu0 %1906
  %v1910 = vadd.f32 %v1900, %v1905
  %v1911 = vadd.f32 %v1901, %v1907
  %1914 = vrot.lane.b32.xlu0 %v1848, 16
  %v1915 = vpop.permute.xlu0 %1914
  %1916 = vrot.lane.b32.xlu0 %v1850, 16
  %v1917 = vpop.permute.xlu0 %1916
  %v1920 = vadd.f32 %v1910, %v1915
  %v1921 = vadd.f32 %v1911, %v1917
  %v1922 = vmul.f32 %v1920, 0.03125
  %v1923 = vmul.f32 %v1921, 0.03125
  %v1924 = vsel %vm176, %v1922, -inf
  %v1925 = vsel %vm176, %v1923, -inf
  %v1926 = vmax.f32 %v1924, %v1925
  %v1927 = vrot.slane %v1926, 4
  %v1928 = vmax.f32 %v1926, %v1927
  %v1929 = vrot.slane %v1928, 2
  %v1930 = vmax.f32 %v1928, %v1929
  %v1931 = vrot.slane %v1930, 1
  %v1932 = vmax.f32 %v1930, %v1931
  %v1933 = vsub.f32 %v1922, %v1932
  %v1934 = vsub.f32 %v1923, %v1932
  %v1935 = vmul.f32 %v1933, 1.442695
  %v1936 = vpow.pop %v1935
  %v1937 = vmul.f32 %v1934, 1.442695
  %v1938 = vpow.pop %v1937
  %v1939 = vsel %vm176, %v1936, 0.0
  %v1940 = vsel %vm176, %v1938, 0.0
  %v1941 = vadd.f32 %v1939, %v1940
  %v1942 = vrot.slane %v1941, 4
  %v1943 = vadd.f32 %v1941, %v1942
  %v1944 = vrot.slane %v1943, 2
  %v1945 = vadd.f32 %v1943, %v1944
  %v1946 = vrot.slane %v1945, 1
  %v1947 = vadd.f32 %v1945, %v1946
  %v1948 = vrcp.pop %v1947
  %v1949 = vmul.f32 %v1947, %v1948
  %v1950 = vsub.f32 1.0, %v1949
  %v1951 = vmul.f32 %v1948, %v1950
  %v1952 = vadd.f32 %v1948, %v1951
  %vm1953 = vweird.f32 %v1947
  %vm1954 = vweird.f32 %v1948
  %vm1955 = vmor %vm1953, %vm1954
  %v1956 = vsel %vm1955, %v1948, %v1952
  %v1957 = vand.u32 2147483647, %v1947
  %vm1958 = vcmp.eq.f32.partialorder %v1957, 8.507059e+37
  %v1959 = vand.u32 %v1947, 2147483648
  %v1960 = vor.u32 1.1754944e-38, %v1959
  %v1961 = vsel %vm1958, %v1960, %v1956
  %v1962 = vmul.f32 %v1936, %v1961
  %v1963 = vmul.f32 %v1938, %v1961
  %v1964 = vsel %vm784, %v1414, 0.0
  %1965 = vadd.xlane.f32.xlu0 %v1964
  %v1966 = vpop.xlane.xlu0 %1965
  %v1967 = vmul.f32 %v1966, 0.0078125
  %v1968 = vperm.slane %v1967, 1
  %v1969 = vmul.f32 %v1968, %v1962
  %v1970 = vmul.f32 %v1968, %v1963
  %v1971 = vld [vmem:[%s4 + $0x10] sm:$0xff]
  %v1972 = vld [vmem:[%s4 + $0x18] sm:$0xff]
  %v1973 = vadd.f32 %v1969, %v1971
  %v1974 = vadd.f32 %v1970, %v1972
  %v1975 = vpack.c.bf16 %v1973, %v1973
  %v1976 = vpack.c.bf16 %v1974, %v1974
  %1977 = vst.msk [vmem:[#allocation6] sm:$0xf] %vm486, %v1975
  %1978 = vst.msk [vmem:[#allocation6 + $0x4] sm:$0xf] %vm486, %v1976
  %1981 = vrot.lane.b32.xlu0 %v1975, 16
  %v1982 = vpop.permute.xlu0 %1981
  %1983 = vrot.lane.b32.xlu0 %v1976, 16
  %v1984 = vpop.permute.xlu0 %1983
  %1987 = vst.msk [vmem:[#allocation6 + $0x8] sm:$0xf] %vm497, %v1982
  %1988 = vst.msk [vmem:[#allocation6 + $0xc] sm:$0xf] %vm497, %v1984
  %1989 = vrot.lane.b32.xlu0 %v1975, 32
  %v1990 = vpop.permute.xlu0 %1989
  %1991 = vrot.lane.b32.xlu0 %v1976, 32
  %v1992 = vpop.permute.xlu0 %1991
  %1995 = vst.msk [vmem:[#allocation6 + $0x10] sm:$0xf] %vm506, %v1990
  %1996 = vst.msk [vmem:[#allocation6 + $0x14] sm:$0xf] %vm506, %v1992
  %1997 = vrot.lane.b32.xlu0 %v1975, 48
  %v1998 = vpop.permute.xlu0 %1997
  %1999 = vrot.lane.b32.xlu0 %v1976, 48
  %v2000 = vpop.permute.xlu0 %1999
  %2003 = vst.msk [vmem:[#allocation6 + $0x18] sm:$0xf] %vm515, %v1998
  %2004 = vst.msk [vmem:[#allocation6 + $0x1c] sm:$0xf] %vm515, %v2000
  %2005 = vrot.lane.b32.xlu0 %v1975, 64
  %v2006 = vpop.permute.xlu0 %2005
  %2007 = vrot.lane.b32.xlu0 %v1976, 64
  %v2008 = vpop.permute.xlu0 %2007
  %2011 = vst.msk [vmem:[#allocation6 + $0x20] sm:$0xf] %vm524, %v2006
  %2012 = vst.msk [vmem:[#allocation6 + $0x24] sm:$0xf] %vm524, %v2008
  %2013 = vrot.lane.b32.xlu0 %v1975, 80
  %v2014 = vpop.permute.xlu0 %2013
  %2015 = vrot.lane.b32.xlu0 %v1976, 80
  %v2016 = vpop.permute.xlu0 %2015
  %2019 = vst.msk [vmem:[#allocation6 + $0x28] sm:$0xf] %vm533, %v2014
  %2020 = vst.msk [vmem:[#allocation6 + $0x2c] sm:$0xf] %vm533, %v2016
  %2021 = vrot.lane.b32.xlu0 %v1975, 96
  %v2022 = vpop.permute.xlu0 %2021
  %2023 = vrot.lane.b32.xlu0 %v1976, 96
  %v2024 = vpop.permute.xlu0 %2023
  %2027 = vst.msk [vmem:[#allocation6 + $0x30] sm:$0xf] %vm542, %v2022
  %2028 = vst.msk [vmem:[#allocation6 + $0x34] sm:$0xf] %vm542, %v2024
  %2029 = vrot.lane.b32.xlu0 %v1975, 112
  %v2030 = vpop.permute.xlu0 %2029
  %2031 = vrot.lane.b32.xlu0 %v1976, 112
  %v2032 = vpop.permute.xlu0 %2031
  %2035 = vst.msk [vmem:[#allocation6 + $0x38] sm:$0xf] %vm551, %v2030
  %2036 = vst.msk [vmem:[#allocation6 + $0x3c] sm:$0xf] %vm551, %v2032
  %v2037 = vpack.c.bf16 %v1424, %v1421
  %v2038 = vld [vmem:[#allocation6] sm:$0xf]
  %v2039 = vld [vmem:[#allocation6 + $0x4] sm:$0xf]
  %v2040 = vld [vmem:[#allocation6 + $0x8] sm:$0xf]
  %v2041 = vld [vmem:[#allocation6 + $0xc] sm:$0xf]
  %v2042 = vld [vmem:[#allocation6 + $0x10] sm:$0xf]
  %v2043 = vld [vmem:[#allocation6 + $0x14] sm:$0xf]
  %v2044 = vld [vmem:[#allocation6 + $0x18] sm:$0xf]
  %v2045 = vld [vmem:[#allocation6 + $0x1c] sm:$0xf]
  %v2046 = vld [vmem:[#allocation6 + $0x20] sm:$0xf]
  %v2047 = vld [vmem:[#allocation6 + $0x24] sm:$0xf]
  %v2048 = vld [vmem:[#allocation6 + $0x28] sm:$0xf]
  %v2049 = vld [vmem:[#allocation6 + $0x2c] sm:$0xf]
  %v2050 = vld [vmem:[#allocation6 + $0x30] sm:$0xf]
  %v2051 = vld [vmem:[#allocation6 + $0x34] sm:$0xf]
  %v2052 = vld [vmem:[#allocation6 + $0x38] sm:$0xf]
  %v2053 = vld [vmem:[#allocation6 + $0x3c] sm:$0xf]
  %v2070 = vunpack.c.l.b16 %v2038
  %v2071 = vunpack.c.l.b16 %v2039
  %v2072 = vunpack.c.l.b16 %v2040
  %v2073 = vunpack.c.l.b16 %v2041
  %v2074 = vunpack.c.l.b16 %v2042
  %v2075 = vunpack.c.l.b16 %v2043
  %v2076 = vunpack.c.l.b16 %v2044
  %v2077 = vunpack.c.l.b16 %v2045
  %v2078 = vunpack.c.l.b16 %v2046
  %v2079 = vunpack.c.l.b16 %v2047
  %v2080 = vunpack.c.l.b16 %v2048
  %v2081 = vunpack.c.l.b16 %v2049
  %v2082 = vunpack.c.l.b16 %v2050
  %v2083 = vunpack.c.l.b16 %v2051
  %v2084 = vunpack.c.l.b16 %v2052
  %v2085 = vunpack.c.l.b16 %v2053
  %v2086 = vpack.c.b16 %v2071, %v2070
  %v2087 = vpack.c.b16 %v2073, %v2072
  %v2088 = vpack.c.b16 %v2075, %v2074
  %v2089 = vpack.c.b16 %v2077, %v2076
  %v2090 = vpack.c.b16 %v2079, %v2078
  %v2091 = vpack.c.b16 %v2081, %v2080
  %v2092 = vpack.c.b16 %v2083, %v2082
  %v2093 = vpack.c.b16 %v2085, %v2084
  %2102 = vmatpush.bf16.msra.mxu0 %v2093
  %2103 = vmatpush.bf16.msra.mxu0 %v2092
  %2104 = vmatpush.bf16.msra.mxu0 %v2091
  %2105 = vmatpush.bf16.msra.mxu0 %v2090
  %2106 = vmatpush.bf16.msra.mxu0 %v2089
  %2107 = vmatpush.bf16.msra.mxu0 %v2088
  %2108 = vmatpush.bf16.msra.mxu0 %v2087
  %2109 = vmatpush.bf16.msra.mxu0 %v2086
  %2110 = vmatmul.bf16.gmra.mxu0 %v2037
  %v2111 = vpop.f32.mrf.mxu0
  %v2112 = vadd.f32 0.0, %v2111
  %v2113 = vpop.f32.mrf.mxu0
  %v2114 = vadd.f32 0.0, %v2113
  %2115 = vdwg.mxu0
  %v2132 = vunpack.c.l.b16 %v1735
  %v2133 = vunpack.c.l.b16 %v1736
  %v2134 = vunpack.c.l.b16 %v1737
  %v2135 = vunpack.c.l.b16 %v1738
  %v2136 = vunpack.c.l.b16 %v1739
  %v2137 = vunpack.c.l.b16 %v1740
  %v2138 = vunpack.c.l.b16 %v1741
  %v2139 = vunpack.c.l.b16 %v1742
  %v2140 = vunpack.c.l.b16 %v1743
  %v2141 = vunpack.c.l.b16 %v1744
  %v2142 = vunpack.c.l.b16 %v1745
  %v2143 = vunpack.c.l.b16 %v1746
  %v2144 = vunpack.c.l.b16 %v1747
  %v2145 = vunpack.c.l.b16 %v1748
  %v2146 = vunpack.c.l.b16 %v1749
  %v2147 = vunpack.c.l.b16 %v1750
  %v2148 = vpack.c.b16 %v2133, %v2132
  %v2149 = vpack.c.b16 %v2135, %v2134
  %v2150 = vpack.c.b16 %v2137, %v2136
  %v2151 = vpack.c.b16 %v2139, %v2138
  %v2152 = vpack.c.b16 %v2141, %v2140
  %v2153 = vpack.c.b16 %v2143, %v2142
  %v2154 = vpack.c.b16 %v2145, %v2144
  %v2155 = vpack.c.b16 %v2147, %v2146
  %2164 = vmatpush.bf16.msra.mxu0 %v2155
  %2165 = vmatpush.bf16.msra.mxu0 %v2154
  %2166 = vmatpush.bf16.msra.mxu0 %v2153
  %2167 = vmatpush.bf16.msra.mxu0 %v2152
  %2168 = vmatpush.bf16.msra.mxu0 %v2151
  %2169 = vmatpush.bf16.msra.mxu0 %v2150
  %2170 = vmatpush.bf16.msra.mxu0 %v2149
  %2171 = vmatpush.bf16.msra.mxu0 %v2148
  %2172 = vmatmul.bf16.gmra.mxu0 %v1734
  %v2173 = vpop.f32.mrf.mxu0
  %v2174 = vadd.f32 %v2112, %v2173
  %v2175 = vpop.f32.mrf.mxu0
  %v2176 = vadd.f32 %v2114, %v2175
  %2177 = vdwg.mxu0
  %v2178 = vpack.c.bf16 %v1411, %v1411
  %2179 = vrot.lane.b32.xlu0 %v1464, 112
  %v2180 = vpop.permute.xlu0 %2179
  %2181 = vrot.lane.b32.xlu0 %v1465, 112
  %v2182 = vpop.permute.xlu0 %2181
  %2183 = vrot.lane.b32.xlu0 %v1466, 112
  %v2184 = vpop.permute.xlu0 %2183
  %2185 = vrot.lane.b32.xlu0 %v1467, 112
  %v2186 = vpop.permute.xlu0 %2185
  %2187 = vrot.lane.b32.xlu0 %v1468, 112
  %v2188 = vpop.permute.xlu0 %2187
  %2189 = vrot.lane.b32.xlu0 %v1469, 112
  %v2190 = vpop.permute.xlu0 %2189
  %2191 = vrot.lane.b32.xlu0 %v1470, 112
  %v2192 = vpop.permute.xlu0 %2191
  %2193 = vrot.lane.b32.xlu0 %v1471, 112
  %v2194 = vpop.permute.xlu0 %2193
  %v2196 = vsel %vm282, %v2180, 0
  %v2199 = vsel %vm282, %v2182, 0
  %v2202 = vsel %vm282, %v2184, 0
  %v2205 = vsel %vm282, %v2186, 0
  %v2208 = vsel %vm282, %v2188, 0
  %v2211 = vsel %vm282, %v2190, 0
  %v2214 = vsel %vm282, %v2192, 0
  %v2217 = vsel %vm282, %v2194, 0
  %v2220 = vsel %vm307, %v2178, 0
  %2222 = vmatpush.bf16.msra.mxu0 0
  %2223 = vmatpush.bf16.msra.mxu0 0
  %2224 = vmatpush.bf16.msra.mxu0 0
  %2225 = vmatpush.bf16.msra.mxu0 0
  %2226 = vmatpush.bf16.msra.mxu0 0
  %2227 = vmatpush.bf16.msra.mxu0 0
  %2228 = vmatpush.bf16.msra.mxu0 0
  %2229 = vmatpush.bf16.msra.mxu0 %v2220
  %2230 = vmatmul.bf16.gmra.mxu0 %v2196
  %v2231 = vpop.f32.mrf.mxu0
  %v2232 = vadd.f32 0.0, %v2231
  %v2233 = vpop.f32.mrf.mxu0
  %v2234 = vadd.f32 0.0, %v2233
  %2235 = vmatmul.bf16.gmra.mxu0 %v2199
  %v2236 = vpop.f32.mrf.mxu0
  %v2237 = vadd.f32 0.0, %v2236
  %v2238 = vpop.f32.mrf.mxu0
  %v2239 = vadd.f32 0.0, %v2238
  %2240 = vmatmul.bf16.gmra.mxu0 %v2202
  %v2241 = vpop.f32.mrf.mxu0
  %v2242 = vadd.f32 0.0, %v2241
  %v2243 = vpop.f32.mrf.mxu0
  %v2244 = vadd.f32 0.0, %v2243
  %2245 = vmatmul.bf16.gmra.mxu0 %v2205
  %v2246 = vpop.f32.mrf.mxu0
  %v2247 = vadd.f32 0.0, %v2246
  %v2248 = vpop.f32.mrf.mxu0
  %v2249 = vadd.f32 0.0, %v2248
  %2250 = vmatmul.bf16.gmra.mxu0 %v2208
  %v2251 = vpop.f32.mrf.mxu0
  %v2252 = vadd.f32 0.0, %v2251
  %v2253 = vpop.f32.mrf.mxu0
  %v2254 = vadd.f32 0.0, %v2253
  %2255 = vmatmul.bf16.gmra.mxu0 %v2211
  %v2256 = vpop.f32.mrf.mxu0
  %v2257 = vadd.f32 0.0, %v2256
  %v2258 = vpop.f32.mrf.mxu0
  %v2259 = vadd.f32 0.0, %v2258
  %2260 = vmatmul.bf16.gmra.mxu0 %v2214
  %v2261 = vpop.f32.mrf.mxu0
  %v2262 = vadd.f32 0.0, %v2261
  %v2263 = vpop.f32.mrf.mxu0
  %v2264 = vadd.f32 0.0, %v2263
  %2265 = vmatmul.bf16.gmra.mxu0 %v2217
  %v2266 = vpop.f32.mrf.mxu0
  %v2267 = vadd.f32 0.0, %v2266
  %v2268 = vpop.f32.mrf.mxu0
  %v2269 = vadd.f32 0.0, %v2268
  %2270 = vdwg.mxu0
  %2273 = vrot.lane.b32.xlu0 %v2237, 112
  %v2274 = vpop.permute.xlu0 %2273
  %2275 = vrot.lane.b32.xlu0 %v2239, 112
  %v2276 = vpop.permute.xlu0 %2275
  %v2279 = vadd.f32 %v2232, %v2274
  %v2280 = vadd.f32 %v2234, %v2276
  %2283 = vrot.lane.b32.xlu0 %v2242, 96
  %v2284 = vpop.permute.xlu0 %2283
  %2285 = vrot.lane.b32.xlu0 %v2244, 96
  %v2286 = vpop.permute.xlu0 %2285
  %v2289 = vadd.f32 %v2279, %v2284
  %v2290 = vadd.f32 %v2280, %v2286
  %2293 = vrot.lane.b32.xlu0 %v2247, 80
  %v2294 = vpop.permute.xlu0 %2293
  %2295 = vrot.lane.b32.xlu0 %v2249, 80
  %v2296 = vpop.permute.xlu0 %2295
  %v2299 = vadd.f32 %v2289, %v2294
  %v2300 = vadd.f32 %v2290, %v2296
  %2303 = vrot.lane.b32.xlu0 %v2252, 64
  %v2304 = vpop.permute.xlu0 %2303
  %2305 = vrot.lane.b32.xlu0 %v2254, 64
  %v2306 = vpop.permute.xlu0 %2305
  %v2309 = vadd.f32 %v2299, %v2304
  %v2310 = vadd.f32 %v2300, %v2306
  %2313 = vrot.lane.b32.xlu0 %v2257, 48
  %v2314 = vpop.permute.xlu0 %2313
  %2315 = vrot.lane.b32.xlu0 %v2259, 48
  %v2316 = vpop.permute.xlu0 %2315
  %v2319 = vadd.f32 %v2309, %v2314
  %v2320 = vadd.f32 %v2310, %v2316
  %2323 = vrot.lane.b32.xlu0 %v2262, 32
  %v2324 = vpop.permute.xlu0 %2323
  %2325 = vrot.lane.b32.xlu0 %v2264, 32
  %v2326 = vpop.permute.xlu0 %2325
  %v2329 = vadd.f32 %v2319, %v2324
  %v2330 = vadd.f32 %v2320, %v2326
  %2333 = vrot.lane.b32.xlu0 %v2267, 16
  %v2334 = vpop.permute.xlu0 %2333
  %2335 = vrot.lane.b32.xlu0 %v2269, 16
  %v2336 = vpop.permute.xlu0 %2335
  %v2339 = vadd.f32 %v2329, %v2334
  %v2340 = vadd.f32 %v2330, %v2336
  %v2341 = vmul.f32 %v2339, 0.03125
  %v2342 = vmul.f32 %v2340, 0.03125
  %v2343 = vsel %vm176, %v2341, -inf
  %v2344 = vsel %vm176, %v2342, -inf
  %v2345 = vmax.f32 %v2343, %v2344
  %v2346 = vrot.slane %v2345, 4
  %v2347 = vmax.f32 %v2345, %v2346
  %v2348 = vrot.slane %v2347, 2
  %v2349 = vmax.f32 %v2347, %v2348
  %v2350 = vrot.slane %v2349, 1
  %v2351 = vmax.f32 %v2349, %v2350
  %v2352 = vsub.f32 %v2341, %v2351
  %v2353 = vsub.f32 %v2342, %v2351
  %v2354 = vmul.f32 %v2352, 1.442695
  %v2355 = vpow.pop %v2354
  %v2356 = vmul.f32 %v2353, 1.442695
  %v2357 = vpow.pop %v2356
  %v2358 = vsel %vm176, %v2355, 0.0
  %v2359 = vsel %vm176, %v2357, 0.0
  %v2360 = vadd.f32 %v2358, %v2359
  %v2361 = vrot.slane %v2360, 4
  %v2362 = vadd.f32 %v2360, %v2361
  %v2363 = vrot.slane %v2362, 2
  %v2364 = vadd.f32 %v2362, %v2363
  %v2365 = vrot.slane %v2364, 1
  %v2366 = vadd.f32 %v2364, %v2365
  %v2367 = vrcp.pop %v2366
  %v2368 = vmul.f32 %v2366, %v2367
  %v2369 = vsub.f32 1.0, %v2368
  %v2370 = vmul.f32 %v2367, %v2369
  %v2371 = vadd.f32 %v2367, %v2370
  %vm2372 = vweird.f32 %v2366
  %vm2373 = vweird.f32 %v2367
  %vm2374 = vmor %vm2372, %vm2373
  %v2375 = vsel %vm2374, %v2367, %v2371
  %v2376 = vand.u32 2147483647, %v2366
  %vm2377 = vcmp.eq.f32.partialorder %v2376, 8.507059e+37
  %v2378 = vand.u32 %v2366, 2147483648
  %v2379 = vor.u32 1.1754944e-38, %v2378
  %v2380 = vsel %vm2377, %v2379, %v2375
  %v2381 = vmul.f32 %v2355, %v2380
  %v2382 = vmul.f32 %v2357, %v2380
  %v2383 = vsel %vm1204, %v1414, 0.0
  %2384 = vadd.xlane.f32.xlu0 %v2383
  %v2385 = vpop.xlane.xlu0 %2384
  %v2386 = vmul.f32 %v2385, 0.0078125
  %v2387 = vperm.slane %v2386, 2
  %v2388 = vmul.f32 %v2387, %v2381
  %v2389 = vmul.f32 %v2387, %v2382
  %v2390 = vld [vmem:[%s4 + $0x20] sm:$0xff]
  %v2391 = vld [vmem:[%s4 + $0x28] sm:$0xff]
  %v2392 = vadd.f32 %v2388, %v2390
  %v2393 = vadd.f32 %v2389, %v2391
  %v2394 = vpack.c.bf16 %v2392, %v2392
  %v2395 = vpack.c.bf16 %v2393, %v2393
  %2396 = vst.msk [vmem:[#allocation6] sm:$0xf] %vm486, %v2394
  %2397 = vst.msk [vmem:[#allocation6 + $0x4] sm:$0xf] %vm486, %v2395
  %2400 = vrot.lane.b32.xlu0 %v2394, 16
  %v2401 = vpop.permute.xlu0 %2400
  %2402 = vrot.lane.b32.xlu0 %v2395, 16
  %v2403 = vpop.permute.xlu0 %2402
  %2406 = vst.msk [vmem:[#allocation6 + $0x8] sm:$0xf] %vm497, %v2401
  %2407 = vst.msk [vmem:[#allocation6 + $0xc] sm:$0xf] %vm497, %v2403
  %2408 = vrot.lane.b32.xlu0 %v2394, 32
  %v2409 = vpop.permute.xlu0 %2408
  %2410 = vrot.lane.b32.xlu0 %v2395, 32
  %v2411 = vpop.permute.xlu0 %2410
  %2414 = vst.msk [vmem:[#allocation6 + $0x10] sm:$0xf] %vm506, %v2409
  %2415 = vst.msk [vmem:[#allocation6 + $0x14] sm:$0xf] %vm506, %v2411
  %2416 = vrot.lane.b32.xlu0 %v2394, 48
  %v2417 = vpop.permute.xlu0 %2416
  %2418 = vrot.lane.b32.xlu0 %v2395, 48
  %v2419 = vpop.permute.xlu0 %2418
  %2422 = vst.msk [vmem:[#allocation6 + $0x18] sm:$0xf] %vm515, %v2417
  %2423 = vst.msk [vmem:[#allocation6 + $0x1c] sm:$0xf] %vm515, %v2419
  %2424 = vrot.lane.b32.xlu0 %v2394, 64
  %v2425 = vpop.permute.xlu0 %2424
  %2426 = vrot.lane.b32.xlu0 %v2395, 64
  %v2427 = vpop.permute.xlu0 %2426
  %2430 = vst.msk [vmem:[#allocation6 + $0x20] sm:$0xf] %vm524, %v2425
  %2431 = vst.msk [vmem:[#allocation6 + $0x24] sm:$0xf] %vm524, %v2427
  %2432 = vrot.lane.b32.xlu0 %v2394, 80
  %v2433 = vpop.permute.xlu0 %2432
  %2434 = vrot.lane.b32.xlu0 %v2395, 80
  %v2435 = vpop.permute.xlu0 %2434
  %2438 = vst.msk [vmem:[#allocation6 + $0x28] sm:$0xf] %vm533, %v2433
  %2439 = vst.msk [vmem:[#allocation6 + $0x2c] sm:$0xf] %vm533, %v2435
  %2440 = vrot.lane.b32.xlu0 %v2394, 96
  %v2441 = vpop.permute.xlu0 %2440
  %2442 = vrot.lane.b32.xlu0 %v2395, 96
  %v2443 = vpop.permute.xlu0 %2442
  %2446 = vst.msk [vmem:[#allocation6 + $0x30] sm:$0xf] %vm542, %v2441
  %2447 = vst.msk [vmem:[#allocation6 + $0x34] sm:$0xf] %vm542, %v2443
  %2448 = vrot.lane.b32.xlu0 %v2394, 112
  %v2449 = vpop.permute.xlu0 %2448
  %2450 = vrot.lane.b32.xlu0 %v2395, 112
  %v2451 = vpop.permute.xlu0 %2450
  %2454 = vst.msk [vmem:[#allocation6 + $0x38] sm:$0xf] %vm551, %v2449
  %2455 = vst.msk [vmem:[#allocation6 + $0x3c] sm:$0xf] %vm551, %v2451
  %v2456 = vpack.c.bf16 %v1429, %v1426
  %v2457 = vld [vmem:[#allocation6] sm:$0xf]
  %v2458 = vld [vmem:[#allocation6 + $0x4] sm:$0xf]
  %v2459 = vld [vmem:[#allocation6 + $0x8] sm:$0xf]
  %v2460 = vld [vmem:[#allocation6 + $0xc] sm:$0xf]
  %v2461 = vld [vmem:[#allocation6 + $0x10] sm:$0xf]
  %v2462 = vld [vmem:[#allocation6 + $0x14] sm:$0xf]
  %v2463 = vld [vmem:[#allocation6 + $0x18] sm:$0xf]
  %v2464 = vld [vmem:[#allocation6 + $0x1c] sm:$0xf]
  %v2465 = vld [vmem:[#allocation6 + $0x20] sm:$0xf]
  %v2466 = vld [vmem:[#allocation6 + $0x24] sm:$0xf]
  %v2467 = vld [vmem:[#allocation6 + $0x28] sm:$0xf]
  %v2468 = vld [vmem:[#allocation6 + $0x2c] sm:$0xf]
  %v2469 = vld [vmem:[#allocation6 + $0x30] sm:$0xf]
  %v2470 = vld [vmem:[#allocation6 + $0x34] sm:$0xf]
  %v2471 = vld [vmem:[#allocation6 + $0x38] sm:$0xf]
  %v2472 = vld [vmem:[#allocation6 + $0x3c] sm:$0xf]
  %v2489 = vunpack.c.l.b16 %v2457
  %v2490 = vunpack.c.l.b16 %v2458
  %v2491 = vunpack.c.l.b16 %v2459
  %v2492 = vunpack.c.l.b16 %v2460
  %v2493 = vunpack.c.l.b16 %v2461
  %v2494 = vunpack.c.l.b16 %v2462
  %v2495 = vunpack.c.l.b16 %v2463
  %v2496 = vunpack.c.l.b16 %v2464
  %v2497 = vunpack.c.l.b16 %v2465
  %v2498 = vunpack.c.l.b16 %v2466
  %v2499 = vunpack.c.l.b16 %v2467
  %v2500 = vunpack.c.l.b16 %v2468
  %v2501 = vunpack.c.l.b16 %v2469
  %v2502 = vunpack.c.l.b16 %v2470
  %v2503 = vunpack.c.l.b16 %v2471
  %v2504 = vunpack.c.l.b16 %v2472
  %v2505 = vpack.c.b16 %v2490, %v2489
  %v2506 = vpack.c.b16 %v2492, %v2491
  %v2507 = vpack.c.b16 %v2494, %v2493
  %v2508 = vpack.c.b16 %v2496, %v2495
  %v2509 = vpack.c.b16 %v2498, %v2497
  %v2510 = vpack.c.b16 %v2500, %v2499
  %v2511 = vpack.c.b16 %v2502, %v2501
  %v2512 = vpack.c.b16 %v2504, %v2503
  %2521 = vmatpush.bf16.msra.mxu0 %v2512
  %2522 = vmatpush.bf16.msra.mxu0 %v2511
  %2523 = vmatpush.bf16.msra.mxu0 %v2510
  %2524 = vmatpush.bf16.msra.mxu0 %v2509
  %2525 = vmatpush.bf16.msra.mxu0 %v2508
  %2526 = vmatpush.bf16.msra.mxu0 %v2507
  %2527 = vmatpush.bf16.msra.mxu0 %v2506
  %2528 = vmatpush.bf16.msra.mxu0 %v2505
  %2529 = vmatmul.bf16.gmra.mxu0 %v2456
  %v2530 = vpop.f32.mrf.mxu0
  %v2531 = vadd.f32 0.0, %v2530
  %v2532 = vpop.f32.mrf.mxu0
  %v2533 = vadd.f32 0.0, %v2532
  %2534 = vdwg.mxu0
  %v2535 = vadd.f32 %v2174, %v2531
  %v2536 = vadd.f32 %v2176, %v2533
  %v2537 = vadd.f32 %v2535, %v1361
  %v2538 = vadd.f32 %v2536, %v1365
  %s2539 = scalar_lea.vmem [#allocation2], 16
  %2540 = vst [vmem:[%s2539] sm:$0xff] %v2537
  %2541 = vst [vmem:[%s2539 + $0x8] sm:$0xff] %v2538
  %2542 = vadd.xlane.f32.xlu0 %v2537
  %v2543 = vpop.xlane.xlu0 %2542
  %2544 = vadd.xlane.f32.xlu0 %v2538
  %v2545 = vpop.xlane.xlu0 %2544
  %v2546 = vadd.f32 %v1375, %v2543
  %v2547 = vadd.f32 %v1376, %v2545
  %v2548 = vmul.f32 %v2537, %v2537
  %v2549 = vmul.f32 %v2538, %v2538
  %2550 = vadd.xlane.f32.xlu0 %v2548
  %v2551 = vpop.xlane.xlu0 %2550
  %2552 = vadd.xlane.f32.xlu0 %v2549
  %v2553 = vpop.xlane.xlu0 %2552
  %v2554 = vadd.f32 %v1383, %v2551
  %v2555 = vadd.f32 %v1384, %v2553
  %v2556 = vmul.f32 %v2546, 0.00390625
  %v2557 = vmul.f32 %v2547, 0.00390625
  %v2558 = vmul.f32 %v2554, 0.00390625
  %v2559 = vmul.f32 %v2555, 0.00390625
  %v2560 = vmul.f32 %v2556, %v2556
  %v2561 = vmul.f32 %v2557, %v2557
  %v2562 = vsub.f32 %v2558, %v2560
  %v2563 = vsub.f32 %v2559, %v2561
  %v2564 = vmax.f32 %v2562, 0.0
  %v2565 = vmax.f32 %v2563, 0.0
  %v2566 = vadd.f32 %v2564, 1e-05
  %v2567 = vadd.f32 %v2565, 1e-05
  %v2568 = vrsqrt.pop %v2566
  %v2569 = vmul.f32 %v2568, %v2566
  %v2570 = vmul.f32 %v2569, %v2568
  %v2571 = vmul.f32 0.5, %v2570
  %v2572 = vsub.f32 1.5, %v2571
  %v2573 = vmul.f32 %v2568, %v2572
  %vm2574 = vweird.f32 %v2566
  %vm2575 = vweird.f32 %v2568
  %vm2576 = vmor %vm2574, %vm2575
  %v2577 = vsel %vm2576, %v2568, %v2573
  %v2578 = vrsqrt.pop %v2567
  %v2579 = vmul.f32 %v2578, %v2567
  %v2580 = vmul.f32 %v2579, %v2578
  %v2581 = vmul.f32 0.5, %v2580
  %v2582 = vsub.f32 1.5, %v2581
  %v2583 = vmul.f32 %v2578, %v2582
  %vm2584 = vweird.f32 %v2567
  %vm2585 = vweird.f32 %v2578
  %vm2586 = vmor %vm2584, %vm2585
  %v2587 = vsel %vm2586, %v2578, %v2583
  %v2588 = vmul.f32 %v21, %v2577
  %v2589 = vmul.f32 %v22, %v2587
  %v2590 = vmul.f32 %v2556, %v2588
  %v2591 = vmul.f32 %v2557, %v2589
  %2594 = vrot.lane.b32.xlu0 %v2590, 1
  %v2595 = vpop.permute.xlu0 %2594
  %2596 = vrot.lane.b32.xlu0 %v2591, 1
  %v2597 = vpop.permute.xlu0 %2596
  %v2600 = vsub.f32 %v21, %v2595
  %v2601 = vsub.f32 %v22, %v2597
  %v2602 = vld [vmem:[#allocation2] sm:$0xff]
  %v2603 = vld [vmem:[#allocation2 + $0x8] sm:$0xff]
  %2605 = vset.pattern.permute.xlu0 2
  %2606 = vperm.xlu0 %2605, %v2588
  %v2607 = vpop.permute.xlu0 %2606
  %2610 = vset.pattern.permute.xlu0 2
  %2611 = vperm.xlu0 %2610, %v2589
  %v2612 = vpop.permute.xlu0 %2611
  %v2614 = vmul.f32 %v2602, %v2607
  %v2615 = vmul.f32 %v2603, %v2612
  %2617 = vset.pattern.permute.xlu0 3
  %2618 = vperm.xlu0 %2617, %v2600
  %v2619 = vpop.permute.xlu0 %2618
  %2622 = vset.pattern.permute.xlu0 3
  %2623 = vperm.xlu0 %2622, %v2601
  %v2624 = vpop.permute.xlu0 %2623
  %v2626 = vadd.f32 %v2614, %v2619
  %v2627 = vadd.f32 %v2615, %v2624
  %2628 = vadd.xlane.f32.xlu0 %v2626
  %v2629 = vpop.xlane.xlu0 %2628
  %2630 = vadd.xlane.f32.xlu0 %v2627
  %v2631 = vpop.xlane.xlu0 %2630
  %v2632 = vmul.f32 %v2629, 0.0078125
  %v2633 = vmul.f32 %v2631, 0.0078125
  %v2635 = vsel %vm176, %v34, 0
  %2637 = vmatpush.msra.mxu0 0.0
  %2638 = vmatpush.msra.mxu0 0.0
  %2639 = vmatpush.msra.mxu0 0.0
  %2640 = vmatpush.msra.mxu0 0.0
  %2641 = vmatpush.msra.mxu0 0.0
  %2642 = vmatpush.msra.mxu0 0.0
  %2643 = vmatpush.msra.mxu0 0.0
  %2644 = vmatpush.msra.mxu0 0.0
  %2645 = vmatpush.msra.mxu0 0.0
  %2646 = vmatpush.msra.mxu0 0.0
  %2647 = vmatpush.msra.mxu0 0.0
  %2648 = vmatpush.msra.mxu0 0.0
  %2649 = vmatpush.msra.mxu0 0.0
  %2650 = vmatpush.msra.mxu0 0.0
  %2651 = vmatpush.msra.mxu0 %v2633
  %2652 = vmatpush.msra.mxu0 %v2632
  %2653 = vmatmul.f32.gmra.mxu0 %v2635
  %v2654 = vpop.f32.mrf.mxu0
  %v2655 = vadd.f32 0.0, %v2654
  %2656 = vdwg.mxu0
  %v2657 = vmax.f32 %v2655, 0.0
  %v2659 = vsel %vm282, %v35, 0
  %v2662 = vsel %vm282, %v36, 0
  %2664 = vmatpush.msra.mxu0 0.0
  %2665 = vmatpush.msra.mxu0 0.0
  %2666 = vmatpush.msra.mxu0 0.0
  %2667 = vmatpush.msra.mxu0 0.0
  %2668 = vmatpush.msra.mxu0 0.0
  %2669 = vmatpush.msra.mxu0 0.0
  %2670 = vmatpush.msra.mxu0 0.0
  %2671 = vmatpush.msra.mxu0 0.0
  %2672 = vmatpush.msra.mxu0 0.0
  %2673 = vmatpush.msra.mxu0 0.0
  %2674 = vmatpush.msra.mxu0 0.0
  %2675 = vmatpush.msra.mxu0 0.0
  %2676 = vmatpush.msra.mxu0 0.0
  %2677 = vmatpush.msra.mxu0 0.0
  %2678 = vmatpush.msra.mxu0 0.0
  %2679 = vmatpush.msra.mxu0 %v2657
  %2680 = vmatmul.f32.gmra.mxu0 %v2659
  %v2681 = vpop.f32.mrf.mxu0
  %v2682 = vadd.f32 0.0, %v2681
  %2683 = vmatmul.f32.gmra.mxu0 %v2662
  %v2684 = vpop.f32.mrf.mxu0
  %v2685 = vadd.f32 0.0, %v2684
  %2686 = vdwg.mxu0
  %v2687 = vxor.u32 %v2682, 2147483648
  %v2688 = vxor.u32 %v2685, 2147483648
  %v2689 = vmul.f32 %v2687, 1.442695
  %v2690 = vpow.pop %v2689
  %v2691 = vmul.f32 %v2688, 1.442695
  %v2692 = vpow.pop %v2691
  %v2693 = vadd.f32 %v2690, 1.0
  %v2694 = vadd.f32 %v2692, 1.0
  %v2695 = vrcp.pop %v2693
  %v2696 = vmul.f32 %v2693, %v2695
  %v2697 = vsub.f32 1.0, %v2696
  %v2698 = vmul.f32 %v2695, %v2697
  %v2699 = vadd.f32 %v2695, %v2698
  %vm2700 = vweird.f32 %v2693
  %vm2701 = vweird.f32 %v2695
  %vm2702 = vmor %vm2700, %vm2701
  %v2703 = vsel %vm2702, %v2695, %v2699
  %v2704 = vand.u32 2147483647, %v2693
  %vm2705 = vcmp.eq.f32.partialorder %v2704, 8.507059e+37
  %v2706 = vand.u32 %v2693, 2147483648
  %v2707 = vor.u32 1.1754944e-38, %v2706
  %v2708 = vsel %vm2705, %v2707, %v2703
  %v2709 = vmul.f32 1.0, %v2708
  %v2710 = vrcp.pop %v2694
  %v2711 = vmul.f32 %v2694, %v2710
  %v2712 = vsub.f32 1.0, %v2711
  %v2713 = vmul.f32 %v2710, %v2712
  %v2714 = vadd.f32 %v2710, %v2713
  %vm2715 = vweird.f32 %v2694
  %vm2716 = vweird.f32 %v2710
  %vm2717 = vmor %vm2715, %vm2716
  %v2718 = vsel %vm2717, %v2710, %v2714
  %v2719 = vand.u32 2147483647, %v2694
  %vm2720 = vcmp.eq.f32.partialorder %v2719, 8.507059e+37
  %v2721 = vand.u32 %v2694, 2147483648
  %v2722 = vor.u32 1.1754944e-38, %v2721
  %v2723 = vsel %vm2720, %v2722, %v2718
  %v2724 = vmul.f32 1.0, %v2723
  %2726 = vset.pattern.permute.xlu0 0
  %2727 = vperm.xlu0 %2726, %v2709
  %v2728 = vpop.permute.xlu0 %2727
  %2731 = vset.pattern.permute.xlu0 0
  %2732 = vperm.xlu0 %2731, %v2724
  %v2733 = vpop.permute.xlu0 %2732
  %v2735 = vmul.f32 %v2626, %v2728
  %v2736 = vmul.f32 %v2627, %v2733
  %v2737 = vld [vmem:[%s0] sm:$0xff]
  %v2738 = vld [vmem:[%s0 + $0x8] sm:$0xff]
  %v2739 = vadd.f32 %v2735, %v2737
  %v2740 = vadd.f32 %v2736, %v2738
  %v2741 = vmax.f32 %v2739, 0.0
  %v2742 = vmax.f32 %v2740, 0.0
  %v2743 = vpack.c.bf16 %v2741, %v2741
  %v2744 = vpack.c.bf16 %v2742, %v2742
  %2747 = vrot.lane.b32.xlu0 %v2743, 64
  %v2748 = vpop.permute.xlu0 %2747
  %2749 = vrot.lane.b32.xlu0 %v2744, 64
  %v2750 = vpop.permute.xlu0 %2749
  %v2751 = vrot.slane %v2748, 4
  %v2752 = vrot.slane %v2750, 4
  %vm2753 = vcmask 523264
  %v2754 = vsel %vm2753, %v2751, %v2748
  %v2755 = vsel %vm2753, %v2752, %v2750
  %vm2758 = vcmask 1043968
  %vm2759 = vcmask 523268
  %vm2760 = vmor %vm2759, %vm2758
  %2761 = vst.msk [vmem:[#allocation4] sm:$0xff] %vm2760, %v2754
  %2762 = vst.msk [vmem:[#allocation4 + $0x8] sm:$0xff] %vm2760, %v2755
  %v2763 = vld [vmem:[#allocation4] sm:$0xf]
  %v2764 = vld [vmem:[#allocation4 + $0x8] sm:$0xf]
  %2765 = vst [vmem:[#allocation5] sm:$0xf] %v2763
  %2766 = vst [vmem:[#allocation5 + $0x4] sm:$0xf] %v2764
  %v2767 = vld [vmem:[#allocation4] sm:$0xff]
  %v2768 = vld [vmem:[#allocation4 + $0x8] sm:$0xff]
  %2771 = vrot.lane.b32.xlu0 %v2767, 112
  %v2772 = vpop.permute.xlu0 %2771
  %2773 = vrot.lane.b32.xlu0 %v2768, 112
  %v2774 = vpop.permute.xlu0 %2773
  %v2775 = vrot.slane %v2772, 4
  %v2776 = vrot.slane %v2774, 4
  %vm2777 = vcmask 916480
  %v2778 = vsel %vm2777, %v2772, %v2775
  %v2779 = vsel %vm2777, %v2774, %v2776
  %2782 = vst [vmem:[#allocation5 + $0x8] sm:$0xf] %v2778
  %2783 = vst [vmem:[#allocation5 + $0xc] sm:$0xf] %v2779
  %v2784 = vld [vmem:[#allocation4] sm:$0xff]
  %v2785 = vld [vmem:[#allocation4 + $0x8] sm:$0xff]
  %2788 = vrot.lane.b32.xlu0 %v2784, 96
  %v2789 = vpop.permute.xlu0 %2788
  %2790 = vrot.lane.b32.xlu0 %v2785, 96
  %v2791 = vpop.permute.xlu0 %2790
  %v2792 = vrot.slane %v2789, 4
  %v2793 = vrot.slane %v2791, 4
  %vm2794 = vcmask 785408
  %v2795 = vsel %vm2794, %v2789, %v2792
  %v2796 = vsel %vm2794, %v2791, %v2793
  %2799 = vst [vmem:[#allocation5 + $0x10] sm:$0xf] %v2795
  %2800 = vst [vmem:[#allocation5 + $0x14] sm:$0xf] %v2796
  %v2801 = vld [vmem:[#allocation4] sm:$0xff]
  %v2802 = vld [vmem:[#allocation4 + $0x8] sm:$0xff]
  %2805 = vrot.lane.b32.xlu0 %v2801, 80
  %v2806 = vpop.permute.xlu0 %2805
  %2807 = vrot.lane.b32.xlu0 %v2802, 80
  %v2808 = vpop.permute.xlu0 %2807
  %v2809 = vrot.slane %v2806, 4
  %v2810 = vrot.slane %v2808, 4
  %vm2811 = vcmask 654336
  %v2812 = vsel %vm2811, %v2806, %v2809
  %v2813 = vsel %vm2811, %v2808, %v2810
  %2816 = vst [vmem:[#allocation5 + $0x18] sm:$0xf] %v2812
  %2817 = vst [vmem:[#allocation5 + $0x1c] sm:$0xf] %v2813
  %v2818 = vld [vmem:[#allocation4] sm:$0xff]
  %v2819 = vld [vmem:[#allocation4 + $0x8] sm:$0xff]
  %2822 = vrot.lane.b32.xlu0 %v2818, 64
  %v2823 = vpop.permute.xlu0 %2822
  %2824 = vrot.lane.b32.xlu0 %v2819, 64
  %v2825 = vpop.permute.xlu0 %2824
  %v2826 = vrot.slane %v2823, 4
  %v2827 = vrot.slane %v2825, 4
  %v2828 = vsel %vm2753, %v2823, %v2826
  %v2829 = vsel %vm2753, %v2825, %v2827
  %2832 = vst [vmem:[#allocation5 + $0x20] sm:$0xf] %v2828
  %2833 = vst [vmem:[#allocation5 + $0x24] sm:$0xf] %v2829
  %v2834 = vld [vmem:[#allocation4] sm:$0xff]
  %v2835 = vld [vmem:[#allocation4 + $0x8] sm:$0xff]
  %2838 = vrot.lane.b32.xlu0 %v2834, 48
  %v2839 = vpop.permute.xlu0 %2838
  %2840 = vrot.lane.b32.xlu0 %v2835, 48
  %v2841 = vpop.permute.xlu0 %2840
  %v2842 = vrot.slane %v2839, 4
  %v2843 = vrot.slane %v2841, 4
  %vm2844 = vcmask 392192
  %v2845 = vsel %vm2844, %v2839, %v2842
  %v2846 = vsel %vm2844, %v2841, %v2843
  %2849 = vst [vmem:[#allocation5 + $0x28] sm:$0xf] %v2845
  %2850 = vst [vmem:[#allocation5 + $0x2c] sm:$0xf] %v2846
  %v2851 = vld [vmem:[#allocation4] sm:$0xff]
  %v2852 = vld [vmem:[#allocation4 + $0x8] sm:$0xff]
  %2855 = vrot.lane.b32.xlu0 %v2851, 32
  %v2856 = vpop.permute.xlu0 %2855
  %2857 = vrot.lane.b32.xlu0 %v2852, 32
  %v2858 = vpop.permute.xlu0 %2857
  %v2859 = vrot.slane %v2856, 4
  %v2860 = vrot.slane %v2858, 4
  %vm2861 = vcmask 261120
  %v2862 = vsel %vm2861, %v2856, %v2859
  %v2863 = vsel %vm2861, %v2858, %v2860
  %2866 = vst [vmem:[#allocation5 + $0x30] sm:$0xf] %v2862
  %2867 = vst [vmem:[#allocation5 + $0x34] sm:$0xf] %v2863
  %v2868 = vld [vmem:[#allocation4] sm:$0xff]
  %v2869 = vld [vmem:[#allocation4 + $0x8] sm:$0xff]
  %2872 = vrot.lane.b32.xlu0 %v2868, 16
  %v2873 = vpop.permute.xlu0 %2872
  %2874 = vrot.lane.b32.xlu0 %v2869, 16
  %v2875 = vpop.permute.xlu0 %2874
  %v2876 = vrot.slane %v2873, 4
  %v2877 = vrot.slane %v2875, 4
  %vm2878 = vcmask 130048
  %v2879 = vsel %vm2878, %v2873, %v2876
  %v2880 = vsel %vm2878, %v2875, %v2877
  %2883 = vst [vmem:[#allocation5 + $0x38] sm:$0xf] %v2879
  %2884 = vst [vmem:[#allocation5 + $0x3c] sm:$0xf] %v2880
  %v2885 = vld [vmem:[#allocation4 + $0x4] sm:$0xf]
  %v2886 = vld [vmem:[#allocation4 + $0xc] sm:$0xf]
  %2887 = vst [vmem:[#allocation5 + $0x40] sm:$0xf] %v2885
  %2888 = vst [vmem:[#allocation5 + $0x44] sm:$0xf] %v2886
  %v2889 = vld [vmem:[#allocation5] sm:$0xf]
  %v2890 = vld [vmem:[#allocation5 + $0x4] sm:$0xf]
  %v2891 = vld [vmem:[#allocation5 + $0x8] sm:$0xf]
  %v2892 = vld [vmem:[#allocation5 + $0xc] sm:$0xf]
  %v2893 = vld [vmem:[#allocation5 + $0x10] sm:$0xf]
  %v2894 = vld [vmem:[#allocation5 + $0x14] sm:$0xf]
  %v2895 = vld [vmem:[#allocation5 + $0x18] sm:$0xf]
  %v2896 = vld [vmem:[#allocation5 + $0x1c] sm:$0xf]
  %v2897 = vld [vmem:[#allocation5 + $0x20] sm:$0xf]
  %v2898 = vld [vmem:[#allocation5 + $0x24] sm:$0xf]
  %v2899 = vld [vmem:[#allocation5 + $0x28] sm:$0xf]
  %v2900 = vld [vmem:[#allocation5 + $0x2c] sm:$0xf]
  %v2901 = vld [vmem:[#allocation5 + $0x30] sm:$0xf]
  %v2902 = vld [vmem:[#allocation5 + $0x34] sm:$0xf]
  %v2903 = vld [vmem:[#allocation5 + $0x38] sm:$0xf]
  %v2904 = vld [vmem:[#allocation5 + $0x3c] sm:$0xf]
  %v2905 = vld [vmem:[#allocation5 + $0x40] sm:$0xf]
  %v2906 = vld [vmem:[#allocation5 + $0x44] sm:$0xf]
  %2907 = vset.pattern.permute.xlu0 6
  %2908 = vperm.xlu0 %2907, %v21
  %v2909 = vpop.permute.xlu0 %2908
  %2911 = vset.pattern.permute.xlu0 6
  %2912 = vperm.xlu0 %2911, %v22
  %v2913 = vpop.permute.xlu0 %2912
  %2915 = vset.pattern.permute.xlu0 6
  %2916 = vperm.xlu0 %2915, %v23
  %v2917 = vpop.permute.xlu0 %2916
  %2919 = vset.pattern.permute.xlu0 6
  %2920 = vperm.xlu0 %2919, %v24
  %v2921 = vpop.permute.xlu0 %2920
  %v2927 = vunpack.c.l.b16 %v53
  %v2928 = vunpack.c.h.b16 %v53
  %v2929 = vunpack.c.l.b16 %v54
  %v2930 = vunpack.c.h.b16 %v54
  %v2931 = vunpack.c.l.b16 %v55
  %v2932 = vunpack.c.h.b16 %v55
  %v2933 = vunpack.c.l.b16 %v56
  %v2934 = vunpack.c.h.b16 %v56
  %v2935 = vpack.c.b16 %v2929, %v2927
  %v2936 = vpack.c.b16 %v2930, %v2928
  %v2937 = vpack.c.b16 %v2933, %v2931
  %v2938 = vpack.c.b16 %v2934, %v2932
  %v2959 = vunpack.c.l.b16 %v2889
  %v2960 = vunpack.c.l.b16 %v2890
  %v2961 = vunpack.c.l.b16 %v2891
  %v2962 = vunpack.c.l.b16 %v2892
  %v2963 = vunpack.c.l.b16 %v2893
  %v2964 = vunpack.c.l.b16 %v2894
  %v2965 = vunpack.c.l.b16 %v2895
  %v2966 = vunpack.c.l.b16 %v2896
  %v2967 = vunpack.c.l.b16 %v2897
  %v2968 = vunpack.c.l.b16 %v2898
  %v2969 = vunpack.c.l.b16 %v2899
  %v2970 = vunpack.c.l.b16 %v2900
  %v2971 = vunpack.c.l.b16 %v2901
  %v2972 = vunpack.c.l.b16 %v2902
  %v2973 = vunpack.c.l.b16 %v2903
  %v2974 = vunpack.c.l.b16 %v2904
  %v2975 = vunpack.c.l.b16 %v2905
  %v2976 = vunpack.c.l.b16 %v2906
  %v2977 = vpack.c.b16 %v2960, %v2959
  %v2978 = vpack.c.b16 %v2962, %v2961
  %v2979 = vpack.c.b16 %v2964, %v2963
  %v2980 = vpack.c.b16 %v2966, %v2965
  %v2981 = vpack.c.b16 %v2968, %v2967
  %v2982 = vpack.c.b16 %v2970, %v2969
  %v2983 = vpack.c.b16 %v2972, %v2971
  %v2984 = vpack.c.b16 %v2974, %v2973
  %v2985 = vpack.c.b16 %v2976, %v2975
  %v2996 = vsel %vm176, %v2936, 0
  %v2999 = vsel %vm176, %v2938, 0
  %3001 = vmatpush.bf16.msra.mxu0 %v2984
  %3002 = vmatpush.bf16.msra.mxu0 %v2983
  %3003 = vmatpush.bf16.msra.mxu0 %v2982
  %3004 = vmatpush.bf16.msra.mxu0 %v2981
  %3005 = vmatpush.bf16.msra.mxu0 %v2980
  %3006 = vmatpush.bf16.msra.mxu0 %v2979
  %3007 = vmatpush.bf16.msra.mxu0 %v2978
  %3008 = vmatpush.bf16.msra.mxu0 %v2977
  %3009 = vmatmul.bf16.gmra.mxu0 %v2935
  %v3010 = vpop.f32.mrf.mxu0
  %v3011 = vadd.f32 %v2909, %v3010
  %v3012 = vpop.f32.mrf.mxu0
  %v3013 = vadd.f32 %v2913, %v3012
  %3014 = vmatmul.bf16.gmra.mxu0 %v2937
  %v3015 = vpop.f32.mrf.mxu0
  %v3016 = vadd.f32 %v2917, %v3015
  %v3017 = vpop.f32.mrf.mxu0
  %v3018 = vadd.f32 %v2921, %v3017
  %3019 = vdwg.mxu0
  %3020 = vmatpush.bf16.msra.mxu0 0
  %3021 = vmatpush.bf16.msra.mxu0 0
  %3022 = vmatpush.bf16.msra.mxu0 0
  %3023 = vmatpush.bf16.msra.mxu0 0
  %3024 = vmatpush.bf16.msra.mxu0 0
  %3025 = vmatpush.bf16.msra.mxu0 0
  %3026 = vmatpush.bf16.msra.mxu0 0
  %3027 = vmatpush.bf16.msra.mxu0 %v2985
  %3028 = vmatmul.bf16.gmra.mxu0 %v2996
  %v3029 = vpop.f32.mrf.mxu0
  %v3030 = vadd.f32 %v3011, %v3029
  %v3031 = vpop.f32.mrf.mxu0
  %v3032 = vadd.f32 %v3013, %v3031
  %3033 = vmatmul.bf16.gmra.mxu0 %v2999
  %v3034 = vpop.f32.mrf.mxu0
  %v3035 = vadd.f32 %v3016, %v3034
  %v3036 = vpop.f32.mrf.mxu0
  %v3037 = vadd.f32 %v3018, %v3036
  %3038 = vdwg.mxu0
  %v3039 = vxor.u32 %v3035, 2147483648
  %v3040 = vxor.u32 %v3037, 2147483648
  %v3041 = vmul.f32 %v3039, 1.442695
  %v3042 = vpow.pop %v3041
  %v3043 = vmul.f32 %v3040, 1.442695
  %v3044 = vpow.pop %v3043
  %v3045 = vadd.f32 %v3042, 1.0
  %v3046 = vadd.f32 %v3044, 1.0
  %v3047 = vrcp.pop %v3045
  %v3048 = vmul.f32 %v3045, %v3047
  %v3049 = vsub.f32 1.0, %v3048
  %v3050 = vmul.f32 %v3047, %v3049
  %v3051 = vadd.f32 %v3047, %v3050
  %vm3052 = vweird.f32 %v3045
  %vm3053 = vweird.f32 %v3047
  %vm3054 = vmor %vm3052, %vm3053
  %v3055 = vsel %vm3054, %v3047, %v3051
  %v3056 = vand.u32 2147483647, %v3045
  %vm3057 = vcmp.eq.f32.partialorder %v3056, 8.507059e+37
  %v3058 = vand.u32 %v3045, 2147483648
  %v3059 = vor.u32 1.1754944e-38, %v3058
  %v3060 = vsel %vm3057, %v3059, %v3055
  %v3061 = vmul.f32 1.0, %v3060
  %v3062 = vrcp.pop %v3046
  %v3063 = vmul.f32 %v3046, %v3062
  %v3064 = vsub.f32 1.0, %v3063
  %v3065 = vmul.f32 %v3062, %v3064
  %v3066 = vadd.f32 %v3062, %v3065
  %vm3067 = vweird.f32 %v3046
  %vm3068 = vweird.f32 %v3062
  %vm3069 = vmor %vm3067, %vm3068
  %v3070 = vsel %vm3069, %v3062, %v3066
  %v3071 = vand.u32 2147483647, %v3046
  %vm3072 = vcmp.eq.f32.partialorder %v3071, 8.507059e+37
  %v3073 = vand.u32 %v3046, 2147483648
  %v3074 = vor.u32 1.1754944e-38, %v3073
  %v3075 = vsel %vm3072, %v3074, %v3070
  %v3076 = vmul.f32 1.0, %v3075
  %v3077 = vmul.f32 %v3030, %v3061
  %v3078 = vmul.f32 %v3032, %v3076
  %3079 = vst [vmem:[#allocation3] sm:$0xff] %v3077
  %3080 = vst [vmem:[#allocation3 + $0x8] sm:$0xff] %v3078
  %3081 = vadd.xlane.f32.xlu0 %v3077
  %v3082 = vpop.xlane.xlu0 %3081
  %3083 = vadd.xlane.f32.xlu0 %v3078
  %v3084 = vpop.xlane.xlu0 %3083
  %v3085 = vadd.f32 %v3082, 0.0
  %v3086 = vadd.f32 %v3084, 0.0
  %v3087 = vmul.f32 %v3077, %v3077
  %v3088 = vmul.f32 %v3078, %v3078
  %3089 = vadd.xlane.f32.xlu0 %v3087
  %v3090 = vpop.xlane.xlu0 %3089
  %3091 = vadd.xlane.f32.xlu0 %v3088
  %v3092 = vpop.xlane.xlu0 %3091
  %v3093 = vadd.f32 %v3090, 0.0
  %v3094 = vadd.f32 %v3092, 0.0
  %v3095 = vld [vmem:[%s2539] sm:$0xff]
  %v3096 = vld [vmem:[%s2539 + $0x8] sm:$0xff]
  %v3097 = vmul.f32 %v3095, %v2607
  %v3098 = vmul.f32 %v3096, %v2612
  %v3099 = vadd.f32 %v3097, %v2619
  %v3100 = vadd.f32 %v3098, %v2624
  %3101 = vadd.xlane.f32.xlu0 %v3099
  %v3102 = vpop.xlane.xlu0 %3101
  %3103 = vadd.xlane.f32.xlu0 %v3100
  %v3104 = vpop.xlane.xlu0 %3103
  %v3105 = vmul.f32 %v3102, 0.0078125
  %v3106 = vmul.f32 %v3104, 0.0078125
  %3107 = vmatpush.msra.mxu0 0.0
  %3108 = vmatpush.msra.mxu0 0.0
  %3109 = vmatpush.msra.mxu0 0.0
  %3110 = vmatpush.msra.mxu0 0.0
  %3111 = vmatpush.msra.mxu0 0.0
  %3112 = vmatpush.msra.mxu0 0.0
  %3113 = vmatpush.msra.mxu0 0.0
  %3114 = vmatpush.msra.mxu0 0.0
  %3115 = vmatpush.msra.mxu0 0.0
  %3116 = vmatpush.msra.mxu0 0.0
  %3117 = vmatpush.msra.mxu0 0.0
  %3118 = vmatpush.msra.mxu0 0.0
  %3119 = vmatpush.msra.mxu0 0.0
  %3120 = vmatpush.msra.mxu0 0.0
  %3121 = vmatpush.msra.mxu0 %v3106
  %3122 = vmatpush.msra.mxu0 %v3105
  %3123 = vmatmul.f32.gmra.mxu0 %v2635
  %v3124 = vpop.f32.mrf.mxu0
  %v3125 = vadd.f32 0.0, %v3124
  %3126 = vdwg.mxu0
  %v3127 = vmax.f32 %v3125, 0.0
  %3128 = vmatpush.msra.mxu0 0.0
  %3129 = vmatpush.msra.mxu0 0.0
  %3130 = vmatpush.msra.mxu0 0.0
  %3131 = vmatpush.msra.mxu0 0.0
  %3132 = vmatpush.msra.mxu0 0.0
  %3133 = vmatpush.msra.mxu0 0.0
  %3134 = vmatpush.msra.mxu0 0.0
  %3135 = vmatpush.msra.mxu0 0.0
  %3136 = vmatpush.msra.mxu0 0.0
  %3137 = vmatpush.msra.mxu0 0.0
  %3138 = vmatpush.msra.mxu0 0.0
  %3139 = vmatpush.msra.mxu0 0.0
  %3140 = vmatpush.msra.mxu0 0.0
  %3141 = vmatpush.msra.mxu0 0.0
  %3142 = vmatpush.msra.mxu0 0.0
  %3143 = vmatpush.msra.mxu0 %v3127
  %3144 = vmatmul.f32.gmra.mxu0 %v2659
  %v3145 = vpop.f32.mrf.mxu0
  %v3146 = vadd.f32 0.0, %v3145
  %3147 = vmatmul.f32.gmra.mxu0 %v2662
  %v3148 = vpop.f32.mrf.mxu0
  %v3149 = vadd.f32 0.0, %v3148
  %3150 = vdwg.mxu0
  %v3151 = vxor.u32 %v3146, 2147483648
  %v3152 = vxor.u32 %v3149, 2147483648
  %v3153 = vmul.f32 %v3151, 1.442695
  %v3154 = vpow.pop %v3153
  %v3155 = vmul.f32 %v3152, 1.442695
  %v3156 = vpow.pop %v3155
  %v3157 = vadd.f32 %v3154, 1.0
  %v3158 = vadd.f32 %v3156, 1.0
  %v3159 = vrcp.pop %v3157
  %v3160 = vmul.f32 %v3157, %v3159
  %v3161 = vsub.f32 1.0, %v3160
  %v3162 = vmul.f32 %v3159, %v3161
  %v3163 = vadd.f32 %v3159, %v3162
  %vm3164 = vweird.f32 %v3157
  %vm3165 = vweird.f32 %v3159
  %vm3166 = vmor %vm3164, %vm3165
  %v3167 = vsel %vm3166, %v3159, %v3163
  %v3168 = vand.u32 2147483647, %v3157
  %vm3169 = vcmp.eq.f32.partialorder %v3168, 8.507059e+37
  %v3170 = vand.u32 %v3157, 2147483648
  %v3171 = vor.u32 1.1754944e-38, %v3170
  %v3172 = vsel %vm3169, %v3171, %v3167
  %v3173 = vmul.f32 1.0, %v3172
  %v3174 = vrcp.pop %v3158
  %v3175 = vmul.f32 %v3158, %v3174
  %v3176 = vsub.f32 1.0, %v3175
  %v3177 = vmul.f32 %v3174, %v3176
  %v3178 = vadd.f32 %v3174, %v3177
  %vm3179 = vweird.f32 %v3158
  %vm3180 = vweird.f32 %v3174
  %vm3181 = vmor %vm3179, %vm3180
  %v3182 = vsel %vm3181, %v3174, %v3178
  %v3183 = vand.u32 2147483647, %v3158
  %vm3184 = vcmp.eq.f32.partialorder %v3183, 8.507059e+37
  %v3185 = vand.u32 %v3158, 2147483648
  %v3186 = vor.u32 1.1754944e-38, %v3185
  %v3187 = vsel %vm3184, %v3186, %v3182
  %v3188 = vmul.f32 1.0, %v3187
  %3190 = vset.pattern.permute.xlu0 0
  %3191 = vperm.xlu0 %3190, %v3173
  %v3192 = vpop.permute.xlu0 %3191
  %3195 = vset.pattern.permute.xlu0 0
  %3196 = vperm.xlu0 %3195, %v3188
  %v3197 = vpop.permute.xlu0 %3196
  %v3199 = vmul.f32 %v3099, %v3192
  %v3200 = vmul.f32 %v3100, %v3197
  %v3201 = vld [vmem:[%s1385] sm:$0xff]
  %v3202 = vld [vmem:[%s1385 + $0x8] sm:$0xff]
  %v3203 = vadd.f32 %v3199, %v3201
  %v3204 = vadd.f32 %v3200, %v3202
  %v3205 = vmax.f32 %v3203, 0.0
  %v3206 = vmax.f32 %v3204, 0.0
  %v3207 = vpack.c.bf16 %v3205, %v3205
  %v3208 = vpack.c.bf16 %v3206, %v3206
  %3211 = vrot.lane.b32.xlu0 %v3207, 64
  %v3212 = vpop.permute.xlu0 %3211
  %3213 = vrot.lane.b32.xlu0 %v3208, 64
  %v3214 = vpop.permute.xlu0 %3213
  %v3215 = vrot.slane %v3212, 4
  %v3216 = vrot.slane %v3214, 4
  %v3217 = vsel %vm2753, %v3215, %v3212
  %v3218 = vsel %vm2753, %v3216, %v3214
  %3221 = vst.msk [vmem:[#allocation4] sm:$0xff] %vm2760, %v3217
  %3222 = vst.msk [vmem:[#allocation4 + $0x8] sm:$0xff] %vm2760, %v3218
  %v3223 = vld [vmem:[#allocation4] sm:$0xf]
  %v3224 = vld [vmem:[#allocation4 + $0x8] sm:$0xf]
  %3225 = vst [vmem:[#allocation5] sm:$0xf] %v3223
  %3226 = vst [vmem:[#allocation5 + $0x4] sm:$0xf] %v3224
  %v3227 = vld [vmem:[#allocation4] sm:$0xff]
  %v3228 = vld [vmem:[#allocation4 + $0x8] sm:$0xff]
  %3231 = vrot.lane.b32.xlu0 %v3227, 112
  %v3232 = vpop.permute.xlu0 %3231
  %3233 = vrot.lane.b32.xlu0 %v3228, 112
  %v3234 = vpop.permute.xlu0 %3233
  %v3235 = vrot.slane %v3232, 4
  %v3236 = vrot.slane %v3234, 4
  %v3237 = vsel %vm2777, %v3232, %v3235
  %v3238 = vsel %vm2777, %v3234, %v3236
  %3241 = vst [vmem:[#allocation5 + $0x8] sm:$0xf] %v3237
  %3242 = vst [vmem:[#allocation5 + $0xc] sm:$0xf] %v3238
  %v3243 = vld [vmem:[#allocation4] sm:$0xff]
  %v3244 = vld [vmem:[#allocation4 + $0x8] sm:$0xff]
  %3247 = vrot.lane.b32.xlu0 %v3243, 96
  %v3248 = vpop.permute.xlu0 %3247
  %3249 = vrot.lane.b32.xlu0 %v3244, 96
  %v3250 = vpop.permute.xlu0 %3249
  %v3251 = vrot.slane %v3248, 4
  %v3252 = vrot.slane %v3250, 4
  %v3253 = vsel %vm2794, %v3248, %v3251
  %v3254 = vsel %vm2794, %v3250, %v3252
  %3257 = vst [vmem:[#allocation5 + $0x10] sm:$0xf] %v3253
  %3258 = vst [vmem:[#allocation5 + $0x14] sm:$0xf] %v3254
  %v3259 = vld [vmem:[#allocation4] sm:$0xff]
  %v3260 = vld [vmem:[#allocation4 + $0x8] sm:$0xff]
  %3263 = vrot.lane.b32.xlu0 %v3259, 80
  %v3264 = vpop.permute.xlu0 %3263
  %3265 = vrot.lane.b32.xlu0 %v3260, 80
  %v3266 = vpop.permute.xlu0 %3265
  %v3267 = vrot.slane %v3264, 4
  %v3268 = vrot.slane %v3266, 4
  %v3269 = vsel %vm2811, %v3264, %v3267
  %v3270 = vsel %vm2811, %v3266, %v3268
  %3273 = vst [vmem:[#allocation5 + $0x18] sm:$0xf] %v3269
  %3274 = vst [vmem:[#allocation5 + $0x1c] sm:$0xf] %v3270
  %v3275 = vld [vmem:[#allocation4] sm:$0xff]
  %v3276 = vld [vmem:[#allocation4 + $0x8] sm:$0xff]
  %3279 = vrot.lane.b32.xlu0 %v3275, 64
  %v3280 = vpop.permute.xlu0 %3279
  %3281 = vrot.lane.b32.xlu0 %v3276, 64
  %v3282 = vpop.permute.xlu0 %3281
  %v3283 = vrot.slane %v3280, 4
  %v3284 = vrot.slane %v3282, 4
  %v3285 = vsel %vm2753, %v3280, %v3283
  %v3286 = vsel %vm2753, %v3282, %v3284
  %3289 = vst [vmem:[#allocation5 + $0x20] sm:$0xf] %v3285
  %3290 = vst [vmem:[#allocation5 + $0x24] sm:$0xf] %v3286
  %v3291 = vld [vmem:[#allocation4] sm:$0xff]
  %v3292 = vld [vmem:[#allocation4 + $0x8] sm:$0xff]
  %3295 = vrot.lane.b32.xlu0 %v3291, 48
  %v3296 = vpop.permute.xlu0 %3295
  %3297 = vrot.lane.b32.xlu0 %v3292, 48
  %v3298 = vpop.permute.xlu0 %3297
  %v3299 = vrot.slane %v3296, 4
  %v3300 = vrot.slane %v3298, 4
  %v3301 = vsel %vm2844, %v3296, %v3299
  %v3302 = vsel %vm2844, %v3298, %v3300
  %3305 = vst [vmem:[#allocation5 + $0x28] sm:$0xf] %v3301
  %3306 = vst [vmem:[#allocation5 + $0x2c] sm:$0xf] %v3302
  %v3307 = vld [vmem:[#allocation4] sm:$0xff]
  %v3308 = vld [vmem:[#allocation4 + $0x8] sm:$0xff]
  %3311 = vrot.lane.b32.xlu0 %v3307, 32
  %v3312 = vpop.permute.xlu0 %3311
  %3313 = vrot.lane.b32.xlu0 %v3308, 32
  %v3314 = vpop.permute.xlu0 %3313
  %v3315 = vrot.slane %v3312, 4
  %v3316 = vrot.slane %v3314, 4
  %v3317 = vsel %vm2861, %v3312, %v3315
  %v3318 = vsel %vm2861, %v3314, %v3316
  %3321 = vst [vmem:[#allocation5 + $0x30] sm:$0xf] %v3317
  %3322 = vst [vmem:[#allocation5 + $0x34] sm:$0xf] %v3318
  %v3323 = vld [vmem:[#allocation4] sm:$0xff]
  %v3324 = vld [vmem:[#allocation4 + $0x8] sm:$0xff]
  %3327 = vrot.lane.b32.xlu0 %v3323, 16
  %v3328 = vpop.permute.xlu0 %3327
  %3329 = vrot.lane.b32.xlu0 %v3324, 16
  %v3330 = vpop.permute.xlu0 %3329
  %v3331 = vrot.slane %v3328, 4
  %v3332 = vrot.slane %v3330, 4
  %v3333 = vsel %vm2878, %v3328, %v3331
  %v3334 = vsel %vm2878, %v3330, %v3332
  %3337 = vst [vmem:[#allocation5 + $0x38] sm:$0xf] %v3333
  %3338 = vst [vmem:[#allocation5 + $0x3c] sm:$0xf] %v3334
  %v3339 = vld [vmem:[#allocation4 + $0x4] sm:$0xf]
  %v3340 = vld [vmem:[#allocation4 + $0xc] sm:$0xf]
  %3341 = vst [vmem:[#allocation5 + $0x40] sm:$0xf] %v3339
  %3342 = vst [vmem:[#allocation5 + $0x44] sm:$0xf] %v3340
  %v3343 = vld [vmem:[#allocation5] sm:$0xf]
  %v3344 = vld [vmem:[#allocation5 + $0x4] sm:$0xf]
  %v3345 = vld [vmem:[#allocation5 + $0x8] sm:$0xf]
  %v3346 = vld [vmem:[#allocation5 + $0xc] sm:$0xf]
  %v3347 = vld [vmem:[#allocation5 + $0x10] sm:$0xf]
  %v3348 = vld [vmem:[#allocation5 + $0x14] sm:$0xf]
  %v3349 = vld [vmem:[#allocation5 + $0x18] sm:$0xf]
  %v3350 = vld [vmem:[#allocation5 + $0x1c] sm:$0xf]
  %v3351 = vld [vmem:[#allocation5 + $0x20] sm:$0xf]
  %v3352 = vld [vmem:[#allocation5 + $0x24] sm:$0xf]
  %v3353 = vld [vmem:[#allocation5 + $0x28] sm:$0xf]
  %v3354 = vld [vmem:[#allocation5 + $0x2c] sm:$0xf]
  %v3355 = vld [vmem:[#allocation5 + $0x30] sm:$0xf]
  %v3356 = vld [vmem:[#allocation5 + $0x34] sm:$0xf]
  %v3357 = vld [vmem:[#allocation5 + $0x38] sm:$0xf]
  %v3358 = vld [vmem:[#allocation5 + $0x3c] sm:$0xf]
  %v3359 = vld [vmem:[#allocation5 + $0x40] sm:$0xf]
  %v3360 = vld [vmem:[#allocation5 + $0x44] sm:$0xf]
  %v3379 = vunpack.c.l.b16 %v3343
  %v3380 = vunpack.c.l.b16 %v3344
  %v3381 = vunpack.c.l.b16 %v3345
  %v3382 = vunpack.c.l.b16 %v3346
  %v3383 = vunpack.c.l.b16 %v3347
  %v3384 = vunpack.c.l.b16 %v3348
  %v3385 = vunpack.c.l.b16 %v3349
  %v3386 = vunpack.c.l.b16 %v3350
  %v3387 = vunpack.c.l.b16 %v3351
  %v3388 = vunpack.c.l.b16 %v3352
  %v3389 = vunpack.c.l.b16 %v3353
  %v3390 = vunpack.c.l.b16 %v3354
  %v3391 = vunpack.c.l.b16 %v3355
  %v3392 = vunpack.c.l.b16 %v3356
  %v3393 = vunpack.c.l.b16 %v3357
  %v3394 = vunpack.c.l.b16 %v3358
  %v3395 = vunpack.c.l.b16 %v3359
  %v3396 = vunpack.c.l.b16 %v3360
  %v3397 = vpack.c.b16 %v3380, %v3379
  %v3398 = vpack.c.b16 %v3382, %v3381
  %v3399 = vpack.c.b16 %v3384, %v3383
  %v3400 = vpack.c.b16 %v3386, %v3385
  %v3401 = vpack.c.b16 %v3388, %v3387
  %v3402 = vpack.c.b16 %v3390, %v3389
  %v3403 = vpack.c.b16 %v3392, %v3391
  %v3404 = vpack.c.b16 %v3394, %v3393
  %v3405 = vpack.c.b16 %v3396, %v3395
  %3415 = vmatpush.bf16.msra.mxu0 %v3404
  %3416 = vmatpush.bf16.msra.mxu0 %v3403
  %3417 = vmatpush.bf16.msra.mxu0 %v3402
  %3418 = vmatpush.bf16.msra.mxu0 %v3401
  %3419 = vmatpush.bf16.msra.mxu0 %v3400
  %3420 = vmatpush.bf16.msra.mxu0 %v3399
  %3421 = vmatpush.bf16.msra.mxu0 %v3398
  %3422 = vmatpush.bf16.msra.mxu0 %v3397
  %3423 = vmatmul.bf16.gmra.mxu0 %v2935
  %v3424 = vpop.f32.mrf.mxu0
  %v3425 = vadd.f32 %v2909, %v3424
  %v3426 = vpop.f32.mrf.mxu0
  %v3427 = vadd.f32 %v2913, %v3426
  %3428 = vmatmul.bf16.gmra.mxu0 %v2937
  %v3429 = vpop.f32.mrf.mxu0
  %v3430 = vadd.f32 %v2917, %v3429
  %v3431 = vpop.f32.mrf.mxu0
  %v3432 = vadd.f32 %v2921, %v3431
  %3433 = vdwg.mxu0
  %3434 = vmatpush.bf16.msra.mxu0 0
  %3435 = vmatpush.bf16.msra.mxu0 0
  %3436 = vmatpush.bf16.msra.mxu0 0
  %3437 = vmatpush.bf16.msra.mxu0 0
  %3438 = vmatpush.bf16.msra.mxu0 0
  %3439 = vmatpush.bf16.msra.mxu0 0
  %3440 = vmatpush.bf16.msra.mxu0 0
  %3441 = vmatpush.bf16.msra.mxu0 %v3405
  %3442 = vmatmul.bf16.gmra.mxu0 %v2996
  %v3443 = vpop.f32.mrf.mxu0
  %v3444 = vadd.f32 %v3425, %v3443
  %v3445 = vpop.f32.mrf.mxu0
  %v3446 = vadd.f32 %v3427, %v3445
  %3447 = vmatmul.bf16.gmra.mxu0 %v2999
  %v3448 = vpop.f32.mrf.mxu0
  %v3449 = vadd.f32 %v3430, %v3448
  %v3450 = vpop.f32.mrf.mxu0
  %v3451 = vadd.f32 %v3432, %v3450
  %3452 = vdwg.mxu0
  %v3453 = vxor.u32 %v3449, 2147483648
  %v3454 = vxor.u32 %v3451, 2147483648
  %v3455 = vmul.f32 %v3453, 1.442695
  %v3456 = vpow.pop %v3455
  %v3457 = vmul.f32 %v3454, 1.442695
  %v3458 = vpow.pop %v3457
  %v3459 = vadd.f32 %v3456, 1.0
  %v3460 = vadd.f32 %v3458, 1.0
  %v3461 = vrcp.pop %v3459
  %v3462 = vmul.f32 %v3459, %v3461
  %v3463 = vsub.f32 1.0, %v3462
  %v3464 = vmul.f32 %v3461, %v3463
  %v3465 = vadd.f32 %v3461, %v3464
  %vm3466 = vweird.f32 %v3459
  %vm3467 = vweird.f32 %v3461
  %vm3468 = vmor %vm3466, %vm3467
  %v3469 = vsel %vm3468, %v3461, %v3465
  %v3470 = vand.u32 2147483647, %v3459
  %vm3471 = vcmp.eq.f32.partialorder %v3470, 8.507059e+37
  %v3472 = vand.u32 %v3459, 2147483648
  %v3473 = vor.u32 1.1754944e-38, %v3472
  %v3474 = vsel %vm3471, %v3473, %v3469
  %v3475 = vmul.f32 1.0, %v3474
  %v3476 = vrcp.pop %v3460
  %v3477 = vmul.f32 %v3460, %v3476
  %v3478 = vsub.f32 1.0, %v3477
  %v3479 = vmul.f32 %v3476, %v3478
  %v3480 = vadd.f32 %v3476, %v3479
  %vm3481 = vweird.f32 %v3460
  %vm3482 = vweird.f32 %v3476
  %vm3483 = vmor %vm3481, %vm3482
  %v3484 = vsel %vm3483, %v3476, %v3480
  %v3485 = vand.u32 2147483647, %v3460
  %vm3486 = vcmp.eq.f32.partialorder %v3485, 8.507059e+37
  %v3487 = vand.u32 %v3460, 2147483648
  %v3488 = vor.u32 1.1754944e-38, %v3487
  %v3489 = vsel %vm3486, %v3488, %v3484
  %v3490 = vmul.f32 1.0, %v3489
  %v3491 = vmul.f32 %v3444, %v3475
  %v3492 = vmul.f32 %v3446, %v3490
  %s3493 = scalar_lea.vmem [#allocation3], 16
  %3494 = vst [vmem:[%s3493] sm:$0xff] %v3491
  %3495 = vst [vmem:[%s3493 + $0x8] sm:$0xff] %v3492
  %3496 = vadd.xlane.f32.xlu0 %v3491
  %v3497 = vpop.xlane.xlu0 %3496
  %3498 = vadd.xlane.f32.xlu0 %v3492
  %v3499 = vpop.xlane.xlu0 %3498
  %v3500 = vadd.f32 %v3085, %v3497
  %v3501 = vadd.f32 %v3086, %v3499
  %v3502 = vmul.f32 %v3491, %v3491
  %v3503 = vmul.f32 %v3492, %v3492
  %3504 = vadd.xlane.f32.xlu0 %v3502
  %v3505 = vpop.xlane.xlu0 %3504
  %3506 = vadd.xlane.f32.xlu0 %v3503
  %v3507 = vpop.xlane.xlu0 %3506
  %v3508 = vadd.f32 %v3093, %v3505
  %v3509 = vadd.f32 %v3094, %v3507
  %v3510 = vmul.f32 %v3500, 0.00390625
  %v3511 = vmul.f32 %v3501, 0.00390625
  %v3512 = vmul.f32 %v3508, 0.00390625
  %v3513 = vmul.f32 %v3509, 0.00390625
  %v3514 = vmul.f32 %v3510, %v3510
  %v3515 = vmul.f32 %v3511, %v3511
  %v3516 = vsub.f32 %v3512, %v3514
  %v3517 = vsub.f32 %v3513, %v3515
  %v3518 = vmax.f32 %v3516, 0.0
  %v3519 = vmax.f32 %v3517, 0.0
  %v3520 = vadd.f32 %v3518, 1e-05
  %v3521 = vadd.f32 %v3519, 1e-05
  %v3522 = vrsqrt.pop %v3520
  %v3523 = vmul.f32 %v3522, %v3520
  %v3524 = vmul.f32 %v3523, %v3522
  %v3525 = vmul.f32 0.5, %v3524
  %v3526 = vsub.f32 1.5, %v3525
  %v3527 = vmul.f32 %v3522, %v3526
  %vm3528 = vweird.f32 %v3520
  %vm3529 = vweird.f32 %v3522
  %vm3530 = vmor %vm3528, %vm3529
  %v3531 = vsel %vm3530, %v3522, %v3527
  %v3532 = vrsqrt.pop %v3521
  %v3533 = vmul.f32 %v3532, %v3521
  %v3534 = vmul.f32 %v3533, %v3532
  %v3535 = vmul.f32 0.5, %v3534
  %v3536 = vsub.f32 1.5, %v3535
  %v3537 = vmul.f32 %v3532, %v3536
  %vm3538 = vweird.f32 %v3521
  %vm3539 = vweird.f32 %v3532
  %vm3540 = vmor %vm3538, %vm3539
  %v3541 = vsel %vm3540, %v3532, %v3537
  %v3542 = vmul.f32 %v21, %v3531
  %v3543 = vmul.f32 %v22, %v3541
  %v3544 = vmul.f32 %v3510, %v3542
  %v3545 = vmul.f32 %v3511, %v3543
  %3548 = vrot.lane.b32.xlu0 %v3544, 1
  %v3549 = vpop.permute.xlu0 %3548
  %3550 = vrot.lane.b32.xlu0 %v3545, 1
  %v3551 = vpop.permute.xlu0 %3550
  %v3554 = vsub.f32 %v21, %v3549
  %v3555 = vsub.f32 %v22, %v3551
  %v3556 = vld [vmem:[#allocation3] sm:$0xff]
  %v3557 = vld [vmem:[#allocation3 + $0x8] sm:$0xff]
  %3559 = vset.pattern.permute.xlu0 4
  %3560 = vperm.xlu0 %3559, %v3542
  %v3561 = vpop.permute.xlu0 %3560
  %3564 = vset.pattern.permute.xlu0 4
  %3565 = vperm.xlu0 %3564, %v3543
  %v3566 = vpop.permute.xlu0 %3565
  %v3568 = vmul.f32 %v3556, %v3561
  %v3569 = vmul.f32 %v3557, %v3566
  %3571 = vset.pattern.permute.xlu0 5
  %3572 = vperm.xlu0 %3571, %v3554
  %v3573 = vpop.permute.xlu0 %3572
  %3576 = vset.pattern.permute.xlu0 5
  %3577 = vperm.xlu0 %3576, %v3555
  %v3578 = vpop.permute.xlu0 %3577
  %v3580 = vadd.f32 %v3568, %v3573
  %v3581 = vadd.f32 %v3569, %v3578
  %3582 = vadd.xlane.f32.xlu0 %v3580
  %v3583 = vpop.xlane.xlu0 %3582
  %3584 = vadd.xlane.f32.xlu0 %v3581
  %v3585 = vpop.xlane.xlu0 %3584
  %v3586 = vmul.f32 %v3583, 0.0078125
  %v3587 = vmul.f32 %v3585, 0.0078125
  %v3589 = vsel %vm176, %v37, 0
  %3591 = vmatpush.msra.mxu0 0.0
  %3592 = vmatpush.msra.mxu0 0.0
  %3593 = vmatpush.msra.mxu0 0.0
  %3594 = vmatpush.msra.mxu0 0.0
  %3595 = vmatpush.msra.mxu0 0.0
  %3596 = vmatpush.msra.mxu0 0.0
  %3597 = vmatpush.msra.mxu0 0.0
  %3598 = vmatpush.msra.mxu0 0.0
  %3599 = vmatpush.msra.mxu0 0.0
  %3600 = vmatpush.msra.mxu0 0.0
  %3601 = vmatpush.msra.mxu0 0.0
  %3602 = vmatpush.msra.mxu0 0.0
  %3603 = vmatpush.msra.mxu0 0.0
  %3604 = vmatpush.msra.mxu0 0.0
  %3605 = vmatpush.msra.mxu0 %v3587
  %3606 = vmatpush.msra.mxu0 %v3586
  %3607 = vmatmul.f32.gmra.mxu0 %v3589
  %v3608 = vpop.f32.mrf.mxu0
  %v3609 = vadd.f32 0.0, %v3608
  %3610 = vdwg.mxu0
  %v3611 = vmax.f32 %v3609, 0.0
  %v3613 = vsel %vm282, %v38, 0
  %v3616 = vsel %vm282, %v39, 0
  %3618 = vmatpush.msra.mxu0 0.0
  %3619 = vmatpush.msra.mxu0 0.0
  %3620 = vmatpush.msra.mxu0 0.0
  %3621 = vmatpush.msra.mxu0 0.0
  %3622 = vmatpush.msra.mxu0 0.0
  %3623 = vmatpush.msra.mxu0 0.0
  %3624 = vmatpush.msra.mxu0 0.0
  %3625 = vmatpush.msra.mxu0 0.0
  %3626 = vmatpush.msra.mxu0 0.0
  %3627 = vmatpush.msra.mxu0 0.0
  %3628 = vmatpush.msra.mxu0 0.0
  %3629 = vmatpush.msra.mxu0 0.0
  %3630 = vmatpush.msra.mxu0 0.0
  %3631 = vmatpush.msra.mxu0 0.0
  %3632 = vmatpush.msra.mxu0 0.0
  %3633 = vmatpush.msra.mxu0 %v3611
  %3634 = vmatmul.f32.gmra.mxu0 %v3613
  %v3635 = vpop.f32.mrf.mxu0
  %v3636 = vadd.f32 0.0, %v3635
  %3637 = vmatmul.f32.gmra.mxu0 %v3616
  %v3638 = vpop.f32.mrf.mxu0
  %v3639 = vadd.f32 0.0, %v3638
  %3640 = vdwg.mxu0
  %v3641 = vxor.u32 %v3636, 2147483648
  %v3642 = vxor.u32 %v3639, 2147483648
  %v3643 = vmul.f32 %v3641, 1.442695
  %v3644 = vpow.pop %v3643
  %v3645 = vmul.f32 %v3642, 1.442695
  %v3646 = vpow.pop %v3645
  %v3647 = vadd.f32 %v3644, 1.0
  %v3648 = vadd.f32 %v3646, 1.0
  %v3649 = vrcp.pop %v3647
  %v3650 = vmul.f32 %v3647, %v3649
  %v3651 = vsub.f32 1.0, %v3650
  %v3652 = vmul.f32 %v3649, %v3651
  %v3653 = vadd.f32 %v3649, %v3652
  %vm3654 = vweird.f32 %v3647
  %vm3655 = vweird.f32 %v3649
  %vm3656 = vmor %vm3654, %vm3655
  %v3657 = vsel %vm3656, %v3649, %v3653
  %v3658 = vand.u32 2147483647, %v3647
  %vm3659 = vcmp.eq.f32.partialorder %v3658, 8.507059e+37
  %v3660 = vand.u32 %v3647, 2147483648
  %v3661 = vor.u32 1.1754944e-38, %v3660
  %v3662 = vsel %vm3659, %v3661, %v3657
  %v3663 = vmul.f32 1.0, %v3662
  %v3664 = vrcp.pop %v3648
  %v3665 = vmul.f32 %v3648, %v3664
  %v3666 = vsub.f32 1.0, %v3665
  %v3667 = vmul.f32 %v3664, %v3666
  %v3668 = vadd.f32 %v3664, %v3667
  %vm3669 = vweird.f32 %v3648
  %vm3670 = vweird.f32 %v3664
  %vm3671 = vmor %vm3669, %vm3670
  %v3672 = vsel %vm3671, %v3664, %v3668
  %v3673 = vand.u32 2147483647, %v3648
  %vm3674 = vcmp.eq.f32.partialorder %v3673, 8.507059e+37
  %v3675 = vand.u32 %v3648, 2147483648
  %v3676 = vor.u32 1.1754944e-38, %v3675
  %v3677 = vsel %vm3674, %v3676, %v3672
  %v3678 = vmul.f32 1.0, %v3677
  %3680 = vset.pattern.permute.xlu0 0
  %3681 = vperm.xlu0 %3680, %v3663
  %v3682 = vpop.permute.xlu0 %3681
  %3685 = vset.pattern.permute.xlu0 0
  %3686 = vperm.xlu0 %3685, %v3678
  %v3687 = vpop.permute.xlu0 %3686
  %v3689 = vmul.f32 %v3580, %v3682
  %v3690 = vmul.f32 %v3581, %v3687
  %v3691 = vld [vmem:[%s0] sm:$0xff]
  %v3692 = vld [vmem:[%s0 + $0x8] sm:$0xff]
  %v3693 = vadd.f32 %v3689, %v3691
  %v3694 = vadd.f32 %v3690, %v3692
  %v3695 = vmax.f32 %v3693, 0.0
  %v3696 = vmax.f32 %v3694, 0.0
  %3697 = vst [vmem:[%s5] sm:$0xff] %v3695
  %3698 = vst [vmem:[%s5 + $0x8] sm:$0xff] %v3696
  %v3699 = vld [vmem:[%s3493] sm:$0xff]
  %v3700 = vld [vmem:[%s3493 + $0x8] sm:$0xff]
  %v3701 = vmul.f32 %v3699, %v3561
  %v3702 = vmul.f32 %v3700, %v3566
  %v3703 = vadd.f32 %v3701, %v3573
  %v3704 = vadd.f32 %v3702, %v3578
  %3705 = vadd.xlane.f32.xlu0 %v3703
  %v3706 = vpop.xlane.xlu0 %3705
  %3707 = vadd.xlane.f32.xlu0 %v3704
  %v3708 = vpop.xlane.xlu0 %3707
  %v3709 = vmul.f32 %v3706, 0.0078125
  %v3710 = vmul.f32 %v3708, 0.0078125
  %3711 = vmatpush.msra.mxu0 0.0
  %3712 = vmatpush.msra.mxu0 0.0
  %3713 = vmatpush.msra.mxu0 0.0
  %3714 = vmatpush.msra.mxu0 0.0
  %3715 = vmatpush.msra.mxu0 0.0
  %3716 = vmatpush.msra.mxu0 0.0
  %3717 = vmatpush.msra.mxu0 0.0
  %3718 = vmatpush.msra.mxu0 0.0
  %3719 = vmatpush.msra.mxu0 0.0
  %3720 = vmatpush.msra.mxu0 0.0
  %3721 = vmatpush.msra.mxu0 0.0
  %3722 = vmatpush.msra.mxu0 0.0
  %3723 = vmatpush.msra.mxu0 0.0
  %3724 = vmatpush.msra.mxu0 0.0
  %3725 = vmatpush.msra.mxu0 %v3710
  %3726 = vmatpush.msra.mxu0 %v3709
  %3727 = vmatmul.f32.gmra.mxu0 %v3589
  %v3728 = vpop.f32.mrf.mxu0
  %v3729 = vadd.f32 0.0, %v3728
  %3730 = vdwg.mxu0
  %v3731 = vmax.f32 %v3729, 0.0
  %3732 = vmatpush.msra.mxu0 0.0
  %3733 = vmatpush.msra.mxu0 0.0
  %3734 = vmatpush.msra.mxu0 0.0
  %3735 = vmatpush.msra.mxu0 0.0
  %3736 = vmatpush.msra.mxu0 0.0
  %3737 = vmatpush.msra.mxu0 0.0
  %3738 = vmatpush.msra.mxu0 0.0
  %3739 = vmatpush.msra.mxu0 0.0
  %3740 = vmatpush.msra.mxu0 0.0
  %3741 = vmatpush.msra.mxu0 0.0
  %3742 = vmatpush.msra.mxu0 0.0
  %3743 = vmatpush.msra.mxu0 0.0
  %3744 = vmatpush.msra.mxu0 0.0
  %3745 = vmatpush.msra.mxu0 0.0
  %3746 = vmatpush.msra.mxu0 0.0
  %3747 = vmatpush.msra.mxu0 %v3731
  %3748 = vmatmul.f32.gmra.mxu0 %v3613
  %v3749 = vpop.f32.mrf.mxu0
  %v3750 = vadd.f32 0.0, %v3749
  %3751 = vmatmul.f32.gmra.mxu0 %v3616
  %v3752 = vpop.f32.mrf.mxu0
  %v3753 = vadd.f32 0.0, %v3752
  %3754 = vdwg.mxu0
  %v3755 = vxor.u32 %v3750, 2147483648
  %v3756 = vxor.u32 %v3753, 2147483648
  %v3757 = vmul.f32 %v3755, 1.442695
  %v3758 = vpow.pop %v3757
  %v3759 = vmul.f32 %v3756, 1.442695
  %v3760 = vpow.pop %v3759
  %v3761 = vadd.f32 %v3758, 1.0
  %v3762 = vadd.f32 %v3760, 1.0
  %v3763 = vrcp.pop %v3761
  %v3764 = vmul.f32 %v3761, %v3763
  %v3765 = vsub.f32 1.0, %v3764
  %v3766 = vmul.f32 %v3763, %v3765
  %v3767 = vadd.f32 %v3763, %v3766
  %vm3768 = vweird.f32 %v3761
  %vm3769 = vweird.f32 %v3763
  %vm3770 = vmor %vm3768, %vm3769
  %v3771 = vsel %vm3770, %v3763, %v3767
  %v3772 = vand.u32 2147483647, %v3761
  %vm3773 = vcmp.eq.f32.partialorder %v3772, 8.507059e+37
  %v3774 = vand.u32 %v3761, 2147483648
  %v3775 = vor.u32 1.1754944e-38, %v3774
  %v3776 = vsel %vm3773, %v3775, %v3771
  %v3777 = vmul.f32 1.0, %v3776
  %v3778 = vrcp.pop %v3762
  %v3779 = vmul.f32 %v3762, %v3778
  %v3780 = vsub.f32 1.0, %v3779
  %v3781 = vmul.f32 %v3778, %v3780
  %v3782 = vadd.f32 %v3778, %v3781
  %vm3783 = vweird.f32 %v3762
  %vm3784 = vweird.f32 %v3778
  %vm3785 = vmor %vm3783, %vm3784
  %v3786 = vsel %vm3785, %v3778, %v3782
  %v3787 = vand.u32 2147483647, %v3762
  %vm3788 = vcmp.eq.f32.partialorder %v3787, 8.507059e+37
  %v3789 = vand.u32 %v3762, 2147483648
  %v3790 = vor.u32 1.1754944e-38, %v3789
  %v3791 = vsel %vm3788, %v3790, %v3786
  %v3792 = vmul.f32 1.0, %v3791
  %3794 = vset.pattern.permute.xlu0 0
  %3795 = vperm.xlu0 %3794, %v3777
  %v3796 = vpop.permute.xlu0 %3795
  %3799 = vset.pattern.permute.xlu0 0
  %3800 = vperm.xlu0 %3799, %v3792
  %v3801 = vpop.permute.xlu0 %3800
  %v3803 = vmul.f32 %v3703, %v3796
  %v3804 = vmul.f32 %v3704, %v3801
  %v3805 = vld [vmem:[%s1385] sm:$0xff]
  %v3806 = vld [vmem:[%s1385 + $0x8] sm:$0xff]
  %v3807 = vadd.f32 %v3803, %v3805
  %v3808 = vadd.f32 %v3804, %v3806
  %v3809 = vmax.f32 %v3807, 0.0
  %v3810 = vmax.f32 %v3808, 0.0
  %s3811 = scalar_lea.vmem %s5, 16
  %3812 = vst [vmem:[%s3811] sm:$0xff] %v3809
  %3813 = vst [vmem:[%s3811 + $0x8] sm:$0xff] %v3810
  // Predicated region
  $region22: #{_lambda_.1} parent=0 // pred_check
    _
  $region23: #{_lambda_.1} parent=0 // pred_check_branch
    %3815 = sbr.rel (0) target = $region25
  $region24: #{_lambda_.1} parent=0 // pred_region
    _
  $region25: #{_lambda_.1} parent=0 // pred_fallthru
    _
  // Predicated region
  $region26: #{_lambda_.1} parent=0 // pred_check
    _
  $region27: #{_lambda_.1} parent=0 // pred_check_branch
    %3817 = sbr.rel (0) target = $region29
  $region28: #{_lambda_.1} parent=0 // pred_region
    _
  $region29: #{_lambda_.1} parent=0 // pred_fallthru
    _

</llo_original>
